<compile_context>
chip_gen: v5e
topology: v5e:2x2
jax: 0.10.0
libtpu: 0.0.40
codegen_flags: <defaults>
</compile_context>

<pallas_src>
import functools

import jax
import jax.numpy as jnp
from jax.experimental import pallas as pl
from jax.experimental.pallas import tpu as pltpu


# -----------------------------------------------------------------------------
# Pallas kernels
# -----------------------------------------------------------------------------
def _matmul_bias_kernel(w_ref, a_ref, b_ref, o_ref, *, apply_relu):
    """o = relu(w @ a + b) — fused conv-as-matmul + folded-BN bias + ReLU.

    w: (Cout, K) bf16, a: (K, TM) bf16, b: (Cout, 1) f32, o: (Cout, TM).
    Accumulation and elementwise math in f32; store casts to o dtype.
    """
    acc = jnp.dot(w_ref[...], a_ref[...], preferred_element_type=jnp.float32)
    acc = acc + b_ref[...]
    if apply_relu:
        acc = jnp.maximum(acc, 0.0)
    o_ref[...] = acc.astype(o_ref.dtype)


def matmul_bias(w, a, bias, apply_relu, out_dtype=jnp.bfloat16):
    """w: (Cout, K), a: (K, M), bias: (Cout,). Returns (Cout, M) lane-dense."""
    Cout, K = w.shape
    K2, M = a.shape
    assert K == K2
    w = w.astype(jnp.bfloat16)
    a = a.astype(jnp.bfloat16)
    b = bias.reshape(Cout, 1).astype(jnp.float32)

    # M tile: tile only when M is large and 128-divisible; otherwise one block.
    tm = M
    if M > 1024 and M % 1024 == 0:
        tm = 1024
    elif M > 1024 and M % 512 == 0:
        tm = 512
    elif M > 1024 and M % 128 == 0:
        tm = 128
    grid = (M // tm,)

    return pl.pallas_call(
        functools.partial(_matmul_bias_kernel, apply_relu=apply_relu),
        out_shape=jax.ShapeDtypeStruct((Cout, M), out_dtype),
        grid=grid,
        in_specs=[
            pl.BlockSpec((Cout, K), lambda i: (0, 0)),   # weights stay resident
            pl.BlockSpec((K, tm), lambda i: (0, i)),     # stream A over M
            pl.BlockSpec((Cout, 1), lambda i: (0, 0)),   # bias
        ],
        out_specs=pl.BlockSpec((Cout, tm), lambda i: (0, i)),
        compiler_params=pltpu.CompilerParams(
            dimension_semantics=("parallel",),           # lets v7x split M over 2 TCs
            vmem_limit_bytes=32 * 1024 * 1024,
        ),
    )(w, a, b)


def _max_over_axis0_kernel(x_ref, o_ref, *, r):
    acc = x_ref[0]
    for i in range(1, r):
        acc = jnp.maximum(acc, x_ref[i])
    o_ref[...] = acc


def max_over_axis0(x):
    """x: (R, P, L) -> (P, L), elementwise max over the leading axis."""
    R, P, L = x.shape
    vmem = pl.BlockSpec(memory_space=pltpu.MemorySpace.VMEM)
    return pl.pallas_call(
        functools.partial(_max_over_axis0_kernel, r=R),
        out_shape=jax.ShapeDtypeStruct((P, L), x.dtype),
        in_specs=[vmem],
        out_specs=vmem,
    )(x)


# -----------------------------------------------------------------------------
# Conv / pool building blocks.  Internal layouts:
#   3D features: (C, N, D, H, W)      2D features: (C, N, H, W)
# Glue (pad / patch gather / reshape) is XLA; the hot matmul is Pallas.
# -----------------------------------------------------------------------------
def conv3d_affine(x, w, s, t, relu=True, out_dtype=jnp.bfloat16):
    """3x3x3 conv, stride 1, pad 1. x: (Cin,N,D,H,W); w: torch (Cout,Cin,3,3,3)."""
    Cin, N, D, H, W = x.shape
    Cout = w.shape[0]
    M = N * D * H * W
    xp = jnp.pad(x, ((0, 0), (0, 0), (1, 1), (1, 1), (1, 1)))
    taps = []
    for kd in range(3):
        for kh in range(3):
            for kw in range(3):
                taps.append(xp[:, :, kd:kd + D, kh:kh + H, kw:kw + W].reshape(Cin, M))
    a = jnp.concatenate(taps, axis=0)                                # (27*Cin, M)
    wmat = jnp.transpose(w, (0, 2, 3, 4, 1)).reshape(Cout, 27 * Cin)
    wmat = wmat * s[:, None]                                         # fold BN scale
    y = matmul_bias(wmat, a, t, apply_relu=relu, out_dtype=out_dtype)
    return y.reshape(Cout, N, D, H, W)


def conv2d_affine(x, w, s, t, relu=True, out_dtype=jnp.bfloat16):
    """3x3 conv, stride 1, pad 1. x: (Cin,N,H,W); w: torch (Cout,Cin,3,3)."""
    Cin, N, H, W = x.shape
    Cout = w.shape[0]
    M = N * H * W
    xp = jnp.pad(x, ((0, 0), (0, 0), (1, 1), (1, 1)))
    taps = []
    for kh in range(3):
        for kw in range(3):
            taps.append(xp[:, :, kh:kh + H, kw:kw + W].reshape(Cin, M))
    a = jnp.concatenate(taps, axis=0)                                # (9*Cin, M)
    wmat = jnp.transpose(w, (0, 2, 3, 1)).reshape(Cout, 9 * Cin)
    wmat = wmat * s[:, None]                                         # fold BN scale
    y = matmul_bias(wmat, a, t, apply_relu=relu, out_dtype=out_dtype)
    return y.reshape(Cout, N, H, W)


def conv_transpose_2x2(x, w, b):
    """ConvTranspose2d(k=2, s=2), all 4 taps fused into one matmul.

    x: (Cin,N,H,W); w: torch (Cin,Cout,2,2); b: (Cout,). Returns (Cout,N,2H,2W).
    """
    Cin, N, H, W = x.shape
    Cout = w.shape[1]
    M = N * H * W
    a = x.reshape(Cin, M)
    wmat = jnp.transpose(w, (2, 3, 1, 0)).reshape(4 * Cout, Cin)     # (ky,kx,cout) rows
    bias = jnp.tile(b, 4)
    y = matmul_bias(wmat, a, bias, apply_relu=False, out_dtype=jnp.bfloat16)
    y = y.reshape(2, 2, Cout, N, H, W)                               # (ky,kx,c,n,h,w)
    y = jnp.transpose(y, (2, 3, 4, 0, 5, 1))                         # (c,n,h,ky,w,kx)
    return y.reshape(Cout, N, 2 * H, 2 * W)


def maxpool_hw_2x2(x):
    """MaxPool3d((1,2,2), stride (1,2,2)). x: (C,N,D,H,W).

    Single fused XLA reduce (per review) — no 4x strided-view copies in HBM.
    """
    C, N, D, H, W = x.shape
    return jnp.max(x.reshape(C, N, D, H // 2, 2, W // 2, 2), axis=(4, 6))


def depth_max_pool(x):
    """AdaptiveMaxPool3d((1,H,W)).squeeze(depth) when output spatial == input."""
    C, N, D, H, W = x.shape
    total = C * N * H * W
    lanes = 128 if total % 128 == 0 else W          # lane-dense when possible
    xs = jnp.moveaxis(x, 2, 0).reshape(D, total // lanes, lanes)
    return max_over_axis0(xs).reshape(C, N, H, W)


def _pad_to_match(up, ref):
    """Mirror torch F.pad(diffX//2, ...) in double_upconv2d (no-op when aligned)."""
    dh = ref.shape[2] - up.shape[2]
    dw = ref.shape[3] - up.shape[3]
    if dh == 0 and dw == 0:
        return up
    return jnp.pad(up, ((0, 0), (0, 0),
                        (dh // 2, dh - dh // 2), (dw // 2, dw - dw // 2)))


# -----------------------------------------------------------------------------
# Parameter init (deterministic, inference-mode BN folded into scale/shift)
# -----------------------------------------------------------------------------
class KeyGen:
    def __init__(self, seed=0):
        self.key = jax.random.PRNGKey(seed)

    def __call__(self):
        self.key, sub = jax.random.split(self.key)
        return sub


def _init_conv_bn(kg, cin, cout, kdims):
    w = 0.1 * jax.random.normal(kg(), (cout, cin) + kdims, jnp.float32)
    b = 0.1 * jax.random.normal(kg(), (cout,), jnp.float32)
    gamma = 1.0 + 0.1 * jax.random.normal(kg(), (cout,), jnp.float32)
    beta = 0.1 * jax.random.normal(kg(), (cout,), jnp.float32)
    mean = 0.1 * jax.random.normal(kg(), (cout,), jnp.float32)
    var = jnp.abs(jax.random.normal(kg(), (cout,), jnp.float32)) + 0.5
    s = gamma / jnp.sqrt(var + 1e-5)
    t = (b - mean) * s + beta
    return {"w": w, "s": s, "t": t}


def _init_double_conv(kg, cin, cout, kdims):
    return {"c1": _init_conv_bn(kg, cin, cout, kdims),
            "c2": _init_conv_bn(kg, cout, cout, kdims)}


def init_generator3_params(in_ch, out_ch, n_kernels, bn_kernel, seed=0):
    kg = KeyGen(seed)
    p = {}
    p["inp"] = _init_double_conv(kg, in_ch, n_kernels[0], (3, 3, 3))
    p["down1"] = _init_double_conv(kg, n_kernels[0], n_kernels[1], (3, 3, 3))
    p["down2"] = _init_double_conv(kg, n_kernels[1], n_kernels[2], (3, 3, 3))
    p["bottleneck"] = _init_double_conv(kg, n_kernels[2], bn_kernel, (3, 3))
    p["up1"] = {
        "up_w": 0.1 * jax.random.normal(kg(), (bn_kernel, bn_kernel // 2, 2, 2), jnp.float32),
        "up_b": 0.1 * jax.random.normal(kg(), (bn_kernel // 2,), jnp.float32),
        "conv": _init_double_conv(kg, bn_kernel // 2 + n_kernels[1], n_kernels[1], (3, 3)),
    }
    p["up2"] = {
        "up_w": 0.1 * jax.random.normal(kg(), (n_kernels[1], n_kernels[1] // 2, 2, 2), jnp.float32),
        "up_b": 0.1 * jax.random.normal(kg(), (n_kernels[1] // 2,), jnp.float32),
        "conv": _init_double_conv(kg, n_kernels[1] // 2 + n_kernels[0], n_kernels[0], (3, 3)),
    }
    p["outc"] = {
        "w": 0.1 * jax.random.normal(kg(), (out_ch, n_kernels[0], 3, 3), jnp.float32),
        "b": 0.1 * jax.random.normal(kg(), (out_ch,), jnp.float32),
    }
    return p


# -----------------------------------------------------------------------------
# Forward pass (mirrors Generator3.forward)
# -----------------------------------------------------------------------------
def _double_conv3d(p, x):
    x = conv3d_affine(x, p["c1"]["w"], p["c1"]["s"], p["c1"]["t"], relu=True)
    x = conv3d_affine(x, p["c2"]["w"], p["c2"]["s"], p["c2"]["t"], relu=True)
    return x


def _double_conv2d(p, x):
    x = conv2d_affine(x, p["c1"]["w"], p["c1"]["s"], p["c1"]["t"], relu=True)
    x = conv2d_affine(x, p["c2"]["w"], p["c2"]["s"], p["c2"]["t"], relu=True)
    return x


def generator3_forward(params, x_ncdhw):
    # PyTorch NCDHW -> internal channels-first (C, N, D, H, W), bf16 activations.
    x = jnp.transpose(x_ncdhw, (1, 0, 2, 3, 4)).astype(jnp.bfloat16)

    x1 = _double_conv3d(params["inp"], x)                          # (k0,N,D,S,S)
    x2 = _double_conv3d(params["down1"], maxpool_hw_2x2(x1))       # (k1,N,D,S/2,S/2)
    bott = _double_conv3d(params["down2"], maxpool_hw_2x2(x2))     # (k2,N,D,S/4,S/4)

    bott = depth_max_pool(bott)                                    # (k2,N,S/4,S/4)
    bott = _double_conv2d(params["bottleneck"], bott)              # (bn,N,S/4,S/4)

    # up1: transposed conv, concat with depth-pooled skip (skip first, like torch.cat)
    up = conv_transpose_2x2(bott, params["up1"]["up_w"], params["up1"]["up_b"])
    skip = depth_max_pool(x2)
    up = _pad_to_match(up, skip)
    x = _double_conv2d(params["up1"]["conv"], jnp.concatenate([skip, up], axis=0))

    # up2
    up = conv_transpose_2x2(x, params["up2"]["up_w"], params["up2"]["up_b"])
    skip = depth_max_pool(x1)
    up = _pad_to_match(up, skip)
    x = _double_conv2d(params["up2"]["conv"], jnp.concatenate([skip, up], axis=0))

    # outc: plain conv2d (bias only, no BN / ReLU), f32 output.
    out_ch = params["outc"]["w"].shape[0]
    out = conv2d_affine(x, params["outc"]["w"], jnp.ones((out_ch,), jnp.float32),
                        params["outc"]["b"], relu=False, out_dtype=jnp.float32)

    # back to PyTorch NCHW
    return jnp.transpose(out, (1, 0, 2, 3))


# -----------------------------------------------------------------------------
# Main
# -----------------------------------------------------------------------------
if __name__ == "__main__":
    # cfg: n_kernels=[4,8,16], bn_kernel=32, resize_h=16
    in_ch, out_ch = 1, 1
    n_kernels = [4, 8, 16]
    bn_kernel = 32
    resize_h = 16
    N, D = 2, 4

    params = init_generator3_params(in_ch, out_ch, n_kernels, bn_kernel, seed=0)

    x = jax.random.normal(jax.random.PRNGKey(0),
                          (N, in_ch, D, resize_h, resize_h), jnp.float32)

    fwd = jax.jit(functools.partial(generator3_forward, params))
    y = fwd(x)
    jax.block_until_ready(y)

    assert y.shape == (N, out_ch, resize_h, resize_h), y.shape
    assert jnp.all(jnp.isfinite(y))
    print("KERNEL_OK")
</pallas_src>

<mosaic_0001>
module attributes {stable_mosaic.version = 11 : i64} {
  func.func @_matmul_bias_kernel(%arg0: i32, %arg1: memref<4x27xbf16, #tpu.memory_space<vmem>>, %arg2: memref<27x1024xbf16, #tpu.memory_space<vmem>>, %arg3: memref<4x1xf32, #tpu.memory_space<vmem>>, %arg4: memref<4x1024xbf16, #tpu.memory_space<vmem>>) attributes {dimension_semantics = [#tpu.dimension_semantics<parallel>], iteration_bounds = array<i64: 2>, scalar_prefetch = 0 : i64, scratch_operands = 0 : i64, tpu.core_type = #tpu.core_type<tc>, window_params = [{pipeline_mode = #tpu.pipeline_mode<synchronous>, transform_indices = @transform_0, window_bounds = array<i64: 4, 27>}, {transform_indices = @transform_1, window_bounds = array<i64: 27, 1024>}, {pipeline_mode = #tpu.pipeline_mode<synchronous>, transform_indices = @transform_2, window_bounds = array<i64: 4, 1>}, {transform_indices = @transform_3, window_bounds = array<i64: 4, 1024>}]} {
    %c0 = arith.constant 0 : index
    %c0_0 = arith.constant 0 : index
    %0 = vector.load %arg1[%c0, %c0_0] : memref<4x27xbf16, #tpu.memory_space<vmem>>, vector<4x27xbf16>
    %c0_1 = arith.constant 0 : index
    %c0_2 = arith.constant 0 : index
    %1 = vector.load %arg2[%c0_1, %c0_2] : memref<27x1024xbf16, #tpu.memory_space<vmem>>, vector<27x1024xbf16>
    %cst = arith.constant dense<0.000000e+00> : vector<4x1024xf32>
    %2 = tpu.matmul %0, %1, %cst {dimension_numbers = #tpu.dot_dimension_numbers<[1], [0], [0], [1], [0, 0, 1, 1], [], []>} : vector<4x27xbf16>, vector<27x1024xbf16>, vector<4x1024xf32> -> vector<4x1024xf32>
    %c0_3 = arith.constant 0 : index
    %c0_4 = arith.constant 0 : index
    %3 = vector.load %arg3[%c0_3, %c0_4] : memref<4x1xf32, #tpu.memory_space<vmem>>, vector<4x1xf32>
    %4 = vector.broadcast %3 : vector<4x1xf32> to vector<4x1024xf32>
    %5 = arith.addf %2, %4 : vector<4x1024xf32>
    %cst_5 = arith.constant 0.000000e+00 : f32
    %6 = vector.broadcast %cst_5 : f32 to vector<4x1024xf32>
    %7 = arith.maximumf %5, %6 : vector<4x1024xf32>
    %8 = arith.truncf %7 : vector<4x1024xf32> to vector<4x1024xbf16>
    %c0_6 = arith.constant 0 : index
    %c0_7 = arith.constant 0 : index
    %9 = vector.load %arg4[%c0_6, %c0_7] : memref<4x1024xbf16, #tpu.memory_space<vmem>>, vector<4x1024xbf16>
    tpu.vector_store %arg4[%c0_6, %c0_7], %8 {strides = array<i32>} : memref<4x1024xbf16, #tpu.memory_space<vmem>>, vector<4x1024xbf16>,
    return
  }
  func.func @transform_0(%arg0: i32) -> (i32, i32) {
    %c0_i32 = arith.constant 0 : i32
    %c0_i32_0 = arith.constant 0 : i32
    %c0_i32_1 = arith.constant 0 : i32
    return %c0_i32, %c0_i32_0 : i32, i32
  }
  func.func @transform_1(%arg0: i32) -> (i32, i32) {
    %c0_i32 = arith.constant 0 : i32
    %c0_i32_0 = arith.constant 0 : i32
    return %c0_i32, %arg0 : i32, i32
  }
  func.func @transform_2(%arg0: i32) -> (i32, i32) {
    %c0_i32 = arith.constant 0 : i32
    %c0_i32_0 = arith.constant 0 : i32
    %c0_i32_1 = arith.constant 0 : i32
    return %c0_i32, %c0_i32_0 : i32, i32
  }
  func.func @transform_3(%arg0: i32) -> (i32, i32) {
    %c0_i32 = arith.constant 0 : i32
    %c0_i32_0 = arith.constant 0 : i32
    return %c0_i32, %arg0 : i32, i32
  }
}

module attributes {stable_mosaic.version = 11 : i64} {
  func.func @_matmul_bias_kernel(%arg0: i32, %arg1: memref<4x108xbf16, #tpu.memory_space<vmem>>, %arg2: memref<108x1024xbf16, #tpu.memory_space<vmem>>, %arg3: memref<4x1xf32, #tpu.memory_space<vmem>>, %arg4: memref<4x1024xbf16, #tpu.memory_space<vmem>>) attributes {dimension_semantics = [#tpu.dimension_semantics<parallel>], iteration_bounds = array<i64: 2>, scalar_prefetch = 0 : i64, scratch_operands = 0 : i64, tpu.core_type = #tpu.core_type<tc>, window_params = [{pipeline_mode = #tpu.pipeline_mode<synchronous>, transform_indices = @transform_0, window_bounds = array<i64: 4, 108>}, {transform_indices = @transform_1, window_bounds = array<i64: 108, 1024>}, {pipeline_mode = #tpu.pipeline_mode<synchronous>, transform_indices = @transform_2, window_bounds = array<i64: 4, 1>}, {transform_indices = @transform_3, window_bounds = array<i64: 4, 1024>}]} {
    %c0 = arith.constant 0 : index
    %c0_0 = arith.constant 0 : index
    %0 = vector.load %arg1[%c0, %c0_0] : memref<4x108xbf16, #tpu.memory_space<vmem>>, vector<4x108xbf16>
    %c0_1 = arith.constant 0 : index
    %c0_2 = arith.constant 0 : index
    %1 = vector.load %arg2[%c0_1, %c0_2] : memref<108x1024xbf16, #tpu.memory_space<vmem>>, vector<108x1024xbf16>
    %cst = arith.constant dense<0.000000e+00> : vector<4x1024xf32>
    %2 = tpu.matmul %0, %1, %cst {dimension_numbers = #tpu.dot_dimension_numbers<[1], [0], [0], [1], [0, 0, 1, 1], [], []>} : vector<4x108xbf16>, vector<108x1024xbf16>, vector<4x1024xf32> -> vector<4x1024xf32>
    %c0_3 = arith.constant 0 : index
    %c0_4 = arith.constant 0 : index
    %3 = vector.load %arg3[%c0_3, %c0_4] : memref<4x1xf32, #tpu.memory_space<vmem>>, vector<4x1xf32>
    %4 = vector.broadcast %3 : vector<4x1xf32> to vector<4x1024xf32>
    %5 = arith.addf %2, %4 : vector<4x1024xf32>
    %cst_5 = arith.constant 0.000000e+00 : f32
    %6 = vector.broadcast %cst_5 : f32 to vector<4x1024xf32>
    %7 = arith.maximumf %5, %6 : vector<4x1024xf32>
    %8 = arith.truncf %7 : vector<4x1024xf32> to vector<4x1024xbf16>
    %c0_6 = arith.constant 0 : index
    %c0_7 = arith.constant 0 : index
    %9 = vector.load %arg4[%c0_6, %c0_7] : memref<4x1024xbf16, #tpu.memory_space<vmem>>, vector<4x1024xbf16>
    tpu.vector_store %arg4[%c0_6, %c0_7], %8 {strides = array<i32>} : memref<4x1024xbf16, #tpu.memory_space<vmem>>, vector<4x1024xbf16>,
    return
  }
  func.func @transform_0(%arg0: i32) -> (i32, i32) {
    %c0_i32 = arith.constant 0 : i32
    %c0_i32_0 = arith.constant 0 : i32
    %c0_i32_1 = arith.constant 0 : i32
    return %c0_i32, %c0_i32_0 : i32, i32
  }
  func.func @transform_1(%arg0: i32) -> (i32, i32) {
    %c0_i32 = arith.constant 0 : i32
    %c0_i32_0 = arith.constant 0 : i32
    return %c0_i32, %arg0 : i32, i32
  }
  func.func @transform_2(%arg0: i32) -> (i32, i32) {
    %c0_i32 = arith.constant 0 : i32
    %c0_i32_0 = arith.constant 0 : i32
    %c0_i32_1 = arith.constant 0 : i32
    return %c0_i32, %c0_i32_0 : i32, i32
  }
  func.func @transform_3(%arg0: i32) -> (i32, i32) {
    %c0_i32 = arith.constant 0 : i32
    %c0_i32_0 = arith.constant 0 : i32
    return %c0_i32, %arg0 : i32, i32
  }
}

module attributes {stable_mosaic.version = 11 : i64} {
  func.func @_max_over_axis0_kernel(%arg0: memref<4x16x128xbf16, #tpu.memory_space<vmem>>, %arg1: memref<16x128xbf16, #tpu.memory_space<vmem>>) attributes {dimension_semantics = [], scalar_prefetch = 0 : i64, scratch_operands = 0 : i64, tpu.core_type = #tpu.core_type<tc>} {
    %c0 = arith.constant 0 : index
    %c0_0 = arith.constant 0 : index
    %c0_1 = arith.constant 0 : index
    %0 = vector.load %arg0[%c0, %c0_0, %c0_1] : memref<4x16x128xbf16, #tpu.memory_space<vmem>>, vector<1x16x128xbf16>
    %1 = vector.shape_cast %0 : vector<1x16x128xbf16> to vector<16x128xbf16>
    %c1 = arith.constant 1 : index
    %c0_2 = arith.constant 0 : index
    %c0_3 = arith.constant 0 : index
    %2 = vector.load %arg0[%c1, %c0_2, %c0_3] : memref<4x16x128xbf16, #tpu.memory_space<vmem>>, vector<1x16x128xbf16>
    %3 = vector.shape_cast %2 : vector<1x16x128xbf16> to vector<16x128xbf16>
    %4 = arith.maximumf %1, %3 : vector<16x128xbf16>
    %c2 = arith.constant 2 : index
    %c0_4 = arith.constant 0 : index
    %c0_5 = arith.constant 0 : index
    %5 = vector.load %arg0[%c2, %c0_4, %c0_5] : memref<4x16x128xbf16, #tpu.memory_space<vmem>>, vector<1x16x128xbf16>
    %6 = vector.shape_cast %5 : vector<1x16x128xbf16> to vector<16x128xbf16>
    %7 = arith.maximumf %4, %6 : vector<16x128xbf16>
    %c3 = arith.constant 3 : index
    %c0_6 = arith.constant 0 : index
    %c0_7 = arith.constant 0 : index
    %8 = vector.load %arg0[%c3, %c0_6, %c0_7] : memref<4x16x128xbf16, #tpu.memory_space<vmem>>, vector<1x16x128xbf16>
    %9 = vector.shape_cast %8 : vector<1x16x128xbf16> to vector<16x128xbf16>
    %10 = arith.maximumf %7, %9 : vector<16x128xbf16>
    %c0_8 = arith.constant 0 : index
    %c0_9 = arith.constant 0 : index
    %11 = vector.load %arg1[%c0_8, %c0_9] : memref<16x128xbf16, #tpu.memory_space<vmem>>, vector<16x128xbf16>
    tpu.vector_store %arg1[%c0_8, %c0_9], %10 {strides = array<i32>} : memref<16x128xbf16, #tpu.memory_space<vmem>>, vector<16x128xbf16>,
    return
  }
}

module attributes {stable_mosaic.version = 11 : i64} {
  func.func @_matmul_bias_kernel(%arg0: i32, %arg1: memref<8x108xbf16, #tpu.memory_space<vmem>>, %arg2: memref<108x512xbf16, #tpu.memory_space<vmem>>, %arg3: memref<8x1xf32, #tpu.memory_space<vmem>>, %arg4: memref<8x512xbf16, #tpu.memory_space<vmem>>) attributes {dimension_semantics = [#tpu.dimension_semantics<parallel>], iteration_bounds = array<i64: 1>, scalar_prefetch = 0 : i64, scratch_operands = 0 : i64, tpu.core_type = #tpu.core_type<tc>, window_params = [{pipeline_mode = #tpu.pipeline_mode<synchronous>, transform_indices = @transform_0, window_bounds = array<i64: 8, 108>}, {transform_indices = @transform_1, window_bounds = array<i64: 108, 512>}, {pipeline_mode = #tpu.pipeline_mode<synchronous>, transform_indices = @transform_2, window_bounds = array<i64: 8, 1>}, {transform_indices = @transform_3, window_bounds = array<i64: 8, 512>}]} {
    %c0 = arith.constant 0 : index
    %c0_0 = arith.constant 0 : index
    %0 = vector.load %arg1[%c0, %c0_0] : memref<8x108xbf16, #tpu.memory_space<vmem>>, vector<8x108xbf16>
    %c0_1 = arith.constant 0 : index
    %c0_2 = arith.constant 0 : index
    %1 = vector.load %arg2[%c0_1, %c0_2] : memref<108x512xbf16, #tpu.memory_space<vmem>>, vector<108x512xbf16>
    %cst = arith.constant dense<0.000000e+00> : vector<8x512xf32>
    %2 = tpu.matmul %0, %1, %cst {dimension_numbers = #tpu.dot_dimension_numbers<[1], [0], [0], [1], [0, 0, 1, 1], [], []>} : vector<8x108xbf16>, vector<108x512xbf16>, vector<8x512xf32> -> vector<8x512xf32>
    %c0_3 = arith.constant 0 : index
    %c0_4 = arith.constant 0 : index
    %3 = vector.load %arg3[%c0_3, %c0_4] : memref<8x1xf32, #tpu.memory_space<vmem>>, vector<8x1xf32>
    %4 = vector.broadcast %3 : vector<8x1xf32> to vector<8x512xf32>
    %5 = arith.addf %2, %4 : vector<8x512xf32>
    %cst_5 = arith.constant 0.000000e+00 : f32
    %6 = vector.broadcast %cst_5 : f32 to vector<8x512xf32>
    %7 = arith.maximumf %5, %6 : vector<8x512xf32>
    %8 = arith.truncf %7 : vector<8x512xf32> to vector<8x512xbf16>
    %c0_6 = arith.constant 0 : index
    %c0_7 = arith.constant 0 : index
    %9 = vector.load %arg4[%c0_6, %c0_7] : memref<8x512xbf16, #tpu.memory_space<vmem>>, vector<8x512xbf16>
    tpu.vector_store %arg4[%c0_6, %c0_7], %8 {strides = array<i32>} : memref<8x512xbf16, #tpu.memory_space<vmem>>, vector<8x512xbf16>,
    return
  }
  func.func @transform_0(%arg0: i32) -> (i32, i32) {
    %c0_i32 = arith.constant 0 : i32
    %c0_i32_0 = arith.constant 0 : i32
    %c0_i32_1 = arith.constant 0 : i32
    return %c0_i32, %c0_i32_0 : i32, i32
  }
  func.func @transform_1(%arg0: i32) -> (i32, i32) {
    %c0_i32 = arith.constant 0 : i32
    %c0_i32_0 = arith.constant 0 : i32
    return %c0_i32, %arg0 : i32, i32
  }
  func.func @transform_2(%arg0: i32) -> (i32, i32) {
    %c0_i32 = arith.constant 0 : i32
    %c0_i32_0 = arith.constant 0 : i32
    %c0_i32_1 = arith.constant 0 : i32
    return %c0_i32, %c0_i32_0 : i32, i32
  }
  func.func @transform_3(%arg0: i32) -> (i32, i32) {
    %c0_i32 = arith.constant 0 : i32
    %c0_i32_0 = arith.constant 0 : i32
    return %c0_i32, %arg0 : i32, i32
  }
}

module attributes {stable_mosaic.version = 11 : i64} {
  func.func @_matmul_bias_kernel(%arg0: i32, %arg1: memref<8x216xbf16, #tpu.memory_space<vmem>>, %arg2: memref<216x512xbf16, #tpu.memory_space<vmem>>, %arg3: memref<8x1xf32, #tpu.memory_space<vmem>>, %arg4: memref<8x512xbf16, #tpu.memory_space<vmem>>) attributes {dimension_semantics = [#tpu.dimension_semantics<parallel>], iteration_bounds = array<i64: 1>, scalar_prefetch = 0 : i64, scratch_operands = 0 : i64, tpu.core_type = #tpu.core_type<tc>, window_params = [{pipeline_mode = #tpu.pipeline_mode<synchronous>, transform_indices = @transform_0, window_bounds = array<i64: 8, 216>}, {transform_indices = @transform_1, window_bounds = array<i64: 216, 512>}, {pipeline_mode = #tpu.pipeline_mode<synchronous>, transform_indices = @transform_2, window_bounds = array<i64: 8, 1>}, {transform_indices = @transform_3, window_bounds = array<i64: 8, 512>}]} {
    %c0 = arith.constant 0 : index
    %c0_0 = arith.constant 0 : index
    %0 = vector.load %arg1[%c0, %c0_0] : memref<8x216xbf16, #tpu.memory_space<vmem>>, vector<8x216xbf16>
    %c0_1 = arith.constant 0 : index
    %c0_2 = arith.constant 0 : index
    %1 = vector.load %arg2[%c0_1, %c0_2] : memref<216x512xbf16, #tpu.memory_space<vmem>>, vector<216x512xbf16>
    %cst = arith.constant dense<0.000000e+00> : vector<8x512xf32>
    %2 = tpu.matmul %0, %1, %cst {dimension_numbers = #tpu.dot_dimension_numbers<[1], [0], [0], [1], [0, 0, 1, 1], [], []>} : vector<8x216xbf16>, vector<216x512xbf16>, vector<8x512xf32> -> vector<8x512xf32>
    %c0_3 = arith.constant 0 : index
    %c0_4 = arith.constant 0 : index
    %3 = vector.load %arg3[%c0_3, %c0_4] : memref<8x1xf32, #tpu.memory_space<vmem>>, vector<8x1xf32>
    %4 = vector.broadcast %3 : vector<8x1xf32> to vector<8x512xf32>
    %5 = arith.addf %2, %4 : vector<8x512xf32>
    %cst_5 = arith.constant 0.000000e+00 : f32
    %6 = vector.broadcast %cst_5 : f32 to vector<8x512xf32>
    %7 = arith.maximumf %5, %6 : vector<8x512xf32>
    %8 = arith.truncf %7 : vector<8x512xf32> to vector<8x512xbf16>
    %c0_6 = arith.constant 0 : index
    %c0_7 = arith.constant 0 : index
    %9 = vector.load %arg4[%c0_6, %c0_7] : memref<8x512xbf16, #tpu.memory_space<vmem>>, vector<8x512xbf16>
    tpu.vector_store %arg4[%c0_6, %c0_7], %8 {strides = array<i32>} : memref<8x512xbf16, #tpu.memory_space<vmem>>, vector<8x512xbf16>,
    return
  }
  func.func @transform_0(%arg0: i32) -> (i32, i32) {
    %c0_i32 = arith.constant 0 : i32
    %c0_i32_0 = arith.constant 0 : i32
    %c0_i32_1 = arith.constant 0 : i32
    return %c0_i32, %c0_i32_0 : i32, i32
  }
  func.func @transform_1(%arg0: i32) -> (i32, i32) {
    %c0_i32 = arith.constant 0 : i32
    %c0_i32_0 = arith.constant 0 : i32
    return %c0_i32, %arg0 : i32, i32
  }
  func.func @transform_2(%arg0: i32) -> (i32, i32) {
    %c0_i32 = arith.constant 0 : i32
    %c0_i32_0 = arith.constant 0 : i32
    %c0_i32_1 = arith.constant 0 : i32
    return %c0_i32, %c0_i32_0 : i32, i32
  }
  func.func @transform_3(%arg0: i32) -> (i32, i32) {
    %c0_i32 = arith.constant 0 : i32
    %c0_i32_0 = arith.constant 0 : i32
    return %c0_i32, %arg0 : i32, i32
  }
}

module attributes {stable_mosaic.version = 11 : i64} {
  func.func @_max_over_axis0_kernel(%arg0: memref<4x8x128xbf16, #tpu.memory_space<vmem>>, %arg1: memref<8x128xbf16, #tpu.memory_space<vmem>>) attributes {dimension_semantics = [], scalar_prefetch = 0 : i64, scratch_operands = 0 : i64, tpu.core_type = #tpu.core_type<tc>} {
    %c0 = arith.constant 0 : index
    %c0_0 = arith.constant 0 : index
    %c0_1 = arith.constant 0 : index
    %0 = vector.load %arg0[%c0, %c0_0, %c0_1] : memref<4x8x128xbf16, #tpu.memory_space<vmem>>, vector<1x8x128xbf16>
    %1 = vector.shape_cast %0 : vector<1x8x128xbf16> to vector<8x128xbf16>
    %c1 = arith.constant 1 : index
    %c0_2 = arith.constant 0 : index
    %c0_3 = arith.constant 0 : index
    %2 = vector.load %arg0[%c1, %c0_2, %c0_3] : memref<4x8x128xbf16, #tpu.memory_space<vmem>>, vector<1x8x128xbf16>
    %3 = vector.shape_cast %2 : vector<1x8x128xbf16> to vector<8x128xbf16>
    %4 = arith.maximumf %1, %3 : vector<8x128xbf16>
    %c2 = arith.constant 2 : index
    %c0_4 = arith.constant 0 : index
    %c0_5 = arith.constant 0 : index
    %5 = vector.load %arg0[%c2, %c0_4, %c0_5] : memref<4x8x128xbf16, #tpu.memory_space<vmem>>, vector<1x8x128xbf16>
    %6 = vector.shape_cast %5 : vector<1x8x128xbf16> to vector<8x128xbf16>
    %7 = arith.maximumf %4, %6 : vector<8x128xbf16>
    %c3 = arith.constant 3 : index
    %c0_6 = arith.constant 0 : index
    %c0_7 = arith.constant 0 : index
    %8 = vector.load %arg0[%c3, %c0_6, %c0_7] : memref<4x8x128xbf16, #tpu.memory_space<vmem>>, vector<1x8x128xbf16>
    %9 = vector.shape_cast %8 : vector<1x8x128xbf16> to vector<8x128xbf16>
    %10 = arith.maximumf %7, %9 : vector<8x128xbf16>
    %c0_8 = arith.constant 0 : index
    %c0_9 = arith.constant 0 : index
    %11 = vector.load %arg1[%c0_8, %c0_9] : memref<8x128xbf16, #tpu.memory_space<vmem>>, vector<8x128xbf16>
    tpu.vector_store %arg1[%c0_8, %c0_9], %10 {strides = array<i32>} : memref<8x128xbf16, #tpu.memory_space<vmem>>, vector<8x128xbf16>,
    return
  }
}

module attributes {stable_mosaic.version = 11 : i64} {
  func.func @_matmul_bias_kernel(%arg0: i32, %arg1: memref<16x216xbf16, #tpu.memory_space<vmem>>, %arg2: memref<216x128xbf16, #tpu.memory_space<vmem>>, %arg3: memref<16x1xf32, #tpu.memory_space<vmem>>, %arg4: memref<16x128xbf16, #tpu.memory_space<vmem>>) attributes {dimension_semantics = [#tpu.dimension_semantics<parallel>], iteration_bounds = array<i64: 1>, scalar_prefetch = 0 : i64, scratch_operands = 0 : i64, tpu.core_type = #tpu.core_type<tc>, window_params = [{pipeline_mode = #tpu.pipeline_mode<synchronous>, transform_indices = @transform_0, window_bounds = array<i64: 16, 216>}, {transform_indices = @transform_1, window_bounds = array<i64: 216, 128>}, {pipeline_mode = #tpu.pipeline_mode<synchronous>, transform_indices = @transform_2, window_bounds = array<i64: 16, 1>}, {transform_indices = @transform_3, window_bounds = array<i64: 16, 128>}]} {
    %c0 = arith.constant 0 : index
    %c0_0 = arith.constant 0 : index
    %0 = vector.load %arg1[%c0, %c0_0] : memref<16x216xbf16, #tpu.memory_space<vmem>>, vector<16x216xbf16>
    %c0_1 = arith.constant 0 : index
    %c0_2 = arith.constant 0 : index
    %1 = vector.load %arg2[%c0_1, %c0_2] : memref<216x128xbf16, #tpu.memory_space<vmem>>, vector<216x128xbf16>
    %cst = arith.constant dense<0.000000e+00> : vector<16x128xf32>
    %2 = tpu.matmul %0, %1, %cst {dimension_numbers = #tpu.dot_dimension_numbers<[1], [0], [0], [1], [0, 0, 1, 1], [], []>} : vector<16x216xbf16>, vector<216x128xbf16>, vector<16x128xf32> -> vector<16x128xf32>
    %c0_3 = arith.constant 0 : index
    %c0_4 = arith.constant 0 : index
    %3 = vector.load %arg3[%c0_3, %c0_4] : memref<16x1xf32, #tpu.memory_space<vmem>>, vector<16x1xf32>
    %4 = vector.broadcast %3 : vector<16x1xf32> to vector<16x128xf32>
    %5 = arith.addf %2, %4 : vector<16x128xf32>
    %cst_5 = arith.constant 0.000000e+00 : f32
    %6 = vector.broadcast %cst_5 : f32 to vector<16x128xf32>
    %7 = arith.maximumf %5, %6 : vector<16x128xf32>
    %8 = arith.truncf %7 : vector<16x128xf32> to vector<16x128xbf16>
    %c0_6 = arith.constant 0 : index
    %c0_7 = arith.constant 0 : index
    %9 = vector.load %arg4[%c0_6, %c0_7] : memref<16x128xbf16, #tpu.memory_space<vmem>>, vector<16x128xbf16>
    tpu.vector_store %arg4[%c0_6, %c0_7], %8 {strides = array<i32>} : memref<16x128xbf16, #tpu.memory_space<vmem>>, vector<16x128xbf16>,
    return
  }
  func.func @transform_0(%arg0: i32) -> (i32, i32) {
    %c0_i32 = arith.constant 0 : i32
    %c0_i32_0 = arith.constant 0 : i32
    %c0_i32_1 = arith.constant 0 : i32
    return %c0_i32, %c0_i32_0 : i32, i32
  }
  func.func @transform_1(%arg0: i32) -> (i32, i32) {
    %c0_i32 = arith.constant 0 : i32
    %c0_i32_0 = arith.constant 0 : i32
    return %c0_i32, %arg0 : i32, i32
  }
  func.func @transform_2(%arg0: i32) -> (i32, i32) {
    %c0_i32 = arith.constant 0 : i32
    %c0_i32_0 = arith.constant 0 : i32
    %c0_i32_1 = arith.constant 0 : i32
    return %c0_i32, %c0_i32_0 : i32, i32
  }
  func.func @transform_3(%arg0: i32) -> (i32, i32) {
    %c0_i32 = arith.constant 0 : i32
    %c0_i32_0 = arith.constant 0 : i32
    return %c0_i32, %arg0 : i32, i32
  }
}

module attributes {stable_mosaic.version = 11 : i64} {
  func.func @_matmul_bias_kernel(%arg0: i32, %arg1: memref<16x432xbf16, #tpu.memory_space<vmem>>, %arg2: memref<432x128xbf16, #tpu.memory_space<vmem>>, %arg3: memref<16x1xf32, #tpu.memory_space<vmem>>, %arg4: memref<16x128xbf16, #tpu.memory_space<vmem>>) attributes {dimension_semantics = [#tpu.dimension_semantics<parallel>], iteration_bounds = array<i64: 1>, scalar_prefetch = 0 : i64, scratch_operands = 0 : i64, tpu.core_type = #tpu.core_type<tc>, window_params = [{pipeline_mode = #tpu.pipeline_mode<synchronous>, transform_indices = @transform_0, window_bounds = array<i64: 16, 432>}, {transform_indices = @transform_1, window_bounds = array<i64: 432, 128>}, {pipeline_mode = #tpu.pipeline_mode<synchronous>, transform_indices = @transform_2, window_bounds = array<i64: 16, 1>}, {transform_indices = @transform_3, window_bounds = array<i64: 16, 128>}]} {
    %c0 = arith.constant 0 : index
    %c0_0 = arith.constant 0 : index
    %0 = vector.load %arg1[%c0, %c0_0] : memref<16x432xbf16, #tpu.memory_space<vmem>>, vector<16x432xbf16>
    %c0_1 = arith.constant 0 : index
    %c0_2 = arith.constant 0 : index
    %1 = vector.load %arg2[%c0_1, %c0_2] : memref<432x128xbf16, #tpu.memory_space<vmem>>, vector<432x128xbf16>
    %cst = arith.constant dense<0.000000e+00> : vector<16x128xf32>
    %2 = tpu.matmul %0, %1, %cst {dimension_numbers = #tpu.dot_dimension_numbers<[1], [0], [0], [1], [0, 0, 1, 1], [], []>} : vector<16x432xbf16>, vector<432x128xbf16>, vector<16x128xf32> -> vector<16x128xf32>
    %c0_3 = arith.constant 0 : index
    %c0_4 = arith.constant 0 : index
    %3 = vector.load %arg3[%c0_3, %c0_4] : memref<16x1xf32, #tpu.memory_space<vmem>>, vector<16x1xf32>
    %4 = vector.broadcast %3 : vector<16x1xf32> to vector<16x128xf32>
    %5 = arith.addf %2, %4 : vector<16x128xf32>
    %cst_5 = arith.constant 0.000000e+00 : f32
    %6 = vector.broadcast %cst_5 : f32 to vector<16x128xf32>
    %7 = arith.maximumf %5, %6 : vector<16x128xf32>
    %8 = arith.truncf %7 : vector<16x128xf32> to vector<16x128xbf16>
    %c0_6 = arith.constant 0 : index
    %c0_7 = arith.constant 0 : index
    %9 = vector.load %arg4[%c0_6, %c0_7] : memref<16x128xbf16, #tpu.memory_space<vmem>>, vector<16x128xbf16>
    tpu.vector_store %arg4[%c0_6, %c0_7], %8 {strides = array<i32>} : memref<16x128xbf16, #tpu.memory_space<vmem>>, vector<16x128xbf16>,
    return
  }
  func.func @transform_0(%arg0: i32) -> (i32, i32) {
    %c0_i32 = arith.constant 0 : i32
    %c0_i32_0 = arith.constant 0 : i32
    %c0_i32_1 = arith.constant 0 : i32
    return %c0_i32, %c0_i32_0 : i32, i32
  }
  func.func @transform_1(%arg0: i32) -> (i32, i32) {
    %c0_i32 = arith.constant 0 : i32
    %c0_i32_0 = arith.constant 0 : i32
    return %c0_i32, %arg0 : i32, i32
  }
  func.func @transform_2(%arg0: i32) -> (i32, i32) {
    %c0_i32 = arith.constant 0 : i32
    %c0_i32_0 = arith.constant 0 : i32
    %c0_i32_1 = arith.constant 0 : i32
    return %c0_i32, %c0_i32_0 : i32, i32
  }
  func.func @transform_3(%arg0: i32) -> (i32, i32) {
    %c0_i32 = arith.constant 0 : i32
    %c0_i32_0 = arith.constant 0 : i32
    return %c0_i32, %arg0 : i32, i32
  }
}

module attributes {stable_mosaic.version = 11 : i64} {
  func.func @_max_over_axis0_kernel(%arg0: memref<4x4x128xbf16, #tpu.memory_space<vmem>>, %arg1: memref<4x128xbf16, #tpu.memory_space<vmem>>) attributes {dimension_semantics = [], scalar_prefetch = 0 : i64, scratch_operands = 0 : i64, tpu.core_type = #tpu.core_type<tc>} {
    %c0 = arith.constant 0 : index
    %c0_0 = arith.constant 0 : index
    %c0_1 = arith.constant 0 : index
    %0 = vector.load %arg0[%c0, %c0_0, %c0_1] : memref<4x4x128xbf16, #tpu.memory_space<vmem>>, vector<1x4x128xbf16>
    %1 = vector.shape_cast %0 : vector<1x4x128xbf16> to vector<4x128xbf16>
    %c1 = arith.constant 1 : index
    %c0_2 = arith.constant 0 : index
    %c0_3 = arith.constant 0 : index
    %2 = vector.load %arg0[%c1, %c0_2, %c0_3] : memref<4x4x128xbf16, #tpu.memory_space<vmem>>, vector<1x4x128xbf16>
    %3 = vector.shape_cast %2 : vector<1x4x128xbf16> to vector<4x128xbf16>
    %4 = arith.maximumf %1, %3 : vector<4x128xbf16>
    %c2 = arith.constant 2 : index
    %c0_4 = arith.constant 0 : index
    %c0_5 = arith.constant 0 : index
    %5 = vector.load %arg0[%c2, %c0_4, %c0_5] : memref<4x4x128xbf16, #tpu.memory_space<vmem>>, vector<1x4x128xbf16>
    %6 = vector.shape_cast %5 : vector<1x4x128xbf16> to vector<4x128xbf16>
    %7 = arith.maximumf %4, %6 : vector<4x128xbf16>
    %c3 = arith.constant 3 : index
    %c0_6 = arith.constant 0 : index
    %c0_7 = arith.constant 0 : index
    %8 = vector.load %arg0[%c3, %c0_6, %c0_7] : memref<4x4x128xbf16, #tpu.memory_space<vmem>>, vector<1x4x128xbf16>
    %9 = vector.shape_cast %8 : vector<1x4x128xbf16> to vector<4x128xbf16>
    %10 = arith.maximumf %7, %9 : vector<4x128xbf16>
    %c0_8 = arith.constant 0 : index
    %c0_9 = arith.constant 0 : index
    %11 = vector.load %arg1[%c0_8, %c0_9] : memref<4x128xbf16, #tpu.memory_space<vmem>>, vector<4x128xbf16>
    tpu.vector_store %arg1[%c0_8, %c0_9], %10 {strides = array<i32>} : memref<4x128xbf16, #tpu.memory_space<vmem>>, vector<4x128xbf16>,
    return
  }
}

module attributes {stable_mosaic.version = 11 : i64} {
  func.func @_matmul_bias_kernel(%arg0: i32, %arg1: memref<32x144xbf16, #tpu.memory_space<vmem>>, %arg2: memref<144x32xbf16, #tpu.memory_space<vmem>>, %arg3: memref<32x1xf32, #tpu.memory_space<vmem>>, %arg4: memref<32x32xbf16, #tpu.memory_space<vmem>>) attributes {dimension_semantics = [#tpu.dimension_semantics<parallel>], iteration_bounds = array<i64: 1>, scalar_prefetch = 0 : i64, scratch_operands = 0 : i64, tpu.core_type = #tpu.core_type<tc>, window_params = [{pipeline_mode = #tpu.pipeline_mode<synchronous>, transform_indices = @transform_0, window_bounds = array<i64: 32, 144>}, {transform_indices = @transform_1, window_bounds = array<i64: 144, 32>}, {pipeline_mode = #tpu.pipeline_mode<synchronous>, transform_indices = @transform_2, window_bounds = array<i64: 32, 1>}, {transform_indices = @transform_3, window_bounds = array<i64: 32, 32>}]} {
    %c0 = arith.constant 0 : index
    %c0_0 = arith.constant 0 : index
    %0 = vector.load %arg1[%c0, %c0_0] : memref<32x144xbf16, #tpu.memory_space<vmem>>, vector<32x144xbf16>
    %c0_1 = arith.constant 0 : index
    %c0_2 = arith.constant 0 : index
    %1 = vector.load %arg2[%c0_1, %c0_2] : memref<144x32xbf16, #tpu.memory_space<vmem>>, vector<144x32xbf16>
    %cst = arith.constant dense<0.000000e+00> : vector<32x32xf32>
    %2 = tpu.matmul %0, %1, %cst {dimension_numbers = #tpu.dot_dimension_numbers<[1], [0], [0], [1], [0, 0, 1, 1], [], []>} : vector<32x144xbf16>, vector<144x32xbf16>, vector<32x32xf32> -> vector<32x32xf32>
    %c0_3 = arith.constant 0 : index
    %c0_4 = arith.constant 0 : index
    %3 = vector.load %arg3[%c0_3, %c0_4] : memref<32x1xf32, #tpu.memory_space<vmem>>, vector<32x1xf32>
    %4 = vector.broadcast %3 : vector<32x1xf32> to vector<32x32xf32>
    %5 = arith.addf %2, %4 : vector<32x32xf32>
    %cst_5 = arith.constant 0.000000e+00 : f32
    %6 = vector.broadcast %cst_5 : f32 to vector<32x32xf32>
    %7 = arith.maximumf %5, %6 : vector<32x32xf32>
    %8 = arith.truncf %7 : vector<32x32xf32> to vector<32x32xbf16>
    %c0_6 = arith.constant 0 : index
    %c0_7 = arith.constant 0 : index
    %9 = vector.load %arg4[%c0_6, %c0_7] : memref<32x32xbf16, #tpu.memory_space<vmem>>, vector<32x32xbf16>
    tpu.vector_store %arg4[%c0_6, %c0_7], %8 {strides = array<i32>} : memref<32x32xbf16, #tpu.memory_space<vmem>>, vector<32x32xbf16>,
    return
  }
  func.func @transform_0(%arg0: i32) -> (i32, i32) {
    %c0_i32 = arith.constant 0 : i32
    %c0_i32_0 = arith.constant 0 : i32
    %c0_i32_1 = arith.constant 0 : i32
    return %c0_i32, %c0_i32_0 : i32, i32
  }
  func.func @transform_1(%arg0: i32) -> (i32, i32) {
    %c0_i32 = arith.constant 0 : i32
    %c0_i32_0 = arith.constant 0 : i32
    return %c0_i32, %arg0 : i32, i32
  }
  func.func @transform_2(%arg0: i32) -> (i32, i32) {
    %c0_i32 = arith.constant 0 : i32
    %c0_i32_0 = arith.constant 0 : i32
    %c0_i32_1 = arith.constant 0 : i32
    return %c0_i32, %c0_i32_0 : i32, i32
  }
  func.func @transform_3(%arg0: i32) -> (i32, i32) {
    %c0_i32 = arith.constant 0 : i32
    %c0_i32_0 = arith.constant 0 : i32
    return %c0_i32, %arg0 : i32, i32
  }
}

module attributes {stable_mosaic.version = 11 : i64} {
  func.func @_matmul_bias_kernel(%arg0: i32, %arg1: memref<32x288xbf16, #tpu.memory_space<vmem>>, %arg2: memref<288x32xbf16, #tpu.memory_space<vmem>>, %arg3: memref<32x1xf32, #tpu.memory_space<vmem>>, %arg4: memref<32x32xbf16, #tpu.memory_space<vmem>>) attributes {dimension_semantics = [#tpu.dimension_semantics<parallel>], iteration_bounds = array<i64: 1>, scalar_prefetch = 0 : i64, scratch_operands = 0 : i64, tpu.core_type = #tpu.core_type<tc>, window_params = [{pipeline_mode = #tpu.pipeline_mode<synchronous>, transform_indices = @transform_0, window_bounds = array<i64: 32, 288>}, {transform_indices = @transform_1, window_bounds = array<i64: 288, 32>}, {pipeline_mode = #tpu.pipeline_mode<synchronous>, transform_indices = @transform_2, window_bounds = array<i64: 32, 1>}, {transform_indices = @transform_3, window_bounds = array<i64: 32, 32>}]} {
    %c0 = arith.constant 0 : index
    %c0_0 = arith.constant 0 : index
    %0 = vector.load %arg1[%c0, %c0_0] : memref<32x288xbf16, #tpu.memory_space<vmem>>, vector<32x288xbf16>
    %c0_1 = arith.constant 0 : index
    %c0_2 = arith.constant 0 : index
    %1 = vector.load %arg2[%c0_1, %c0_2] : memref<288x32xbf16, #tpu.memory_space<vmem>>, vector<288x32xbf16>
    %cst = arith.constant dense<0.000000e+00> : vector<32x32xf32>
    %2 = tpu.matmul %0, %1, %cst {dimension_numbers = #tpu.dot_dimension_numbers<[1], [0], [0], [1], [0, 0, 1, 1], [], []>} : vector<32x288xbf16>, vector<288x32xbf16>, vector<32x32xf32> -> vector<32x32xf32>
    %c0_3 = arith.constant 0 : index
    %c0_4 = arith.constant 0 : index
    %3 = vector.load %arg3[%c0_3, %c0_4] : memref<32x1xf32, #tpu.memory_space<vmem>>, vector<32x1xf32>
    %4 = vector.broadcast %3 : vector<32x1xf32> to vector<32x32xf32>
    %5 = arith.addf %2, %4 : vector<32x32xf32>
    %cst_5 = arith.constant 0.000000e+00 : f32
    %6 = vector.broadcast %cst_5 : f32 to vector<32x32xf32>
    %7 = arith.maximumf %5, %6 : vector<32x32xf32>
    %8 = arith.truncf %7 : vector<32x32xf32> to vector<32x32xbf16>
    %c0_6 = arith.constant 0 : index
    %c0_7 = arith.constant 0 : index
    %9 = vector.load %arg4[%c0_6, %c0_7] : memref<32x32xbf16, #tpu.memory_space<vmem>>, vector<32x32xbf16>
    tpu.vector_store %arg4[%c0_6, %c0_7], %8 {strides = array<i32>} : memref<32x32xbf16, #tpu.memory_space<vmem>>, vector<32x32xbf16>,
    return
  }
  func.func @transform_0(%arg0: i32) -> (i32, i32) {
    %c0_i32 = arith.constant 0 : i32
    %c0_i32_0 = arith.constant 0 : i32
    %c0_i32_1 = arith.constant 0 : i32
    return %c0_i32, %c0_i32_0 : i32, i32
  }
  func.func @transform_1(%arg0: i32) -> (i32, i32) {
    %c0_i32 = arith.constant 0 : i32
    %c0_i32_0 = arith.constant 0 : i32
    return %c0_i32, %arg0 : i32, i32
  }
  func.func @transform_2(%arg0: i32) -> (i32, i32) {
    %c0_i32 = arith.constant 0 : i32
    %c0_i32_0 = arith.constant 0 : i32
    %c0_i32_1 = arith.constant 0 : i32
    return %c0_i32, %c0_i32_0 : i32, i32
  }
  func.func @transform_3(%arg0: i32) -> (i32, i32) {
    %c0_i32 = arith.constant 0 : i32
    %c0_i32_0 = arith.constant 0 : i32
    return %c0_i32, %arg0 : i32, i32
  }
}

module attributes {stable_mosaic.version = 11 : i64} {
  func.func @_matmul_bias_kernel(%arg0: i32, %arg1: memref<64x32xbf16, #tpu.memory_space<vmem>>, %arg2: memref<32x32xbf16, #tpu.memory_space<vmem>>, %arg3: memref<64x1xf32, #tpu.memory_space<vmem>>, %arg4: memref<64x32xbf16, #tpu.memory_space<vmem>>) attributes {dimension_semantics = [#tpu.dimension_semantics<parallel>], iteration_bounds = array<i64: 1>, scalar_prefetch = 0 : i64, scratch_operands = 0 : i64, tpu.core_type = #tpu.core_type<tc>, window_params = [{pipeline_mode = #tpu.pipeline_mode<synchronous>, transform_indices = @transform_0, window_bounds = array<i64: 64, 32>}, {transform_indices = @transform_1, window_bounds = array<i64: 32, 32>}, {pipeline_mode = #tpu.pipeline_mode<synchronous>, transform_indices = @transform_2, window_bounds = array<i64: 64, 1>}, {transform_indices = @transform_3, window_bounds = array<i64: 64, 32>}]} {
    %c0 = arith.constant 0 : index
    %c0_0 = arith.constant 0 : index
    %0 = vector.load %arg1[%c0, %c0_0] : memref<64x32xbf16, #tpu.memory_space<vmem>>, vector<64x32xbf16>
    %c0_1 = arith.constant 0 : index
    %c0_2 = arith.constant 0 : index
    %1 = vector.load %arg2[%c0_1, %c0_2] : memref<32x32xbf16, #tpu.memory_space<vmem>>, vector<32x32xbf16>
    %cst = arith.constant dense<0.000000e+00> : vector<64x32xf32>
    %2 = tpu.matmul %0, %1, %cst {dimension_numbers = #tpu.dot_dimension_numbers<[1], [0], [0], [1], [0, 0, 1, 1], [], []>} : vector<64x32xbf16>, vector<32x32xbf16>, vector<64x32xf32> -> vector<64x32xf32>
    %c0_3 = arith.constant 0 : index
    %c0_4 = arith.constant 0 : index
    %3 = vector.load %arg3[%c0_3, %c0_4] : memref<64x1xf32, #tpu.memory_space<vmem>>, vector<64x1xf32>
    %4 = vector.broadcast %3 : vector<64x1xf32> to vector<64x32xf32>
    %5 = arith.addf %2, %4 : vector<64x32xf32>
    %6 = arith.truncf %5 : vector<64x32xf32> to vector<64x32xbf16>
    %c0_5 = arith.constant 0 : index
    %c0_6 = arith.constant 0 : index
    %7 = vector.load %arg4[%c0_5, %c0_6] : memref<64x32xbf16, #tpu.memory_space<vmem>>, vector<64x32xbf16>
    tpu.vector_store %arg4[%c0_5, %c0_6], %6 {strides = array<i32>} : memref<64x32xbf16, #tpu.memory_space<vmem>>, vector<64x32xbf16>,
    return
  }
  func.func @transform_0(%arg0: i32) -> (i32, i32) {
    %c0_i32 = arith.constant 0 : i32
    %c0_i32_0 = arith.constant 0 : i32
    %c0_i32_1 = arith.constant 0 : i32
    return %c0_i32, %c0_i32_0 : i32, i32
  }
  func.func @transform_1(%arg0: i32) -> (i32, i32) {
    %c0_i32 = arith.constant 0 : i32
    %c0_i32_0 = arith.constant 0 : i32
    return %c0_i32, %arg0 : i32, i32
  }
  func.func @transform_2(%arg0: i32) -> (i32, i32) {
    %c0_i32 = arith.constant 0 : i32
    %c0_i32_0 = arith.constant 0 : i32
    %c0_i32_1 = arith.constant 0 : i32
    return %c0_i32, %c0_i32_0 : i32, i32
  }
  func.func @transform_3(%arg0: i32) -> (i32, i32) {
    %c0_i32 = arith.constant 0 : i32
    %c0_i32_0 = arith.constant 0 : i32
    return %c0_i32, %arg0 : i32, i32
  }
}

module attributes {stable_mosaic.version = 11 : i64} {
  func.func @_matmul_bias_kernel(%arg0: i32, %arg1: memref<8x216xbf16, #tpu.memory_space<vmem>>, %arg2: memref<216x128xbf16, #tpu.memory_space<vmem>>, %arg3: memref<8x1xf32, #tpu.memory_space<vmem>>, %arg4: memref<8x128xbf16, #tpu.memory_space<vmem>>) attributes {dimension_semantics = [#tpu.dimension_semantics<parallel>], iteration_bounds = array<i64: 1>, scalar_prefetch = 0 : i64, scratch_operands = 0 : i64, tpu.core_type = #tpu.core_type<tc>, window_params = [{pipeline_mode = #tpu.pipeline_mode<synchronous>, transform_indices = @transform_0, window_bounds = array<i64: 8, 216>}, {transform_indices = @transform_1, window_bounds = array<i64: 216, 128>}, {pipeline_mode = #tpu.pipeline_mode<synchronous>, transform_indices = @transform_2, window_bounds = array<i64: 8, 1>}, {transform_indices = @transform_3, window_bounds = array<i64: 8, 128>}]} {
    %c0 = arith.constant 0 : index
    %c0_0 = arith.constant 0 : index
    %0 = vector.load %arg1[%c0, %c0_0] : memref<8x216xbf16, #tpu.memory_space<vmem>>, vector<8x216xbf16>
    %c0_1 = arith.constant 0 : index
    %c0_2 = arith.constant 0 : index
    %1 = vector.load %arg2[%c0_1, %c0_2] : memref<216x128xbf16, #tpu.memory_space<vmem>>, vector<216x128xbf16>
    %cst = arith.constant dense<0.000000e+00> : vector<8x128xf32>
    %2 = tpu.matmul %0, %1, %cst {dimension_numbers = #tpu.dot_dimension_numbers<[1], [0], [0], [1], [0, 0, 1, 1], [], []>} : vector<8x216xbf16>, vector<216x128xbf16>, vector<8x128xf32> -> vector<8x128xf32>
    %c0_3 = arith.constant 0 : index
    %c0_4 = arith.constant 0 : index
    %3 = vector.load %arg3[%c0_3, %c0_4] : memref<8x1xf32, #tpu.memory_space<vmem>>, vector<8x1xf32>
    %4 = vector.broadcast %3 : vector<8x1xf32> to vector<8x128xf32>
    %5 = arith.addf %2, %4 : vector<8x128xf32>
    %cst_5 = arith.constant 0.000000e+00 : f32
    %6 = vector.broadcast %cst_5 : f32 to vector<8x128xf32>
    %7 = arith.maximumf %5, %6 : vector<8x128xf32>
    %8 = arith.truncf %7 : vector<8x128xf32> to vector<8x128xbf16>
    %c0_6 = arith.constant 0 : index
    %c0_7 = arith.constant 0 : index
    %9 = vector.load %arg4[%c0_6, %c0_7] : memref<8x128xbf16, #tpu.memory_space<vmem>>, vector<8x128xbf16>
    tpu.vector_store %arg4[%c0_6, %c0_7], %8 {strides = array<i32>} : memref<8x128xbf16, #tpu.memory_space<vmem>>, vector<8x128xbf16>,
    return
  }
  func.func @transform_0(%arg0: i32) -> (i32, i32) {
    %c0_i32 = arith.constant 0 : i32
    %c0_i32_0 = arith.constant 0 : i32
    %c0_i32_1 = arith.constant 0 : i32
    return %c0_i32, %c0_i32_0 : i32, i32
  }
  func.func @transform_1(%arg0: i32) -> (i32, i32) {
    %c0_i32 = arith.constant 0 : i32
    %c0_i32_0 = arith.constant 0 : i32
    return %c0_i32, %arg0 : i32, i32
  }
  func.func @transform_2(%arg0: i32) -> (i32, i32) {
    %c0_i32 = arith.constant 0 : i32
    %c0_i32_0 = arith.constant 0 : i32
    %c0_i32_1 = arith.constant 0 : i32
    return %c0_i32, %c0_i32_0 : i32, i32
  }
  func.func @transform_3(%arg0: i32) -> (i32, i32) {
    %c0_i32 = arith.constant 0 : i32
    %c0_i32_0 = arith.constant 0 : i32
    return %c0_i32, %arg0 : i32, i32
  }
}

module attributes {stable_mosaic.version = 11 : i64} {
  func.func @_matmul_bias_kernel(%arg0: i32, %arg1: memref<8x72xbf16, #tpu.memory_space<vmem>>, %arg2: memref<72x128xbf16, #tpu.memory_space<vmem>>, %arg3: memref<8x1xf32, #tpu.memory_space<vmem>>, %arg4: memref<8x128xbf16, #tpu.memory_space<vmem>>) attributes {dimension_semantics = [#tpu.dimension_semantics<parallel>], iteration_bounds = array<i64: 1>, scalar_prefetch = 0 : i64, scratch_operands = 0 : i64, tpu.core_type = #tpu.core_type<tc>, window_params = [{pipeline_mode = #tpu.pipeline_mode<synchronous>, transform_indices = @transform_0, window_bounds = array<i64: 8, 72>}, {transform_indices = @transform_1, window_bounds = array<i64: 72, 128>}, {pipeline_mode = #tpu.pipeline_mode<synchronous>, transform_indices = @transform_2, window_bounds = array<i64: 8, 1>}, {transform_indices = @transform_3, window_bounds = array<i64: 8, 128>}]} {
    %c0 = arith.constant 0 : index
    %c0_0 = arith.constant 0 : index
    %0 = vector.load %arg1[%c0, %c0_0] : memref<8x72xbf16, #tpu.memory_space<vmem>>, vector<8x72xbf16>
    %c0_1 = arith.constant 0 : index
    %c0_2 = arith.constant 0 : index
    %1 = vector.load %arg2[%c0_1, %c0_2] : memref<72x128xbf16, #tpu.memory_space<vmem>>, vector<72x128xbf16>
    %cst = arith.constant dense<0.000000e+00> : vector<8x128xf32>
    %2 = tpu.matmul %0, %1, %cst {dimension_numbers = #tpu.dot_dimension_numbers<[1], [0], [0], [1], [0, 0, 1, 1], [], []>} : vector<8x72xbf16>, vector<72x128xbf16>, vector<8x128xf32> -> vector<8x128xf32>
    %c0_3 = arith.constant 0 : index
    %c0_4 = arith.constant 0 : index
    %3 = vector.load %arg3[%c0_3, %c0_4] : memref<8x1xf32, #tpu.memory_space<vmem>>, vector<8x1xf32>
    %4 = vector.broadcast %3 : vector<8x1xf32> to vector<8x128xf32>
    %5 = arith.addf %2, %4 : vector<8x128xf32>
    %cst_5 = arith.constant 0.000000e+00 : f32
    %6 = vector.broadcast %cst_5 : f32 to vector<8x128xf32>
    %7 = arith.maximumf %5, %6 : vector<8x128xf32>
    %8 = arith.truncf %7 : vector<8x128xf32> to vector<8x128xbf16>
    %c0_6 = arith.constant 0 : index
    %c0_7 = arith.constant 0 : index
    %9 = vector.load %arg4[%c0_6, %c0_7] : memref<8x128xbf16, #tpu.memory_space<vmem>>, vector<8x128xbf16>
    tpu.vector_store %arg4[%c0_6, %c0_7], %8 {strides = array<i32>} : memref<8x128xbf16, #tpu.memory_space<vmem>>, vector<8x128xbf16>,
    return
  }
  func.func @transform_0(%arg0: i32) -> (i32, i32) {
    %c0_i32 = arith.constant 0 : i32
    %c0_i32_0 = arith.constant 0 : i32
    %c0_i32_1 = arith.constant 0 : i32
    return %c0_i32, %c0_i32_0 : i32, i32
  }
  func.func @transform_1(%arg0: i32) -> (i32, i32) {
    %c0_i32 = arith.constant 0 : i32
    %c0_i32_0 = arith.constant 0 : i32
    return %c0_i32, %arg0 : i32, i32
  }
  func.func @transform_2(%arg0: i32) -> (i32, i32) {
    %c0_i32 = arith.constant 0 : i32
    %c0_i32_0 = arith.constant 0 : i32
    %c0_i32_1 = arith.constant 0 : i32
    return %c0_i32, %c0_i32_0 : i32, i32
  }
  func.func @transform_3(%arg0: i32) -> (i32, i32) {
    %c0_i32 = arith.constant 0 : i32
    %c0_i32_0 = arith.constant 0 : i32
    return %c0_i32, %arg0 : i32, i32
  }
}

module attributes {stable_mosaic.version = 11 : i64} {
  func.func @_matmul_bias_kernel(%arg0: i32, %arg1: memref<16x8xbf16, #tpu.memory_space<vmem>>, %arg2: memref<8x128xbf16, #tpu.memory_space<vmem>>, %arg3: memref<16x1xf32, #tpu.memory_space<vmem>>, %arg4: memref<16x128xbf16, #tpu.memory_space<vmem>>) attributes {dimension_semantics = [#tpu.dimension_semantics<parallel>], iteration_bounds = array<i64: 1>, scalar_prefetch = 0 : i64, scratch_operands = 0 : i64, tpu.core_type = #tpu.core_type<tc>, window_params = [{pipeline_mode = #tpu.pipeline_mode<synchronous>, transform_indices = @transform_0, window_bounds = array<i64: 16, 8>}, {transform_indices = @transform_1, window_bounds = array<i64: 8, 128>}, {pipeline_mode = #tpu.pipeline_mode<synchronous>, transform_indices = @transform_2, window_bounds = array<i64: 16, 1>}, {transform_indices = @transform_3, window_bounds = array<i64: 16, 128>}]} {
    %c0 = arith.constant 0 : index
    %c0_0 = arith.constant 0 : index
    %0 = vector.load %arg1[%c0, %c0_0] : memref<16x8xbf16, #tpu.memory_space<vmem>>, vector<16x8xbf16>
    %c0_1 = arith.constant 0 : index
    %c0_2 = arith.constant 0 : index
    %1 = vector.load %arg2[%c0_1, %c0_2] : memref<8x128xbf16, #tpu.memory_space<vmem>>, vector<8x128xbf16>
    %cst = arith.constant dense<0.000000e+00> : vector<16x128xf32>
    %2 = tpu.matmul %0, %1, %cst {dimension_numbers = #tpu.dot_dimension_numbers<[1], [0], [0], [1], [0, 0, 1, 1], [], []>} : vector<16x8xbf16>, vector<8x128xbf16>, vector<16x128xf32> -> vector<16x128xf32>
    %c0_3 = arith.constant 0 : index
    %c0_4 = arith.constant 0 : index
    %3 = vector.load %arg3[%c0_3, %c0_4] : memref<16x1xf32, #tpu.memory_space<vmem>>, vector<16x1xf32>
    %4 = vector.broadcast %3 : vector<16x1xf32> to vector<16x128xf32>
    %5 = arith.addf %2, %4 : vector<16x128xf32>
    %6 = arith.truncf %5 : vector<16x128xf32> to vector<16x128xbf16>
    %c0_5 = arith.constant 0 : index
    %c0_6 = arith.constant 0 : index
    %7 = vector.load %arg4[%c0_5, %c0_6] : memref<16x128xbf16, #tpu.memory_space<vmem>>, vector<16x128xbf16>
    tpu.vector_store %arg4[%c0_5, %c0_6], %6 {strides = array<i32>} : memref<16x128xbf16, #tpu.memory_space<vmem>>, vector<16x128xbf16>,
    return
  }
  func.func @transform_0(%arg0: i32) -> (i32, i32) {
    %c0_i32 = arith.constant 0 : i32
    %c0_i32_0 = arith.constant 0 : i32
    %c0_i32_1 = arith.constant 0 : i32
    return %c0_i32, %c0_i32_0 : i32, i32
  }
  func.func @transform_1(%arg0: i32) -> (i32, i32) {
    %c0_i32 = arith.constant 0 : i32
    %c0_i32_0 = arith.constant 0 : i32
    return %c0_i32, %arg0 : i32, i32
  }
  func.func @transform_2(%arg0: i32) -> (i32, i32) {
    %c0_i32 = arith.constant 0 : i32
    %c0_i32_0 = arith.constant 0 : i32
    %c0_i32_1 = arith.constant 0 : i32
    return %c0_i32, %c0_i32_0 : i32, i32
  }
  func.func @transform_3(%arg0: i32) -> (i32, i32) {
    %c0_i32 = arith.constant 0 : i32
    %c0_i32_0 = arith.constant 0 : i32
    return %c0_i32, %arg0 : i32, i32
  }
}

module attributes {stable_mosaic.version = 11 : i64} {
  func.func @_matmul_bias_kernel(%arg0: i32, %arg1: memref<4x72xbf16, #tpu.memory_space<vmem>>, %arg2: memref<72x512xbf16, #tpu.memory_space<vmem>>, %arg3: memref<4x1xf32, #tpu.memory_space<vmem>>, %arg4: memref<4x512xbf16, #tpu.memory_space<vmem>>) attributes {dimension_semantics = [#tpu.dimension_semantics<parallel>], iteration_bounds = array<i64: 1>, scalar_prefetch = 0 : i64, scratch_operands = 0 : i64, tpu.core_type = #tpu.core_type<tc>, window_params = [{pipeline_mode = #tpu.pipeline_mode<synchronous>, transform_indices = @transform_0, window_bounds = array<i64: 4, 72>}, {transform_indices = @transform_1, window_bounds = array<i64: 72, 512>}, {pipeline_mode = #tpu.pipeline_mode<synchronous>, transform_indices = @transform_2, window_bounds = array<i64: 4, 1>}, {transform_indices = @transform_3, window_bounds = array<i64: 4, 512>}]} {
    %c0 = arith.constant 0 : index
    %c0_0 = arith.constant 0 : index
    %0 = vector.load %arg1[%c0, %c0_0] : memref<4x72xbf16, #tpu.memory_space<vmem>>, vector<4x72xbf16>
    %c0_1 = arith.constant 0 : index
    %c0_2 = arith.constant 0 : index
    %1 = vector.load %arg2[%c0_1, %c0_2] : memref<72x512xbf16, #tpu.memory_space<vmem>>, vector<72x512xbf16>
    %cst = arith.constant dense<0.000000e+00> : vector<4x512xf32>
    %2 = tpu.matmul %0, %1, %cst {dimension_numbers = #tpu.dot_dimension_numbers<[1], [0], [0], [1], [0, 0, 1, 1], [], []>} : vector<4x72xbf16>, vector<72x512xbf16>, vector<4x512xf32> -> vector<4x512xf32>
    %c0_3 = arith.constant 0 : index
    %c0_4 = arith.constant 0 : index
    %3 = vector.load %arg3[%c0_3, %c0_4] : memref<4x1xf32, #tpu.memory_space<vmem>>, vector<4x1xf32>
    %4 = vector.broadcast %3 : vector<4x1xf32> to vector<4x512xf32>
    %5 = arith.addf %2, %4 : vector<4x512xf32>
    %cst_5 = arith.constant 0.000000e+00 : f32
    %6 = vector.broadcast %cst_5 : f32 to vector<4x512xf32>
    %7 = arith.maximumf %5, %6 : vector<4x512xf32>
    %8 = arith.truncf %7 : vector<4x512xf32> to vector<4x512xbf16>
    %c0_6 = arith.constant 0 : index
    %c0_7 = arith.constant 0 : index
    %9 = vector.load %arg4[%c0_6, %c0_7] : memref<4x512xbf16, #tpu.memory_space<vmem>>, vector<4x512xbf16>
    tpu.vector_store %arg4[%c0_6, %c0_7], %8 {strides = array<i32>} : memref<4x512xbf16, #tpu.memory_space<vmem>>, vector<4x512xbf16>,
    return
  }
  func.func @transform_0(%arg0: i32) -> (i32, i32) {
    %c0_i32 = arith.constant 0 : i32
    %c0_i32_0 = arith.constant 0 : i32
    %c0_i32_1 = arith.constant 0 : i32
    return %c0_i32, %c0_i32_0 : i32, i32
  }
  func.func @transform_1(%arg0: i32) -> (i32, i32) {
    %c0_i32 = arith.constant 0 : i32
    %c0_i32_0 = arith.constant 0 : i32
    return %c0_i32, %arg0 : i32, i32
  }
  func.func @transform_2(%arg0: i32) -> (i32, i32) {
    %c0_i32 = arith.constant 0 : i32
    %c0_i32_0 = arith.constant 0 : i32
    %c0_i32_1 = arith.constant 0 : i32
    return %c0_i32, %c0_i32_0 : i32, i32
  }
  func.func @transform_3(%arg0: i32) -> (i32, i32) {
    %c0_i32 = arith.constant 0 : i32
    %c0_i32_0 = arith.constant 0 : i32
    return %c0_i32, %arg0 : i32, i32
  }
}

module attributes {stable_mosaic.version = 11 : i64} {
  func.func @_matmul_bias_kernel(%arg0: i32, %arg1: memref<1x36xbf16, #tpu.memory_space<vmem>>, %arg2: memref<36x512xbf16, #tpu.memory_space<vmem>>, %arg3: memref<1x1xf32, #tpu.memory_space<vmem>>, %arg4: memref<1x512xf32, #tpu.memory_space<vmem>>) attributes {dimension_semantics = [#tpu.dimension_semantics<parallel>], iteration_bounds = array<i64: 1>, scalar_prefetch = 0 : i64, scratch_operands = 0 : i64, tpu.core_type = #tpu.core_type<tc>, window_params = [{pipeline_mode = #tpu.pipeline_mode<synchronous>, transform_indices = @transform_0, window_bounds = array<i64: 1, 36>}, {transform_indices = @transform_1, window_bounds = array<i64: 36, 512>}, {pipeline_mode = #tpu.pipeline_mode<synchronous>, transform_indices = @transform_2, window_bounds = array<i64: 1, 1>}, {transform_indices = @transform_3, window_bounds = array<i64: 1, 512>}]} {
    %c0 = arith.constant 0 : index
    %c0_0 = arith.constant 0 : index
    %0 = vector.load %arg1[%c0, %c0_0] : memref<1x36xbf16, #tpu.memory_space<vmem>>, vector<1x36xbf16>
    %c0_1 = arith.constant 0 : index
    %c0_2 = arith.constant 0 : index
    %1 = vector.load %arg2[%c0_1, %c0_2] : memref<36x512xbf16, #tpu.memory_space<vmem>>, vector<36x512xbf16>
    %cst = arith.constant dense<0.000000e+00> : vector<1x512xf32>
    %2 = tpu.matmul %0, %1, %cst {dimension_numbers = #tpu.dot_dimension_numbers<[1], [0], [0], [1], [0, 0, 1, 1], [], []>} : vector<1x36xbf16>, vector<36x512xbf16>, vector<1x512xf32> -> vector<1x512xf32>
    %c0_3 = arith.constant 0 : index
    %c0_4 = arith.constant 0 : index
    %3 = vector.load %arg3[%c0_3, %c0_4] : memref<1x1xf32, #tpu.memory_space<vmem>>, vector<1x1xf32>
    %4 = vector.broadcast %3 : vector<1x1xf32> to vector<1x512xf32>
    %5 = arith.addf %2, %4 : vector<1x512xf32>
    %c0_5 = arith.constant 0 : index
    %c0_6 = arith.constant 0 : index
    %6 = vector.load %arg4[%c0_5, %c0_6] : memref<1x512xf32, #tpu.memory_space<vmem>>, vector<1x512xf32>
    tpu.vector_store %arg4[%c0_5, %c0_6], %5 {strides = array<i32>} : memref<1x512xf32, #tpu.memory_space<vmem>>, vector<1x512xf32>,
    return
  }
  func.func @transform_0(%arg0: i32) -> (i32, i32) {
    %c0_i32 = arith.constant 0 : i32
    %c0_i32_0 = arith.constant 0 : i32
    %c0_i32_1 = arith.constant 0 : i32
    return %c0_i32, %c0_i32_0 : i32, i32
  }
  func.func @transform_1(%arg0: i32) -> (i32, i32) {
    %c0_i32 = arith.constant 0 : i32
    %c0_i32_0 = arith.constant 0 : i32
    return %c0_i32, %arg0 : i32, i32
  }
  func.func @transform_2(%arg0: i32) -> (i32, i32) {
    %c0_i32 = arith.constant 0 : i32
    %c0_i32_0 = arith.constant 0 : i32
    %c0_i32_1 = arith.constant 0 : i32
    return %c0_i32, %c0_i32_0 : i32, i32
  }
  func.func @transform_3(%arg0: i32) -> (i32, i32) {
    %c0_i32 = arith.constant 0 : i32
    %c0_i32_0 = arith.constant 0 : i32
    return %c0_i32, %arg0 : i32, i32
  }
}

module attributes {stable_mosaic.version = 11 : i64} {
  func.func @_matmul_bias_kernel(%arg0: i32, %arg1: memref<4x36xbf16, #tpu.memory_space<vmem>>, %arg2: memref<36x512xbf16, #tpu.memory_space<vmem>>, %arg3: memref<4x1xf32, #tpu.memory_space<vmem>>, %arg4: memref<4x512xbf16, #tpu.memory_space<vmem>>) attributes {dimension_semantics = [#tpu.dimension_semantics<parallel>], iteration_bounds = array<i64: 1>, scalar_prefetch = 0 : i64, scratch_operands = 0 : i64, tpu.core_type = #tpu.core_type<tc>, window_params = [{pipeline_mode = #tpu.pipeline_mode<synchronous>, transform_indices = @transform_0, window_bounds = array<i64: 4, 36>}, {transform_indices = @transform_1, window_bounds = array<i64: 36, 512>}, {pipeline_mode = #tpu.pipeline_mode<synchronous>, transform_indices = @transform_2, window_bounds = array<i64: 4, 1>}, {transform_indices = @transform_3, window_bounds = array<i64: 4, 512>}]} {
    %c0 = arith.constant 0 : index
    %c0_0 = arith.constant 0 : index
    %0 = vector.load %arg1[%c0, %c0_0] : memref<4x36xbf16, #tpu.memory_space<vmem>>, vector<4x36xbf16>
    %c0_1 = arith.constant 0 : index
    %c0_2 = arith.constant 0 : index
    %1 = vector.load %arg2[%c0_1, %c0_2] : memref<36x512xbf16, #tpu.memory_space<vmem>>, vector<36x512xbf16>
    %cst = arith.constant dense<0.000000e+00> : vector<4x512xf32>
    %2 = tpu.matmul %0, %1, %cst {dimension_numbers = #tpu.dot_dimension_numbers<[1], [0], [0], [1], [0, 0, 1, 1], [], []>} : vector<4x36xbf16>, vector<36x512xbf16>, vector<4x512xf32> -> vector<4x512xf32>
    %c0_3 = arith.constant 0 : index
    %c0_4 = arith.constant 0 : index
    %3 = vector.load %arg3[%c0_3, %c0_4] : memref<4x1xf32, #tpu.memory_space<vmem>>, vector<4x1xf32>
    %4 = vector.broadcast %3 : vector<4x1xf32> to vector<4x512xf32>
    %5 = arith.addf %2, %4 : vector<4x512xf32>
    %cst_5 = arith.constant 0.000000e+00 : f32
    %6 = vector.broadcast %cst_5 : f32 to vector<4x512xf32>
    %7 = arith.maximumf %5, %6 : vector<4x512xf32>
    %8 = arith.truncf %7 : vector<4x512xf32> to vector<4x512xbf16>
    %c0_6 = arith.constant 0 : index
    %c0_7 = arith.constant 0 : index
    %9 = vector.load %arg4[%c0_6, %c0_7] : memref<4x512xbf16, #tpu.memory_space<vmem>>, vector<4x512xbf16>
    tpu.vector_store %arg4[%c0_6, %c0_7], %8 {strides = array<i32>} : memref<4x512xbf16, #tpu.memory_space<vmem>>, vector<4x512xbf16>,
    return
  }
  func.func @transform_0(%arg0: i32) -> (i32, i32) {
    %c0_i32 = arith.constant 0 : i32
    %c0_i32_0 = arith.constant 0 : i32
    %c0_i32_1 = arith.constant 0 : i32
    return %c0_i32, %c0_i32_0 : i32, i32
  }
  func.func @transform_1(%arg0: i32) -> (i32, i32) {
    %c0_i32 = arith.constant 0 : i32
    %c0_i32_0 = arith.constant 0 : i32
    return %c0_i32, %arg0 : i32, i32
  }
  func.func @transform_2(%arg0: i32) -> (i32, i32) {
    %c0_i32 = arith.constant 0 : i32
    %c0_i32_0 = arith.constant 0 : i32
    %c0_i32_1 = arith.constant 0 : i32
    return %c0_i32, %c0_i32_0 : i32, i32
  }
  func.func @transform_3(%arg0: i32) -> (i32, i32) {
    %c0_i32 = arith.constant 0 : i32
    %c0_i32_0 = arith.constant 0 : i32
    return %c0_i32, %arg0 : i32, i32
  }
}

</mosaic_0001>

<llo_original>
// kernel: tile.1
$region0: #{tile.1}
  %s0 = inlined_call_operand.vmem [shape: f32[4,4], index: 0, kind: input, shape index: {}]
  %s1 = inlined_call_operand.vmem [shape: f32[16,1], index: 1, kind: output, shape index: {}]
  $region1: #{tile.1} parent=0
    #allocation0 [shape = 'u8[4096]{0}', space=vmem, size = 0x1000, scoped, tag = 'scoped mem for input reshape']
    %s3 = ssub.s32 16, 1
    %v4 = vld [vmem:[%s0] sm:%s3]
    %5 = vst [vmem:[#allocation0] sm:%s3] %v4
    %v6 = vld [vmem:[#allocation0] sm:$0xf]
    %vm7 = vcmask 7168
    %8 = vst.msk [vmem:[%s1] ss:$4 sm:$0xf] %vm7, %v6
    %v9 = vld [vmem:[#allocation0] sm:$0xf]
    %10 = vrot.lane.b32.xlu0 %v9, 127
    %v11 = vpop.permute.xlu0 %10
    %vm12 = vcmask 7168
    %s13 = scalar_lea.vmem %s1, 1
    %14 = vst.msk [vmem:[%s13] ss:$4 sm:$0xf] %vm12, %v11
    %v15 = vld [vmem:[#allocation0] sm:$0xf]
    %16 = vrot.lane.b32.xlu0 %v15, 126
    %v17 = vpop.permute.xlu0 %16
    %vm18 = vcmask 7168
    %s19 = scalar_lea.vmem %s1, 2
    %20 = vst.msk [vmem:[%s19] ss:$4 sm:$0xf] %vm18, %v17
    %v21 = vld [vmem:[#allocation0] sm:$0xf]
    %22 = vrot.lane.b32.xlu0 %v21, 125
    %v23 = vpop.permute.xlu0 %22
    %vm24 = vcmask 7168
    %s25 = scalar_lea.vmem %s1, 3
    %26 = vst.msk [vmem:[%s25] ss:$4 sm:$0xf] %vm24, %v23

// kernel: tile.10
$region0: #{tile.10}
  #allocation0 [shape = 's32[1]{0}', space=sflag, size = 0x4, scoped, tag = 'scoped memory for tile.10']
  %s0 = inlined_call_operand.vmem [shape: f32[16], index: 0, kind: input, shape index: {}]
  %s1 = inlined_call_operand.vmem [shape: f32[4,16], index: 1, kind: output, shape index: {}]
  // Predicated region
  $region2: #{tile.10} parent=0 // pred_check
    _
  $region3: #{tile.10} parent=0 // pred_check_branch
    %3 = sbr.rel (0) target = $region5
  $region4: #{tile.10} parent=0 // pred_region
    _
  $region5: #{tile.10} parent=0 // pred_fallthru
    _
  %v4 = vld [vmem:[%s0] ss:$0 sm:$0xff]
  %5 = vst [vmem:[%s1] sm:$0xf] %v4

// kernel: tile.0
$region0: #{tile.0}
  %s0 = inlined_call_operand.vmem [shape: f32[4,16], index: 0, kind: input, shape index: {}]
  %s1 = inlined_call_operand.vmem [shape: f32[64,1], index: 1, kind: output, shape index: {}]
  $region1: #{tile.0} parent=0
    #allocation0 [shape = 'u8[4096]{0}', space=vmem, size = 0x1000, scoped, tag = 'scoped mem for input reshape']
    %s3 = ssub.s32 16, 1
    %v4 = vld [vmem:[%s0] sm:%s3]
    %5 = vst [vmem:[#allocation0] sm:%s3] %v4
    %v6 = vld [vmem:[#allocation0] sm:$0xf]
    %vm7 = vcmask 7168
    %8 = vst.msk [vmem:[%s1] ss:$16 sm:$0x3] %vm7, %v6
    %9 = vst.msk [vmem:[%s1] ss:$16 sm:$0xc] %vm7, %v6
    %v10 = vld [vmem:[#allocation0] sm:$0xf]
    %11 = vrot.lane.b32.xlu0 %v10, 127
    %v12 = vpop.permute.xlu0 %11
    %vm13 = vcmask 7168
    %s14 = scalar_lea.vmem %s1, 1
    %15 = vst.msk [vmem:[%s14] ss:$16 sm:$0x3] %vm13, %v12
    %s16 = scalar_lea.vmem %s1, 1
    %17 = vst.msk [vmem:[%s16] ss:$16 sm:$0xc] %vm13, %v12
    %v18 = vld [vmem:[#allocation0] sm:$0xf]
    %19 = vrot.lane.b32.xlu0 %v18, 126
    %v20 = vpop.permute.xlu0 %19
    %vm21 = vcmask 7168
    %s22 = scalar_lea.vmem %s1, 2
    %23 = vst.msk [vmem:[%s22] ss:$16 sm:$0x3] %vm21, %v20
    %s24 = scalar_lea.vmem %s1, 2
    %25 = vst.msk [vmem:[%s24] ss:$16 sm:$0xc] %vm21, %v20
    %v26 = vld [vmem:[#allocation0] sm:$0xf]
    %27 = vrot.lane.b32.xlu0 %v26, 125
    %v28 = vpop.permute.xlu0 %27
    %vm29 = vcmask 7168
    %s30 = scalar_lea.vmem %s1, 3
    %31 = vst.msk [vmem:[%s30] ss:$16 sm:$0x3] %vm29, %v28
    %s32 = scalar_lea.vmem %s1, 3
    %33 = vst.msk [vmem:[%s32] ss:$16 sm:$0xc] %vm29, %v28
    %v34 = vld [vmem:[#allocation0] sm:$0xf]
    %35 = vrot.lane.b32.xlu0 %v34, 124
    %v36 = vpop.permute.xlu0 %35
    %vm37 = vcmask 7168
    %s38 = scalar_lea.vmem %s1, 4
    %39 = vst.msk [vmem:[%s38] ss:$16 sm:$0x3] %vm37, %v36
    %s40 = scalar_lea.vmem %s1, 4
    %41 = vst.msk [vmem:[%s40] ss:$16 sm:$0xc] %vm37, %v36
    %v42 = vld [vmem:[#allocation0] sm:$0xf]
    %43 = vrot.lane.b32.xlu0 %v42, 123
    %v44 = vpop.permute.xlu0 %43
    %vm45 = vcmask 7168
    %s46 = scalar_lea.vmem %s1, 5
    %47 = vst.msk [vmem:[%s46] ss:$16 sm:$0x3] %vm45, %v44
    %s48 = scalar_lea.vmem %s1, 5
    %49 = vst.msk [vmem:[%s48] ss:$16 sm:$0xc] %vm45, %v44
    %v50 = vld [vmem:[#allocation0] sm:$0xf]
    %51 = vrot.lane.b32.xlu0 %v50, 122
    %v52 = vpop.permute.xlu0 %51
    %vm53 = vcmask 7168
    %s54 = scalar_lea.vmem %s1, 6
    %55 = vst.msk [vmem:[%s54] ss:$16 sm:$0x3] %vm53, %v52
    %s56 = scalar_lea.vmem %s1, 6
    %57 = vst.msk [vmem:[%s56] ss:$16 sm:$0xc] %vm53, %v52
    %v58 = vld [vmem:[#allocation0] sm:$0xf]
    %59 = vrot.lane.b32.xlu0 %v58, 121
    %v60 = vpop.permute.xlu0 %59
    %vm61 = vcmask 7168
    %s62 = scalar_lea.vmem %s1, 7
    %63 = vst.msk [vmem:[%s62] ss:$16 sm:$0x3] %vm61, %v60
    %s64 = scalar_lea.vmem %s1, 7
    %65 = vst.msk [vmem:[%s64] ss:$16 sm:$0xc] %vm61, %v60
    %v66 = vld [vmem:[#allocation0] sm:$0xf]
    %67 = vrot.lane.b32.xlu0 %v66, 120
    %v68 = vpop.permute.xlu0 %67
    %vm69 = vcmask 7168
    %s70 = scalar_lea.vmem %s1, 8
    %71 = vst.msk [vmem:[%s70] ss:$16 sm:$0x3] %vm69, %v68
    %s72 = scalar_lea.vmem %s1, 8
    %73 = vst.msk [vmem:[%s72] ss:$16 sm:$0xc] %vm69, %v68
    %v74 = vld [vmem:[#allocation0] sm:$0xf]
    %75 = vrot.lane.b32.xlu0 %v74, 119
    %v76 = vpop.permute.xlu0 %75
    %vm77 = vcmask 7168
    %s78 = scalar_lea.vmem %s1, 9
    %79 = vst.msk [vmem:[%s78] ss:$16 sm:$0x3] %vm77, %v76
    %s80 = scalar_lea.vmem %s1, 9
    %81 = vst.msk [vmem:[%s80] ss:$16 sm:$0xc] %vm77, %v76
    %v82 = vld [vmem:[#allocation0] sm:$0xf]
    %83 = vrot.lane.b32.xlu0 %v82, 118
    %v84 = vpop.permute.xlu0 %83
    %vm85 = vcmask 7168
    %s86 = scalar_lea.vmem %s1, 10
    %87 = vst.msk [vmem:[%s86] ss:$16 sm:$0x3] %vm85, %v84
    %s88 = scalar_lea.vmem %s1, 10
    %89 = vst.msk [vmem:[%s88] ss:$16 sm:$0xc] %vm85, %v84
    %v90 = vld [vmem:[#allocation0] sm:$0xf]
    %91 = vrot.lane.b32.xlu0 %v90, 117
    %v92 = vpop.permute.xlu0 %91
    %vm93 = vcmask 7168
    %s94 = scalar_lea.vmem %s1, 11
    %95 = vst.msk [vmem:[%s94] ss:$16 sm:$0x3] %vm93, %v92
    %s96 = scalar_lea.vmem %s1, 11
    %97 = vst.msk [vmem:[%s96] ss:$16 sm:$0xc] %vm93, %v92
    %v98 = vld [vmem:[#allocation0] sm:$0xf]
    %99 = vrot.lane.b32.xlu0 %v98, 116
    %v100 = vpop.permute.xlu0 %99
    %vm101 = vcmask 7168
    %s102 = scalar_lea.vmem %s1, 12
    %103 = vst.msk [vmem:[%s102] ss:$16 sm:$0x3] %vm101, %v100
    %s104 = scalar_lea.vmem %s1, 12
    %105 = vst.msk [vmem:[%s104] ss:$16 sm:$0xc] %vm101, %v100
    %v106 = vld [vmem:[#allocation0] sm:$0xf]
    %107 = vrot.lane.b32.xlu0 %v106, 115
    %v108 = vpop.permute.xlu0 %107
    %vm109 = vcmask 7168
    %s110 = scalar_lea.vmem %s1, 13
    %111 = vst.msk [vmem:[%s110] ss:$16 sm:$0x3] %vm109, %v108
    %s112 = scalar_lea.vmem %s1, 13
    %113 = vst.msk [vmem:[%s112] ss:$16 sm:$0xc] %vm109, %v108
    %v114 = vld [vmem:[#allocation0] sm:$0xf]
    %115 = vrot.lane.b32.xlu0 %v114, 114
    %v116 = vpop.permute.xlu0 %115
    %vm117 = vcmask 7168
    %s118 = scalar_lea.vmem %s1, 14
    %119 = vst.msk [vmem:[%s118] ss:$16 sm:$0x3] %vm117, %v116
    %s120 = scalar_lea.vmem %s1, 14
    %121 = vst.msk [vmem:[%s120] ss:$16 sm:$0xc] %vm117, %v116
    %v122 = vld [vmem:[#allocation0] sm:$0xf]
    %123 = vrot.lane.b32.xlu0 %v122, 113
    %v124 = vpop.permute.xlu0 %123
    %vm125 = vcmask 7168
    %s126 = scalar_lea.vmem %s1, 15
    %127 = vst.msk [vmem:[%s126] ss:$16 sm:$0x3] %vm125, %v124
    %s128 = scalar_lea.vmem %s1, 15
    %129 = vst.msk [vmem:[%s128] ss:$16 sm:$0xc] %vm125, %v124

// kernel: tile.14
$region0: #{tile.14}
  #allocation0 [shape = 's32[1]{0}', space=sflag, size = 0x4, scoped, tag = 'scoped memory for tile.14']
  %s0 = inlined_call_operand.vmem [shape: f32[4], index: 0, kind: input, shape index: {}]
  %s1 = inlined_call_operand.vmem [shape: f32[4,4], index: 1, kind: output, shape index: {}]
  // Predicated region
  $region2: #{tile.14} parent=0 // pred_check
    _
  $region3: #{tile.14} parent=0 // pred_check_branch
    %3 = sbr.rel (0) target = $region5
  $region4: #{tile.14} parent=0 // pred_region
    _
  $region5: #{tile.14} parent=0 // pred_fallthru
    _
  %v4 = vld [vmem:[%s0] ss:$0 sm:$0xff]
  %5 = vst [vmem:[%s1] sm:$0xf] %v4

// kernel: generator3_forward.18
$region0: #{generator3_forward.18}
  #allocation0 [shape = 'u32[]', space=smem, size = 0x4, offset = 0x4, fixed_abs, tag = 'smem constant byte address 0x4 - core index']
  #allocation1 [shape = 'u32[72,128]{1,0:T(1,128)}', space=vmem, size = 0x9000, scoped, tag = 'internal scratch']
  %s0 = inlined_call_operand.vmem [shape: bf16[4,27], index: 0, kind: input, shape index: {}]
  %s1 = inlined_call_operand.vmem [shape: bf16[27,2048], index: 1, kind: input, shape index: {}]
  %s2 = inlined_call_operand.vmem [shape: f32[4,1], index: 2, kind: input, shape index: {}]
  %s3 = inlined_call_operand.vmem [shape: bf16[4,2048], index: 3, kind: output, shape index: {}]
  %s4 = sld [smem:[#allocation0]]
  $region68: #{generator3_forward.18} parent=0
    _
  %s6 = ssub.s32 1, %s4
  %s7 = scalar_select 0, %s6, %s4
  $region1: #{generator3_forward.18} parent=0
    #allocation2 [shape = 'u8[131072]{0}', space=vmem, size = 0x20000, scoped, tag = 'input window, operand 1']
    loop: start=0, step=1, limit=4
    $region2: #{generator3_forward.18} parent=1 // loop_pre_header
      _
    $region3: #{generator3_forward.18} parent=1 // loop_header
      %s9 = sphi 0, %s13
      %p10 = scmp.ge.s32.totalorder %s9, 4
      %s17 = sphi 0, %s17
      %s19 = sphi 0, %s17
      %s20 = sphi 0, %s19
      %s34 = sphi 0, %s20
      %s40 = sphi 0, %s42
      %s43 = sphi 0, %s40
      %s44 = sphi 0, %s43
      %s60 = sphi 0, %s44
      %s64 = sphi 0, %s64
      %s66 = sphi 0, %s64
      %s67 = sphi 0, %s66
      %s81 = sphi 0, %s67
      %s87 = sphi 0, %s89
      %s90 = sphi 0, %s87
      %s91 = sphi 0, %s90
      %s107 = sphi 0, %s91
    $region4: #{generator3_forward.18} parent=1 // loop_header_branch
      %12 = sbr.rel (%p10) target = $region8
    $region5: #{generator3_forward.18} parent=1 // loop_body
      %s14 = ssub.s32 %s9, 1
      %s15 = ssub.s32 %s9, 2
      %s16 = sadd.s32 %s9, 1
      %s18 = sadd.s32 %s17, 1
      %p21 = scmp.eq.s32.totalorder %s9, 1
      %p22 = scmp.ne.s32.totalorder %s17, %s19
      %p23 = scmp.eq.s32.totalorder %s9, 0
      %p24 = por %p22, %p23
      %p25 = scmp.ne.s32.totalorder %s17, %s19
      %p26 = scmp.eq.s32.totalorder %s14, 1
      %p27 = por %p25, %p26
      %p28 = scmp.ne.s32.totalorder %s19, %s20
      %p29 = scmp.eq.s32.totalorder %s14, 0
      %p30 = por %p28, %p29
      %p31 = scmp.ne.s32.totalorder %s19, %s20
      %p32 = scmp.eq.s32.totalorder %s15, 1
      %p33 = por %p31, %p32
      %p35 = scmp.ne.s32.totalorder %s20, %s34
      %p36 = scmp.eq.s32.totalorder %s15, 0
      %p37 = por %p35, %p36
      %s38 = ssub.s32 %s9, %s16
      %p39 = scmp.eq.s32.totalorder %s38, 0
      %s41 = sadd.s32 %s40, 1
      %s42 = scalar_select %p39, %s40, %s41
      %p45 = pneg %p39
      %p46 = scmp.eq.s32.totalorder %s9, 1
      %p47 = por %p45, %p46
      %p48 = scmp.ne.s32.totalorder %s40, %s43
      %p49 = scmp.eq.s32.totalorder %s9, 0
      %p50 = por %p48, %p49
      %p51 = scmp.ne.s32.totalorder %s40, %s43
      %p52 = scmp.eq.s32.totalorder %s14, 1
      %p53 = por %p51, %p52
      %p54 = scmp.ne.s32.totalorder %s43, %s44
      %p55 = scmp.eq.s32.totalorder %s14, 0
      %p56 = por %p54, %p55
      %p57 = scmp.ne.s32.totalorder %s43, %s44
      %p58 = scmp.eq.s32.totalorder %s15, 1
      %p59 = por %p57, %p58
      %p61 = scmp.ne.s32.totalorder %s44, %s60
      %p62 = scmp.eq.s32.totalorder %s15, 0
      %p63 = por %p61, %p62
      %s65 = sadd.s32 %s64, 1
      %p68 = scmp.eq.s32.totalorder %s9, 1
      %p69 = scmp.ne.s32.totalorder %s64, %s66
      %p70 = scmp.eq.s32.totalorder %s9, 0
      %p71 = por %p69, %p70
      %p72 = scmp.ne.s32.totalorder %s64, %s66
      %p73 = scmp.eq.s32.totalorder %s14, 1
      %p74 = por %p72, %p73
      %p75 = scmp.ne.s32.totalorder %s66, %s67
      %p76 = scmp.eq.s32.totalorder %s14, 0
      %p77 = por %p75, %p76
      %p78 = scmp.ne.s32.totalorder %s66, %s67
      %p79 = scmp.eq.s32.totalorder %s15, 1
      %p80 = por %p78, %p79
      %p82 = scmp.ne.s32.totalorder %s67, %s81
      %p83 = scmp.eq.s32.totalorder %s15, 0
      %p84 = por %p82, %p83
      %s85 = ssub.s32 %s9, %s16
      %p86 = scmp.eq.s32.totalorder %s85, 0
      %s88 = sadd.s32 %s87, 1
      %s89 = scalar_select %p86, %s87, %s88
      %p92 = pneg %p86
      %p93 = scmp.eq.s32.totalorder %s9, 1
      %p94 = por %p92, %p93
      %p95 = scmp.ne.s32.totalorder %s87, %s90
      %p96 = scmp.eq.s32.totalorder %s9, 0
      %p97 = por %p95, %p96
      %p98 = scmp.ne.s32.totalorder %s87, %s90
      %p99 = scmp.eq.s32.totalorder %s14, 1
      %p100 = por %p98, %p99
      %p101 = scmp.ne.s32.totalorder %s90, %s91
      %p102 = scmp.eq.s32.totalorder %s14, 0
      %p103 = por %p101, %p102
      %p104 = scmp.ne.s32.totalorder %s90, %s91
      %p105 = scmp.eq.s32.totalorder %s15, 1
      %p106 = por %p104, %p105
      %p108 = scmp.ne.s32.totalorder %s91, %s107
      %p109 = scmp.eq.s32.totalorder %s15, 0
      %p110 = por %p108, %p109
      %p111 = scmp.le.s32.totalorder 1, %s9
      %p112 = scmp.lt.s32.totalorder %s9, 3
      %p113 = pnand %p111, %p112
      %p114 = pneg %p113
      // Predicated region
      $region9: #{generator3_forward.18} parent=5 // pred_check
        _
      $region10: #{generator3_forward.18} parent=5 // pred_check_branch
        %116 = sbr.rel (%p113) target = $region12
      $region11: #{generator3_forward.18} parent=5 // pred_region
        %s117 = ssub.s32 %s9, 1
        // Predicated region
        $region13: #{generator3_forward.18} parent=11 // pred_check
          %p118 = pneg %p30
        $region14: #{generator3_forward.18} parent=11 // pred_check_branch
          %120 = sbr.rel (%p118) target = $region16
        $region15: #{generator3_forward.18} parent=11 // pred_region
          _
        $region16: #{generator3_forward.18} parent=11 // pred_fallthru
          _
        // Predicated region
        $region17: #{generator3_forward.18} parent=11 // pred_check
          %p121 = pneg %p77
        $region18: #{generator3_forward.18} parent=11 // pred_check_branch
          %123 = sbr.rel (%p121) target = $region20
        $region19: #{generator3_forward.18} parent=11 // pred_region
          _
        $region20: #{generator3_forward.18} parent=11 // pred_fallthru
          _
      $region12: #{generator3_forward.18} parent=5 // pred_fallthru
        _
      %p124 = scmp.lt.s32.totalorder %s9, 2
      // Predicated region
      $region21: #{generator3_forward.18} parent=5 // pred_check
        %p125 = pneg %p124
      $region22: #{generator3_forward.18} parent=5 // pred_check_branch
        %127 = sbr.rel (%p125) target = $region24
      $region23: #{generator3_forward.18} parent=5 // pred_region
        // Predicated region
        $region25: #{generator3_forward.18} parent=23 // pred_check
          %p128 = pneg %p50
        $region26: #{generator3_forward.18} parent=23 // pred_check_branch
          %130 = sbr.rel (%p128) target = $region28
        $region27: #{generator3_forward.18} parent=23 // pred_region
          %s131 = sand.u32 %s40, 1
          %s132 = sand.u32 %s40, 1
          %s133 = smul.addr %s132, 128
          %s134 = scalar_lea.vmem [#allocation2], %s133
          %s135 = smul.u32 8, %s9
          %s136 = smul.addr %s135, 4
          %s137 = scalar_lea.vmem %s1, %s136
          // Predicated region
          $region29: #{generator3_forward.18} parent=27 // pred_check
            _
          $region30: #{generator3_forward.18} parent=27 // pred_check_branch
            %139 = sbr.rel (0) target = $region32
          $region31: #{generator3_forward.18} parent=27 // pred_region
            // Predicated region
            $region33: #{generator3_forward.18} parent=31 // pred_check
              _
            $region34: #{generator3_forward.18} parent=31 // pred_check_branch
              %141 = sbr.rel (0) target = $region36
            $region35: #{generator3_forward.18} parent=31 // pred_region
              loop: start=0, step=1, limit=1
              $region37: #{generator3_forward.18} parent=35 // loop_pre_header
                _
              $region38: #{generator3_forward.18} parent=35 // loop_header
                %s143 = sphi 0, %s147
                %p144 = scmp.ge.s32.totalorder %s143, 1
                %s148 = sphi %s137, %s137
                %s149 = sphi %s134, %s134
              $region39: #{generator3_forward.18} parent=35 // loop_header_branch
                %146 = sbr.rel (%p144) target = $region43
              $region40: #{generator3_forward.18} parent=35 // loop_body
                %v150 = vld [vmem:[%s148] sm:$0xff]
                %151 = vst [vmem:[%s149] sm:$0xff] %v150
                %v152 = vld [vmem:[%s148 + $0x8] sm:$0xff]
                %153 = vst [vmem:[%s149 + $0x8] sm:$0xff] %v152
                %v154 = vld [vmem:[%s148 + $0x10] sm:$0xff]
                %155 = vst [vmem:[%s149 + $0x10] sm:$0xff] %v154
                %v156 = vld [vmem:[%s148 + $0x18] sm:$0xff]
                %157 = vst [vmem:[%s149 + $0x18] sm:$0xff] %v156
                %v158 = vld [vmem:[%s148 + $0x40] sm:$0xff]
                %159 = vst [vmem:[%s149 + $0x20] sm:$0xff] %v158
                %v160 = vld [vmem:[%s148 + $0x48] sm:$0xff]
                %161 = vst [vmem:[%s149 + $0x28] sm:$0xff] %v160
                %v162 = vld [vmem:[%s148 + $0x50] sm:$0xff]
                %163 = vst [vmem:[%s149 + $0x30] sm:$0xff] %v162
                %v164 = vld [vmem:[%s148 + $0x58] sm:$0xff]
                %165 = vst [vmem:[%s149 + $0x38] sm:$0xff] %v164
                %v166 = vld [vmem:[%s148 + $0x80] sm:$0xff]
                %167 = vst [vmem:[%s149 + $0x40] sm:$0xff] %v166
                %v168 = vld [vmem:[%s148 + $0x88] sm:$0xff]
                %169 = vst [vmem:[%s149 + $0x48] sm:$0xff] %v168
                %v170 = vld [vmem:[%s148 + $0x90] sm:$0xff]
                %171 = vst [vmem:[%s149 + $0x50] sm:$0xff] %v170
                %v172 = vld [vmem:[%s148 + $0x98] sm:$0xff]
                %173 = vst [vmem:[%s149 + $0x58] sm:$0xff] %v172
                %v174 = vld [vmem:[%s148 + $0xc0] sm:$0xff]
                %175 = vst [vmem:[%s149 + $0x60] sm:$0xff] %v174
                %v176 = vld [vmem:[%s148 + $0xc8] sm:$0xff]
                %177 = vst [vmem:[%s149 + $0x68] sm:$0xff] %v176
                %v178 = vld [vmem:[%s148 + $0xd0] sm:$0xff]
                %179 = vst [vmem:[%s149 + $0x70] sm:$0xff] %v178
                %v180 = vld [vmem:[%s148 + $0xd8] sm:$0xff]
                %181 = vst [vmem:[%s149 + $0x78] sm:$0xff] %v180
              $region41: #{generator3_forward.18} parent=35 // loop_footer
                %s147 = sadd.s32 1, %s143
              $region42: #{generator3_forward.18} parent=35 // loop_footer_branch
                %142 = sbr.rel target = $region38
              $region43: #{generator3_forward.18} parent=35 // loop_exit
                _
            $region36: #{generator3_forward.18} parent=31 // pred_fallthru
              _
            // Predicated region
            $region44: #{generator3_forward.18} parent=31 // pred_check
              _
            $region45: #{generator3_forward.18} parent=31 // pred_check_branch
              %183 = sbr.rel target = $region47
            $region46: #{generator3_forward.18} parent=31 // pred_region
              _
            $region47: #{generator3_forward.18} parent=31 // pred_fallthru
              _
          $region32: #{generator3_forward.18} parent=27 // pred_fallthru
            _
          %184 = vnop
        $region28: #{generator3_forward.18} parent=23 // pred_fallthru
          _
      $region24: #{generator3_forward.18} parent=5 // pred_fallthru
        _
      %p185 = scmp.le.s32.totalorder 1, %s9
      %p186 = scmp.lt.s32.totalorder %s9, 3
      %p187 = pnand %p185, %p186
      %p188 = pneg %p187
      // Predicated region
      $region48: #{generator3_forward.18} parent=5 // pred_check
        _
      $region49: #{generator3_forward.18} parent=5 // pred_check_branch
        %190 = sbr.rel (%p187) target = $region51
      $region50: #{generator3_forward.18} parent=5 // pred_region
        %s191 = ssub.s32 %s9, 1
        %s192 = sand.u32 %s43, 1
        %s193 = sand.u32 %s43, 1
        %s194 = smul.addr %s193, 128
        %s195 = scalar_lea.vmem [#allocation2], %s194
        // Predicated region
        $region52: #{generator3_forward.18} parent=50 // pred_check
          %p196 = pneg %p56
        $region53: #{generator3_forward.18} parent=50 // pred_check_branch
          %198 = sbr.rel (%p196) target = $region55
        $region54: #{generator3_forward.18} parent=50 // pred_region
          _
        $region55: #{generator3_forward.18} parent=50 // pred_fallthru
          _
        %p199 = pneg %p30
        %p200 = pneg %p27
        %s201 = sand.u32 %s43, 1
        %s202 = sand.u32 %s43, 1
        %s203 = smul.addr %s202, 128
        %s204 = scalar_lea.vmem [#allocation2], %s203
        %p205 = pneg %p56
        %p206 = pneg %p53
        %p207 = pneg %p77
        %p208 = pneg %p74
        %p209 = pneg %p103
        %p210 = pneg %p100
        %s211 = smul.u32 8, %s14
        %p212 = scmp.lt.s32.totalorder %s211, 15
        %s213 = scalar_select %p212, %s211, 15
        %s214 = smul.addr %s213, 2
        %s215 = scalar_lea.vmem %s3, %s214
        %s216 = smul.u32 8, %s14
        %s217 = smul.u32 8, %s14
        %p218 = scmp.lt.s32.totalorder %s217, 15
        %s219 = scalar_select %p218, %s217, 15
        %s220 = smul.addr %s219, 2
        %s221 = scalar_lea.vmem %s3, %s220
        %s222 = smul.u32 8, %s14
        %v224 = vld [vmem:[%s0] sm:$0x3]
        %v225 = vld [vmem:[%s195] sm:$0xff]
        %v226 = vld [vmem:[%s195 + $0x8] sm:$0xff]
        %v227 = vld [vmem:[%s195 + $0x10] sm:$0xff]
        %v228 = vld [vmem:[%s195 + $0x18] sm:$0xff]
        %v229 = vld [vmem:[%s195 + $0x20] sm:$0xff]
        %v230 = vld [vmem:[%s195 + $0x28] sm:$0xff]
        %v231 = vld [vmem:[%s195 + $0x30] sm:$0xff]
        %v232 = vld [vmem:[%s195 + $0x38] sm:$0xff]
        %v233 = vld [vmem:[%s195 + $0x40] sm:$0xff]
        %v234 = vld [vmem:[%s195 + $0x48] sm:$0xff]
        %v235 = vld [vmem:[%s195 + $0x50] sm:$0xff]
        %v236 = vld [vmem:[%s195 + $0x58] sm:$0xff]
        %v237 = vld [vmem:[%s195 + $0x60] sm:$0x33]
        %v238 = vld [vmem:[%s195 + $0x68] sm:$0x33]
        %v239 = vld [vmem:[%s195 + $0x70] sm:$0x33]
        %v240 = vld [vmem:[%s195 + $0x78] sm:$0x33]
        %v241 = vld [vmem:[%s2] sm:$0xf]
        %243 = vset.pattern.permute.xlu0 0
        %244 = vperm.xlu0 %243, %v241
        %v245 = vpop.permute.xlu0 %244
        %v263 = vunpack.c.l.b16 %v225
        %v264 = vunpack.c.h.b16 %v225
        %v265 = vunpack.c.l.b16 %v226
        %v266 = vunpack.c.h.b16 %v226
        %v267 = vunpack.c.l.b16 %v227
        %v268 = vunpack.c.h.b16 %v227
        %v269 = vunpack.c.l.b16 %v228
        %v270 = vunpack.c.h.b16 %v228
        %v271 = vunpack.c.l.b16 %v229
        %v272 = vunpack.c.h.b16 %v229
        %v273 = vunpack.c.l.b16 %v230
        %v274 = vunpack.c.h.b16 %v230
        %v275 = vunpack.c.l.b16 %v231
        %v276 = vunpack.c.h.b16 %v231
        %v277 = vunpack.c.l.b16 %v232
        %v278 = vunpack.c.h.b16 %v232
        %v279 = vunpack.c.l.b16 %v233
        %v280 = vunpack.c.h.b16 %v233
        %v281 = vunpack.c.l.b16 %v234
        %v282 = vunpack.c.h.b16 %v234
        %v283 = vunpack.c.l.b16 %v235
        %v284 = vunpack.c.h.b16 %v235
        %v285 = vunpack.c.l.b16 %v236
        %v286 = vunpack.c.h.b16 %v236
        %v287 = vunpack.c.l.b16 %v237
        %v288 = vunpack.c.h.b16 %v237
        %v289 = vunpack.c.l.b16 %v238
        %v290 = vunpack.c.h.b16 %v238
        %v291 = vunpack.c.l.b16 %v239
        %v292 = vunpack.c.h.b16 %v239
        %v293 = vunpack.c.l.b16 %v240
        %v294 = vunpack.c.h.b16 %v240
        %v295 = vpack.c.b16 %v271, %v263
        %v296 = vpack.c.b16 %v272, %v264
        %v297 = vpack.c.b16 %v273, %v265
        %v298 = vpack.c.b16 %v274, %v266
        %v299 = vpack.c.b16 %v275, %v267
        %v300 = vpack.c.b16 %v276, %v268
        %v301 = vpack.c.b16 %v277, %v269
        %v302 = vpack.c.b16 %v278, %v270
        %v303 = vpack.c.b16 %v287, %v279
        %v304 = vpack.c.b16 %v288, %v280
        %v305 = vpack.c.b16 %v289, %v281
        %v306 = vpack.c.b16 %v290, %v282
        %v307 = vpack.c.b16 %v291, %v283
        %v308 = vpack.c.b16 %v292, %v284
        %v309 = vpack.c.b16 %v293, %v285
        %v310 = vpack.c.b16 %v294, %v286
        %vm319 = vcmask 220160
        %v321 = vsel %vm319, %v224, 0
        %vm323 = vcmask 1044480
        %vm324 = vcmask 1045504
        %v325 = vsel %vm323, 4294967295, 65535
        %v326 = vsel %vm324, %v325, 0
        %v328 = vand.u32 %v303, %v326
        %v331 = vand.u32 %v304, %v326
        %v334 = vand.u32 %v305, %v326
        %v337 = vand.u32 %v306, %v326
        %v340 = vand.u32 %v307, %v326
        %v343 = vand.u32 %v308, %v326
        %v346 = vand.u32 %v309, %v326
        %v349 = vand.u32 %v310, %v326
        %351 = vmatpush.bf16.msra.mxu0 0
        %352 = vmatpush.bf16.msra.mxu0 0
        %353 = vmatpush.bf16.msra.mxu0 0
        %354 = vmatpush.bf16.msra.mxu0 0
        %355 = vmatpush.bf16.msra.mxu0 0
        %356 = vmatpush.bf16.msra.mxu0 0
        %357 = vmatpush.bf16.msra.mxu0 %v328
        %358 = vmatpush.bf16.msra.mxu0 %v295
        %359 = vmatmul.bf16.gmra.mxu0 %v321
        %v360 = vpop.f32.mrf.mxu0
        %v361 = vadd.f32 %v245, %v360
        %v362 = vpop.f32.mrf.mxu0
        %363 = vdwg.mxu0
        %364 = vmatpush.bf16.msra.mxu0 0
        %365 = vmatpush.bf16.msra.mxu0 0
        %366 = vmatpush.bf16.msra.mxu0 0
        %367 = vmatpush.bf16.msra.mxu0 0
        %368 = vmatpush.bf16.msra.mxu0 0
        %369 = vmatpush.bf16.msra.mxu0 0
        %370 = vmatpush.bf16.msra.mxu0 %v331
        %371 = vmatpush.bf16.msra.mxu0 %v296
        %372 = vmatmul.bf16.gmra.mxu0 %v321
        %v373 = vpop.f32.mrf.mxu0
        %v374 = vadd.f32 %v245, %v373
        %v375 = vpop.f32.mrf.mxu0
        %376 = vdwg.mxu0
        %377 = vmatpush.bf16.msra.mxu0 0
        %378 = vmatpush.bf16.msra.mxu0 0
        %379 = vmatpush.bf16.msra.mxu0 0
        %380 = vmatpush.bf16.msra.mxu0 0
        %381 = vmatpush.bf16.msra.mxu0 0
        %382 = vmatpush.bf16.msra.mxu0 0
        %383 = vmatpush.bf16.msra.mxu0 %v334
        %384 = vmatpush.bf16.msra.mxu0 %v297
        %385 = vmatmul.bf16.gmra.mxu0 %v321
        %v386 = vpop.f32.mrf.mxu0
        %v387 = vadd.f32 %v245, %v386
        %v388 = vpop.f32.mrf.mxu0
        %389 = vdwg.mxu0
        %390 = vmatpush.bf16.msra.mxu0 0
        %391 = vmatpush.bf16.msra.mxu0 0
        %392 = vmatpush.bf16.msra.mxu0 0
        %393 = vmatpush.bf16.msra.mxu0 0
        %394 = vmatpush.bf16.msra.mxu0 0
        %395 = vmatpush.bf16.msra.mxu0 0
        %396 = vmatpush.bf16.msra.mxu0 %v337
        %397 = vmatpush.bf16.msra.mxu0 %v298
        %398 = vmatmul.bf16.gmra.mxu0 %v321
        %v399 = vpop.f32.mrf.mxu0
        %v400 = vadd.f32 %v245, %v399
        %v401 = vpop.f32.mrf.mxu0
        %402 = vdwg.mxu0
        %403 = vmatpush.bf16.msra.mxu0 0
        %404 = vmatpush.bf16.msra.mxu0 0
        %405 = vmatpush.bf16.msra.mxu0 0
        %406 = vmatpush.bf16.msra.mxu0 0
        %407 = vmatpush.bf16.msra.mxu0 0
        %408 = vmatpush.bf16.msra.mxu0 0
        %409 = vmatpush.bf16.msra.mxu0 %v340
        %410 = vmatpush.bf16.msra.mxu0 %v299
        %411 = vmatmul.bf16.gmra.mxu0 %v321
        %v412 = vpop.f32.mrf.mxu0
        %v413 = vadd.f32 %v245, %v412
        %v414 = vpop.f32.mrf.mxu0
        %415 = vdwg.mxu0
        %416 = vmatpush.bf16.msra.mxu0 0
        %417 = vmatpush.bf16.msra.mxu0 0
        %418 = vmatpush.bf16.msra.mxu0 0
        %419 = vmatpush.bf16.msra.mxu0 0
        %420 = vmatpush.bf16.msra.mxu0 0
        %421 = vmatpush.bf16.msra.mxu0 0
        %422 = vmatpush.bf16.msra.mxu0 %v343
        %423 = vmatpush.bf16.msra.mxu0 %v300
        %424 = vmatmul.bf16.gmra.mxu0 %v321
        %v425 = vpop.f32.mrf.mxu0
        %v426 = vadd.f32 %v245, %v425
        %v427 = vpop.f32.mrf.mxu0
        %428 = vdwg.mxu0
        %429 = vmatpush.bf16.msra.mxu0 0
        %430 = vmatpush.bf16.msra.mxu0 0
        %431 = vmatpush.bf16.msra.mxu0 0
        %432 = vmatpush.bf16.msra.mxu0 0
        %433 = vmatpush.bf16.msra.mxu0 0
        %434 = vmatpush.bf16.msra.mxu0 0
        %435 = vmatpush.bf16.msra.mxu0 %v346
        %436 = vmatpush.bf16.msra.mxu0 %v301
        %437 = vmatmul.bf16.gmra.mxu0 %v321
        %v438 = vpop.f32.mrf.mxu0
        %v439 = vadd.f32 %v245, %v438
        %v440 = vpop.f32.mrf.mxu0
        %441 = vdwg.mxu0
        %442 = vmatpush.bf16.msra.mxu0 0
        %443 = vmatpush.bf16.msra.mxu0 0
        %444 = vmatpush.bf16.msra.mxu0 0
        %445 = vmatpush.bf16.msra.mxu0 0
        %446 = vmatpush.bf16.msra.mxu0 0
        %447 = vmatpush.bf16.msra.mxu0 0
        %448 = vmatpush.bf16.msra.mxu0 %v349
        %449 = vmatpush.bf16.msra.mxu0 %v302
        %450 = vmatmul.bf16.gmra.mxu0 %v321
        %v451 = vpop.f32.mrf.mxu0
        %v452 = vadd.f32 %v245, %v451
        %v453 = vpop.f32.mrf.mxu0
        %454 = vdwg.mxu0
        %v455 = vmax.f32 %v361, 0.0
        %v456 = vmax.f32 %v374, 0.0
        %v457 = vmax.f32 %v387, 0.0
        %v458 = vmax.f32 %v400, 0.0
        %v459 = vmax.f32 %v413, 0.0
        %v460 = vmax.f32 %v426, 0.0
        %v461 = vmax.f32 %v439, 0.0
        %v462 = vmax.f32 %v452, 0.0
        %v463 = vpack.c.bf16 %v456, %v455
        %v464 = vpack.c.bf16 %v458, %v457
        %v465 = vpack.c.bf16 %v460, %v459
        %v466 = vpack.c.bf16 %v462, %v461
        %v471 = vrot.slane %v463, 2
        %v472 = vrot.slane %v464, 4
        %v473 = vrot.slane %v464, 6
        %v474 = vrot.slane %v465, 2
        %v475 = vrot.slane %v466, 4
        %v476 = vrot.slane %v466, 6
        %vm477 = vcmask 1041408
        %v480 = vsel %vm477, %v463, %v471
        %vm481 = vcmask 1045508
        %v484 = vsel %vm481, %v472, %v473
        %vm485 = vcmask 1043456
        %v486 = vsel %vm485, %v480, %v484
        %v489 = vsel %vm477, %v465, %v474
        %v492 = vsel %vm481, %v475, %v476
        %v493 = vsel %vm485, %v489, %v492
        %496 = vst [vmem:[%s221] sm:$0xff] %v486
        %497 = vst [vmem:[%s221 + $0x8] sm:$0xff] %v493
        %s498 = smul.u32 8, %s14
        %p499 = scmp.lt.s32.totalorder %s498, 15
        %s500 = scalar_select %p499, %s498, 15
        %s501 = smul.addr %s500, 2
        %s502 = scalar_lea.vmem %s3, %s501
        // Predicated region
        $region56: #{generator3_forward.18} parent=50 // pred_check
          %p503 = pneg %p100
        $region57: #{generator3_forward.18} parent=50 // pred_check_branch
          %505 = sbr.rel (%p503) target = $region59
        $region58: #{generator3_forward.18} parent=50 // pred_region
          %s506 = smul.u32 8, %s14
        $region59: #{generator3_forward.18} parent=50 // pred_fallthru
          _
      $region51: #{generator3_forward.18} parent=5 // pred_fallthru
        _
      %p507 = scmp.le.s32.totalorder 2, %s9
      // Predicated region
      $region60: #{generator3_forward.18} parent=5 // pred_check
        %p508 = pneg %p507
      $region61: #{generator3_forward.18} parent=5 // pred_check_branch
        %510 = sbr.rel (%p508) target = $region63
      $region62: #{generator3_forward.18} parent=5 // pred_region
        %s511 = ssub.s32 %s9, 2
        // Predicated region
        $region64: #{generator3_forward.18} parent=62 // pred_check
          %p512 = pneg %p106
        $region65: #{generator3_forward.18} parent=62 // pred_check_branch
          %514 = sbr.rel (%p512) target = $region67
        $region66: #{generator3_forward.18} parent=62 // pred_region
          %s515 = smul.u32 8, %s15
          %p516 = scmp.lt.s32.totalorder %s515, 15
          %s517 = scalar_select %p516, %s515, 15
          %s518 = smul.addr %s517, 2
          %s519 = scalar_lea.vmem %s3, %s518
        $region67: #{generator3_forward.18} parent=62 // pred_fallthru
          _
      $region63: #{generator3_forward.18} parent=5 // pred_fallthru
        _
    $region6: #{generator3_forward.18} parent=1 // loop_footer
      %s13 = sadd.s32 1, %s9
    $region7: #{generator3_forward.18} parent=1 // loop_footer_branch
      %8 = sbr.rel target = $region3
    $region8: #{generator3_forward.18} parent=1 // loop_exit
      _

// kernel: generator3_forward.19
$region0: #{generator3_forward.19}
  #allocation0 [shape = 'u32[]', space=smem, size = 0x4, offset = 0x4, fixed_abs, tag = 'smem constant byte address 0x4 - core index']
  #allocation1 [shape = 'u32[72,128]{1,0:T(1,128)}', space=vmem, size = 0x9000, scoped, tag = 'internal scratch']
  %s0 = inlined_call_operand.vmem [shape: bf16[4,108], index: 0, kind: input, shape index: {}]
  %s1 = inlined_call_operand.vmem [shape: bf16[108,2048], index: 1, kind: input, shape index: {}]
  %s2 = inlined_call_operand.vmem [shape: f32[4,1], index: 2, kind: input, shape index: {}]
  %s3 = inlined_call_operand.vmem [shape: bf16[4,2048], index: 3, kind: output, shape index: {}]
  %s4 = sld [smem:[#allocation0]]
  $region68: #{generator3_forward.19} parent=0
    _
  %s6 = ssub.s32 1, %s4
  %s7 = scalar_select 0, %s6, %s4
  $region1: #{generator3_forward.19} parent=0
    #allocation2 [shape = 'u8[458752]{0}', space=vmem, size = 0x70000, scoped, tag = 'input window, operand 1']
    loop: start=0, step=1, limit=4
    $region2: #{generator3_forward.19} parent=1 // loop_pre_header
      _
    $region3: #{generator3_forward.19} parent=1 // loop_header
      %s9 = sphi 0, %s13
      %p10 = scmp.ge.s32.totalorder %s9, 4
      %s17 = sphi 0, %s17
      %s19 = sphi 0, %s17
      %s20 = sphi 0, %s19
      %s34 = sphi 0, %s20
      %s40 = sphi 0, %s42
      %s43 = sphi 0, %s40
      %s44 = sphi 0, %s43
      %s60 = sphi 0, %s44
      %s64 = sphi 0, %s64
      %s66 = sphi 0, %s64
      %s67 = sphi 0, %s66
      %s81 = sphi 0, %s67
      %s87 = sphi 0, %s89
      %s90 = sphi 0, %s87
      %s91 = sphi 0, %s90
      %s107 = sphi 0, %s91
    $region4: #{generator3_forward.19} parent=1 // loop_header_branch
      %12 = sbr.rel (%p10) target = $region8
    $region5: #{generator3_forward.19} parent=1 // loop_body
      %s14 = ssub.s32 %s9, 1
      %s15 = ssub.s32 %s9, 2
      %s16 = sadd.s32 %s9, 1
      %s18 = sadd.s32 %s17, 1
      %p21 = scmp.eq.s32.totalorder %s9, 1
      %p22 = scmp.ne.s32.totalorder %s17, %s19
      %p23 = scmp.eq.s32.totalorder %s9, 0
      %p24 = por %p22, %p23
      %p25 = scmp.ne.s32.totalorder %s17, %s19
      %p26 = scmp.eq.s32.totalorder %s14, 1
      %p27 = por %p25, %p26
      %p28 = scmp.ne.s32.totalorder %s19, %s20
      %p29 = scmp.eq.s32.totalorder %s14, 0
      %p30 = por %p28, %p29
      %p31 = scmp.ne.s32.totalorder %s19, %s20
      %p32 = scmp.eq.s32.totalorder %s15, 1
      %p33 = por %p31, %p32
      %p35 = scmp.ne.s32.totalorder %s20, %s34
      %p36 = scmp.eq.s32.totalorder %s15, 0
      %p37 = por %p35, %p36
      %s38 = ssub.s32 %s9, %s16
      %p39 = scmp.eq.s32.totalorder %s38, 0
      %s41 = sadd.s32 %s40, 1
      %s42 = scalar_select %p39, %s40, %s41
      %p45 = pneg %p39
      %p46 = scmp.eq.s32.totalorder %s9, 1
      %p47 = por %p45, %p46
      %p48 = scmp.ne.s32.totalorder %s40, %s43
      %p49 = scmp.eq.s32.totalorder %s9, 0
      %p50 = por %p48, %p49
      %p51 = scmp.ne.s32.totalorder %s40, %s43
      %p52 = scmp.eq.s32.totalorder %s14, 1
      %p53 = por %p51, %p52
      %p54 = scmp.ne.s32.totalorder %s43, %s44
      %p55 = scmp.eq.s32.totalorder %s14, 0
      %p56 = por %p54, %p55
      %p57 = scmp.ne.s32.totalorder %s43, %s44
      %p58 = scmp.eq.s32.totalorder %s15, 1
      %p59 = por %p57, %p58
      %p61 = scmp.ne.s32.totalorder %s44, %s60
      %p62 = scmp.eq.s32.totalorder %s15, 0
      %p63 = por %p61, %p62
      %s65 = sadd.s32 %s64, 1
      %p68 = scmp.eq.s32.totalorder %s9, 1
      %p69 = scmp.ne.s32.totalorder %s64, %s66
      %p70 = scmp.eq.s32.totalorder %s9, 0
      %p71 = por %p69, %p70
      %p72 = scmp.ne.s32.totalorder %s64, %s66
      %p73 = scmp.eq.s32.totalorder %s14, 1
      %p74 = por %p72, %p73
      %p75 = scmp.ne.s32.totalorder %s66, %s67
      %p76 = scmp.eq.s32.totalorder %s14, 0
      %p77 = por %p75, %p76
      %p78 = scmp.ne.s32.totalorder %s66, %s67
      %p79 = scmp.eq.s32.totalorder %s15, 1
      %p80 = por %p78, %p79
      %p82 = scmp.ne.s32.totalorder %s67, %s81
      %p83 = scmp.eq.s32.totalorder %s15, 0
      %p84 = por %p82, %p83
      %s85 = ssub.s32 %s9, %s16
      %p86 = scmp.eq.s32.totalorder %s85, 0
      %s88 = sadd.s32 %s87, 1
      %s89 = scalar_select %p86, %s87, %s88
      %p92 = pneg %p86
      %p93 = scmp.eq.s32.totalorder %s9, 1
      %p94 = por %p92, %p93
      %p95 = scmp.ne.s32.totalorder %s87, %s90
      %p96 = scmp.eq.s32.totalorder %s9, 0
      %p97 = por %p95, %p96
      %p98 = scmp.ne.s32.totalorder %s87, %s90
      %p99 = scmp.eq.s32.totalorder %s14, 1
      %p100 = por %p98, %p99
      %p101 = scmp.ne.s32.totalorder %s90, %s91
      %p102 = scmp.eq.s32.totalorder %s14, 0
      %p103 = por %p101, %p102
      %p104 = scmp.ne.s32.totalorder %s90, %s91
      %p105 = scmp.eq.s32.totalorder %s15, 1
      %p106 = por %p104, %p105
      %p108 = scmp.ne.s32.totalorder %s91, %s107
      %p109 = scmp.eq.s32.totalorder %s15, 0
      %p110 = por %p108, %p109
      %p111 = scmp.le.s32.totalorder 1, %s9
      %p112 = scmp.lt.s32.totalorder %s9, 3
      %p113 = pnand %p111, %p112
      %p114 = pneg %p113
      // Predicated region
      $region9: #{generator3_forward.19} parent=5 // pred_check
        _
      $region10: #{generator3_forward.19} parent=5 // pred_check_branch
        %116 = sbr.rel (%p113) target = $region12
      $region11: #{generator3_forward.19} parent=5 // pred_region
        %s117 = ssub.s32 %s9, 1
        // Predicated region
        $region13: #{generator3_forward.19} parent=11 // pred_check
          %p118 = pneg %p30
        $region14: #{generator3_forward.19} parent=11 // pred_check_branch
          %120 = sbr.rel (%p118) target = $region16
        $region15: #{generator3_forward.19} parent=11 // pred_region
          _
        $region16: #{generator3_forward.19} parent=11 // pred_fallthru
          _
        // Predicated region
        $region17: #{generator3_forward.19} parent=11 // pred_check
          %p121 = pneg %p77
        $region18: #{generator3_forward.19} parent=11 // pred_check_branch
          %123 = sbr.rel (%p121) target = $region20
        $region19: #{generator3_forward.19} parent=11 // pred_region
          _
        $region20: #{generator3_forward.19} parent=11 // pred_fallthru
          _
      $region12: #{generator3_forward.19} parent=5 // pred_fallthru
        _
      %p124 = scmp.lt.s32.totalorder %s9, 2
      // Predicated region
      $region21: #{generator3_forward.19} parent=5 // pred_check
        %p125 = pneg %p124
      $region22: #{generator3_forward.19} parent=5 // pred_check_branch
        %127 = sbr.rel (%p125) target = $region24
      $region23: #{generator3_forward.19} parent=5 // pred_region
        // Predicated region
        $region25: #{generator3_forward.19} parent=23 // pred_check
          %p128 = pneg %p50
        $region26: #{generator3_forward.19} parent=23 // pred_check_branch
          %130 = sbr.rel (%p128) target = $region28
        $region27: #{generator3_forward.19} parent=23 // pred_region
          %s131 = sand.u32 %s40, 1
          %s132 = sand.u32 %s40, 1
          %s133 = smul.addr %s132, 448
          %s134 = scalar_lea.vmem [#allocation2], %s133
          %s135 = smul.u32 8, %s9
          %s136 = smul.addr %s135, 4
          %s137 = scalar_lea.vmem %s1, %s136
          // Predicated region
          $region29: #{generator3_forward.19} parent=27 // pred_check
            _
          $region30: #{generator3_forward.19} parent=27 // pred_check_branch
            %139 = sbr.rel (0) target = $region32
          $region31: #{generator3_forward.19} parent=27 // pred_region
            // Predicated region
            $region33: #{generator3_forward.19} parent=31 // pred_check
              _
            $region34: #{generator3_forward.19} parent=31 // pred_check_branch
              %141 = sbr.rel (0) target = $region36
            $region35: #{generator3_forward.19} parent=31 // pred_region
              loop: start=0, step=1, limit=1
              $region37: #{generator3_forward.19} parent=35 // loop_pre_header
                _
              $region38: #{generator3_forward.19} parent=35 // loop_header
                %s143 = sphi 0, %s147
                %p144 = scmp.ge.s32.totalorder %s143, 1
                %s148 = sphi %s137, %s137
                %s149 = sphi %s134, %s134
              $region39: #{generator3_forward.19} parent=35 // loop_header_branch
                %146 = sbr.rel (%p144) target = $region43
              $region40: #{generator3_forward.19} parent=35 // loop_body
                %v150 = vld [vmem:[%s148] sm:$0xff]
                %151 = vst [vmem:[%s149] sm:$0xff] %v150
                %v152 = vld [vmem:[%s148 + $0x8] sm:$0xff]
                %153 = vst [vmem:[%s149 + $0x8] sm:$0xff] %v152
                %v154 = vld [vmem:[%s148 + $0x10] sm:$0xff]
                %155 = vst [vmem:[%s149 + $0x10] sm:$0xff] %v154
                %v156 = vld [vmem:[%s148 + $0x18] sm:$0xff]
                %157 = vst [vmem:[%s149 + $0x18] sm:$0xff] %v156
                %v158 = vld [vmem:[%s148 + $0x40] sm:$0xff]
                %159 = vst [vmem:[%s149 + $0x20] sm:$0xff] %v158
                %v160 = vld [vmem:[%s148 + $0x48] sm:$0xff]
                %161 = vst [vmem:[%s149 + $0x28] sm:$0xff] %v160
                %v162 = vld [vmem:[%s148 + $0x50] sm:$0xff]
                %163 = vst [vmem:[%s149 + $0x30] sm:$0xff] %v162
                %v164 = vld [vmem:[%s148 + $0x58] sm:$0xff]
                %165 = vst [vmem:[%s149 + $0x38] sm:$0xff] %v164
                %v166 = vld [vmem:[%s148 + $0x80] sm:$0xff]
                %167 = vst [vmem:[%s149 + $0x40] sm:$0xff] %v166
                %v168 = vld [vmem:[%s148 + $0x88] sm:$0xff]
                %169 = vst [vmem:[%s149 + $0x48] sm:$0xff] %v168
                %v170 = vld [vmem:[%s148 + $0x90] sm:$0xff]
                %171 = vst [vmem:[%s149 + $0x50] sm:$0xff] %v170
                %v172 = vld [vmem:[%s148 + $0x98] sm:$0xff]
                %173 = vst [vmem:[%s149 + $0x58] sm:$0xff] %v172
                %v174 = vld [vmem:[%s148 + $0xc0] sm:$0xff]
                %175 = vst [vmem:[%s149 + $0x60] sm:$0xff] %v174
                %v176 = vld [vmem:[%s148 + $0xc8] sm:$0xff]
                %177 = vst [vmem:[%s149 + $0x68] sm:$0xff] %v176
                %v178 = vld [vmem:[%s148 + $0xd0] sm:$0xff]
                %179 = vst [vmem:[%s149 + $0x70] sm:$0xff] %v178
                %v180 = vld [vmem:[%s148 + $0xd8] sm:$0xff]
                %181 = vst [vmem:[%s149 + $0x78] sm:$0xff] %v180
                %v182 = vld [vmem:[%s148 + $0x100] sm:$0xff]
                %183 = vst [vmem:[%s149 + $0x80] sm:$0xff] %v182
                %v184 = vld [vmem:[%s148 + $0x108] sm:$0xff]
                %185 = vst [vmem:[%s149 + $0x88] sm:$0xff] %v184
                %v186 = vld [vmem:[%s148 + $0x110] sm:$0xff]
                %187 = vst [vmem:[%s149 + $0x90] sm:$0xff] %v186
                %v188 = vld [vmem:[%s148 + $0x118] sm:$0xff]
                %189 = vst [vmem:[%s149 + $0x98] sm:$0xff] %v188
                %v190 = vld [vmem:[%s148 + $0x140] sm:$0xff]
                %191 = vst [vmem:[%s149 + $0xa0] sm:$0xff] %v190
                %v192 = vld [vmem:[%s148 + $0x148] sm:$0xff]
                %193 = vst [vmem:[%s149 + $0xa8] sm:$0xff] %v192
                %v194 = vld [vmem:[%s148 + $0x150] sm:$0xff]
                %195 = vst [vmem:[%s149 + $0xb0] sm:$0xff] %v194
                %v196 = vld [vmem:[%s148 + $0x158] sm:$0xff]
                %197 = vst [vmem:[%s149 + $0xb8] sm:$0xff] %v196
                %v198 = vld [vmem:[%s148 + $0x180] sm:$0xff]
                %199 = vst [vmem:[%s149 + $0xc0] sm:$0xff] %v198
                %v200 = vld [vmem:[%s148 + $0x188] sm:$0xff]
                %201 = vst [vmem:[%s149 + $0xc8] sm:$0xff] %v200
                %v202 = vld [vmem:[%s148 + $0x190] sm:$0xff]
                %203 = vst [vmem:[%s149 + $0xd0] sm:$0xff] %v202
                %v204 = vld [vmem:[%s148 + $0x198] sm:$0xff]
                %205 = vst [vmem:[%s149 + $0xd8] sm:$0xff] %v204
                %v206 = vld [vmem:[%s148 + $0x1c0] sm:$0xff]
                %207 = vst [vmem:[%s149 + $0xe0] sm:$0xff] %v206
                %v208 = vld [vmem:[%s148 + $0x1c8] sm:$0xff]
                %209 = vst [vmem:[%s149 + $0xe8] sm:$0xff] %v208
                %v210 = vld [vmem:[%s148 + $0x1d0] sm:$0xff]
                %211 = vst [vmem:[%s149 + $0xf0] sm:$0xff] %v210
                %v212 = vld [vmem:[%s148 + $0x1d8] sm:$0xff]
                %213 = vst [vmem:[%s149 + $0xf8] sm:$0xff] %v212
                %v214 = vld [vmem:[%s148 + $0x200] sm:$0xff]
                %215 = vst [vmem:[%s149 + $0x100] sm:$0xff] %v214
                %v216 = vld [vmem:[%s148 + $0x208] sm:$0xff]
                %217 = vst [vmem:[%s149 + $0x108] sm:$0xff] %v216
                %v218 = vld [vmem:[%s148 + $0x210] sm:$0xff]
                %219 = vst [vmem:[%s149 + $0x110] sm:$0xff] %v218
                %v220 = vld [vmem:[%s148 + $0x218] sm:$0xff]
                %221 = vst [vmem:[%s149 + $0x118] sm:$0xff] %v220
                %v222 = vld [vmem:[%s148 + $0x240] sm:$0xff]
                %223 = vst [vmem:[%s149 + $0x120] sm:$0xff] %v222
                %v224 = vld [vmem:[%s148 + $0x248] sm:$0xff]
                %225 = vst [vmem:[%s149 + $0x128] sm:$0xff] %v224
                %v226 = vld [vmem:[%s148 + $0x250] sm:$0xff]
                %227 = vst [vmem:[%s149 + $0x130] sm:$0xff] %v226
                %v228 = vld [vmem:[%s148 + $0x258] sm:$0xff]
                %229 = vst [vmem:[%s149 + $0x138] sm:$0xff] %v228
                %v230 = vld [vmem:[%s148 + $0x280] sm:$0xff]
                %231 = vst [vmem:[%s149 + $0x140] sm:$0xff] %v230
                %v232 = vld [vmem:[%s148 + $0x288] sm:$0xff]
                %233 = vst [vmem:[%s149 + $0x148] sm:$0xff] %v232
                %v234 = vld [vmem:[%s148 + $0x290] sm:$0xff]
                %235 = vst [vmem:[%s149 + $0x150] sm:$0xff] %v234
                %v236 = vld [vmem:[%s148 + $0x298] sm:$0xff]
                %237 = vst [vmem:[%s149 + $0x158] sm:$0xff] %v236
                %v238 = vld [vmem:[%s148 + $0x2c0] sm:$0xff]
                %239 = vst [vmem:[%s149 + $0x160] sm:$0xff] %v238
                %v240 = vld [vmem:[%s148 + $0x2c8] sm:$0xff]
                %241 = vst [vmem:[%s149 + $0x168] sm:$0xff] %v240
                %v242 = vld [vmem:[%s148 + $0x2d0] sm:$0xff]
                %243 = vst [vmem:[%s149 + $0x170] sm:$0xff] %v242
                %v244 = vld [vmem:[%s148 + $0x2d8] sm:$0xff]
                %245 = vst [vmem:[%s149 + $0x178] sm:$0xff] %v244
                %v246 = vld [vmem:[%s148 + $0x300] sm:$0xff]
                %247 = vst [vmem:[%s149 + $0x180] sm:$0xff] %v246
                %v248 = vld [vmem:[%s148 + $0x308] sm:$0xff]
                %249 = vst [vmem:[%s149 + $0x188] sm:$0xff] %v248
                %v250 = vld [vmem:[%s148 + $0x310] sm:$0xff]
                %251 = vst [vmem:[%s149 + $0x190] sm:$0xff] %v250
                %v252 = vld [vmem:[%s148 + $0x318] sm:$0xff]
                %253 = vst [vmem:[%s149 + $0x198] sm:$0xff] %v252
                %v254 = vld [vmem:[%s148 + $0x340] sm:$0xff]
                %255 = vst [vmem:[%s149 + $0x1a0] sm:$0xff] %v254
                %v256 = vld [vmem:[%s148 + $0x348] sm:$0xff]
                %257 = vst [vmem:[%s149 + $0x1a8] sm:$0xff] %v256
                %v258 = vld [vmem:[%s148 + $0x350] sm:$0xff]
                %259 = vst [vmem:[%s149 + $0x1b0] sm:$0xff] %v258
                %v260 = vld [vmem:[%s148 + $0x358] sm:$0xff]
                %261 = vst [vmem:[%s149 + $0x1b8] sm:$0xff] %v260
              $region41: #{generator3_forward.19} parent=35 // loop_footer
                %s147 = sadd.s32 1, %s143
              $region42: #{generator3_forward.19} parent=35 // loop_footer_branch
                %142 = sbr.rel target = $region38
              $region43: #{generator3_forward.19} parent=35 // loop_exit
                _
            $region36: #{generator3_forward.19} parent=31 // pred_fallthru
              _
            // Predicated region
            $region44: #{generator3_forward.19} parent=31 // pred_check
              _
            $region45: #{generator3_forward.19} parent=31 // pred_check_branch
              %263 = sbr.rel target = $region47
            $region46: #{generator3_forward.19} parent=31 // pred_region
              _
            $region47: #{generator3_forward.19} parent=31 // pred_fallthru
              _
          $region32: #{generator3_forward.19} parent=27 // pred_fallthru
            _
          %264 = vnop
        $region28: #{generator3_forward.19} parent=23 // pred_fallthru
          _
      $region24: #{generator3_forward.19} parent=5 // pred_fallthru
        _
      %p265 = scmp.le.s32.totalorder 1, %s9
      %p266 = scmp.lt.s32.totalorder %s9, 3
      %p267 = pnand %p265, %p266
      %p268 = pneg %p267
      // Predicated region
      $region48: #{generator3_forward.19} parent=5 // pred_check
        _
      $region49: #{generator3_forward.19} parent=5 // pred_check_branch
        %270 = sbr.rel (%p267) target = $region51
      $region50: #{generator3_forward.19} parent=5 // pred_region
        %s271 = ssub.s32 %s9, 1
        %s272 = sand.u32 %s43, 1
        %s273 = sand.u32 %s43, 1
        %s274 = smul.addr %s273, 448
        %s275 = scalar_lea.vmem [#allocation2], %s274
        // Predicated region
        $region52: #{generator3_forward.19} parent=50 // pred_check
          %p276 = pneg %p56
        $region53: #{generator3_forward.19} parent=50 // pred_check_branch
          %278 = sbr.rel (%p276) target = $region55
        $region54: #{generator3_forward.19} parent=50 // pred_region
          _
        $region55: #{generator3_forward.19} parent=50 // pred_fallthru
          _
        %p279 = pneg %p30
        %p280 = pneg %p27
        %s281 = sand.u32 %s43, 1
        %s282 = sand.u32 %s43, 1
        %s283 = smul.addr %s282, 448
        %s284 = scalar_lea.vmem [#allocation2], %s283
        %p285 = pneg %p56
        %p286 = pneg %p53
        %p287 = pneg %p77
        %p288 = pneg %p74
        %p289 = pneg %p103
        %p290 = pneg %p100
        %s291 = smul.u32 8, %s14
        %p292 = scmp.lt.s32.totalorder %s291, 15
        %s293 = scalar_select %p292, %s291, 15
        %s294 = smul.addr %s293, 2
        %s295 = scalar_lea.vmem %s3, %s294
        %s296 = smul.u32 8, %s14
        %s297 = smul.u32 8, %s14
        %p298 = scmp.lt.s32.totalorder %s297, 15
        %s299 = scalar_select %p298, %s297, 15
        %s300 = smul.addr %s299, 2
        %s301 = scalar_lea.vmem %s3, %s300
        %s302 = smul.u32 8, %s14
        %v304 = vld [vmem:[%s0] sm:$0x3]
        %v305 = vld [vmem:[%s275] sm:$0xff]
        %v306 = vld [vmem:[%s275 + $0x8] sm:$0xff]
        %v307 = vld [vmem:[%s275 + $0x10] sm:$0xff]
        %v308 = vld [vmem:[%s275 + $0x18] sm:$0xff]
        %v309 = vld [vmem:[%s275 + $0x20] sm:$0xff]
        %v310 = vld [vmem:[%s275 + $0x28] sm:$0xff]
        %v311 = vld [vmem:[%s275 + $0x30] sm:$0xff]
        %v312 = vld [vmem:[%s275 + $0x38] sm:$0xff]
        %v313 = vld [vmem:[%s275 + $0x40] sm:$0xff]
        %v314 = vld [vmem:[%s275 + $0x48] sm:$0xff]
        %v315 = vld [vmem:[%s275 + $0x50] sm:$0xff]
        %v316 = vld [vmem:[%s275 + $0x58] sm:$0xff]
        %v317 = vld [vmem:[%s275 + $0x60] sm:$0xff]
        %v318 = vld [vmem:[%s275 + $0x68] sm:$0xff]
        %v319 = vld [vmem:[%s275 + $0x70] sm:$0xff]
        %v320 = vld [vmem:[%s275 + $0x78] sm:$0xff]
        %v321 = vld [vmem:[%s275 + $0x80] sm:$0xff]
        %v322 = vld [vmem:[%s275 + $0x88] sm:$0xff]
        %v323 = vld [vmem:[%s275 + $0x90] sm:$0xff]
        %v324 = vld [vmem:[%s275 + $0x98] sm:$0xff]
        %v325 = vld [vmem:[%s275 + $0xa0] sm:$0xff]
        %v326 = vld [vmem:[%s275 + $0xa8] sm:$0xff]
        %v327 = vld [vmem:[%s275 + $0xb0] sm:$0xff]
        %v328 = vld [vmem:[%s275 + $0xb8] sm:$0xff]
        %v329 = vld [vmem:[%s275 + $0xc0] sm:$0xff]
        %v330 = vld [vmem:[%s275 + $0xc8] sm:$0xff]
        %v331 = vld [vmem:[%s275 + $0xd0] sm:$0xff]
        %v332 = vld [vmem:[%s275 + $0xd8] sm:$0xff]
        %v333 = vld [vmem:[%s275 + $0xe0] sm:$0xff]
        %v334 = vld [vmem:[%s275 + $0xe8] sm:$0xff]
        %v335 = vld [vmem:[%s275 + $0xf0] sm:$0xff]
        %v336 = vld [vmem:[%s275 + $0xf8] sm:$0xff]
        %v337 = vld [vmem:[%s275 + $0x100] sm:$0xff]
        %v338 = vld [vmem:[%s275 + $0x108] sm:$0xff]
        %v339 = vld [vmem:[%s275 + $0x110] sm:$0xff]
        %v340 = vld [vmem:[%s275 + $0x118] sm:$0xff]
        %v341 = vld [vmem:[%s275 + $0x120] sm:$0xff]
        %v342 = vld [vmem:[%s275 + $0x128] sm:$0xff]
        %v343 = vld [vmem:[%s275 + $0x130] sm:$0xff]
        %v344 = vld [vmem:[%s275 + $0x138] sm:$0xff]
        %v345 = vld [vmem:[%s275 + $0x140] sm:$0xff]
        %v346 = vld [vmem:[%s275 + $0x148] sm:$0xff]
        %v347 = vld [vmem:[%s275 + $0x150] sm:$0xff]
        %v348 = vld [vmem:[%s275 + $0x158] sm:$0xff]
        %v349 = vld [vmem:[%s275 + $0x160] sm:$0xff]
        %v350 = vld [vmem:[%s275 + $0x168] sm:$0xff]
        %v351 = vld [vmem:[%s275 + $0x170] sm:$0xff]
        %v352 = vld [vmem:[%s275 + $0x178] sm:$0xff]
        %v353 = vld [vmem:[%s275 + $0x180] sm:$0xff]
        %v354 = vld [vmem:[%s275 + $0x188] sm:$0xff]
        %v355 = vld [vmem:[%s275 + $0x190] sm:$0xff]
        %v356 = vld [vmem:[%s275 + $0x198] sm:$0xff]
        %v357 = vld [vmem:[%s275 + $0x1a0] sm:$0x33]
        %v358 = vld [vmem:[%s275 + $0x1a8] sm:$0x33]
        %v359 = vld [vmem:[%s275 + $0x1b0] sm:$0x33]
        %v360 = vld [vmem:[%s275 + $0x1b8] sm:$0x33]
        %v361 = vld [vmem:[%s2] sm:$0xf]
        %363 = vset.pattern.permute.xlu0 0
        %364 = vperm.xlu0 %363, %v361
        %v365 = vpop.permute.xlu0 %364
        %v423 = vunpack.c.l.b16 %v305
        %v424 = vunpack.c.h.b16 %v305
        %v425 = vunpack.c.l.b16 %v306
        %v426 = vunpack.c.h.b16 %v306
        %v427 = vunpack.c.l.b16 %v307
        %v428 = vunpack.c.h.b16 %v307
        %v429 = vunpack.c.l.b16 %v308
        %v430 = vunpack.c.h.b16 %v308
        %v431 = vunpack.c.l.b16 %v309
        %v432 = vunpack.c.h.b16 %v309
        %v433 = vunpack.c.l.b16 %v310
        %v434 = vunpack.c.h.b16 %v310
        %v435 = vunpack.c.l.b16 %v311
        %v436 = vunpack.c.h.b16 %v311
        %v437 = vunpack.c.l.b16 %v312
        %v438 = vunpack.c.h.b16 %v312
        %v439 = vunpack.c.l.b16 %v313
        %v440 = vunpack.c.h.b16 %v313
        %v441 = vunpack.c.l.b16 %v314
        %v442 = vunpack.c.h.b16 %v314
        %v443 = vunpack.c.l.b16 %v315
        %v444 = vunpack.c.h.b16 %v315
        %v445 = vunpack.c.l.b16 %v316
        %v446 = vunpack.c.h.b16 %v316
        %v447 = vunpack.c.l.b16 %v317
        %v448 = vunpack.c.h.b16 %v317
        %v449 = vunpack.c.l.b16 %v318
        %v450 = vunpack.c.h.b16 %v318
        %v451 = vunpack.c.l.b16 %v319
        %v452 = vunpack.c.h.b16 %v319
        %v453 = vunpack.c.l.b16 %v320
        %v454 = vunpack.c.h.b16 %v320
        %v455 = vunpack.c.l.b16 %v321
        %v456 = vunpack.c.h.b16 %v321
        %v457 = vunpack.c.l.b16 %v322
        %v458 = vunpack.c.h.b16 %v322
        %v459 = vunpack.c.l.b16 %v323
        %v460 = vunpack.c.h.b16 %v323
        %v461 = vunpack.c.l.b16 %v324
        %v462 = vunpack.c.h.b16 %v324
        %v463 = vunpack.c.l.b16 %v325
        %v464 = vunpack.c.h.b16 %v325
        %v465 = vunpack.c.l.b16 %v326
        %v466 = vunpack.c.h.b16 %v326
        %v467 = vunpack.c.l.b16 %v327
        %v468 = vunpack.c.h.b16 %v327
        %v469 = vunpack.c.l.b16 %v328
        %v470 = vunpack.c.h.b16 %v328
        %v471 = vunpack.c.l.b16 %v329
        %v472 = vunpack.c.h.b16 %v329
        %v473 = vunpack.c.l.b16 %v330
        %v474 = vunpack.c.h.b16 %v330
        %v475 = vunpack.c.l.b16 %v331
        %v476 = vunpack.c.h.b16 %v331
        %v477 = vunpack.c.l.b16 %v332
        %v478 = vunpack.c.h.b16 %v332
        %v479 = vunpack.c.l.b16 %v333
        %v480 = vunpack.c.h.b16 %v333
        %v481 = vunpack.c.l.b16 %v334
        %v482 = vunpack.c.h.b16 %v334
        %v483 = vunpack.c.l.b16 %v335
        %v484 = vunpack.c.h.b16 %v335
        %v485 = vunpack.c.l.b16 %v336
        %v486 = vunpack.c.h.b16 %v336
        %v487 = vunpack.c.l.b16 %v337
        %v488 = vunpack.c.h.b16 %v337
        %v489 = vunpack.c.l.b16 %v338
        %v490 = vunpack.c.h.b16 %v338
        %v491 = vunpack.c.l.b16 %v339
        %v492 = vunpack.c.h.b16 %v339
        %v493 = vunpack.c.l.b16 %v340
        %v494 = vunpack.c.h.b16 %v340
        %v495 = vunpack.c.l.b16 %v341
        %v496 = vunpack.c.h.b16 %v341
        %v497 = vunpack.c.l.b16 %v342
        %v498 = vunpack.c.h.b16 %v342
        %v499 = vunpack.c.l.b16 %v343
        %v500 = vunpack.c.h.b16 %v343
        %v501 = vunpack.c.l.b16 %v344
        %v502 = vunpack.c.h.b16 %v344
        %v503 = vunpack.c.l.b16 %v345
        %v504 = vunpack.c.h.b16 %v345
        %v505 = vunpack.c.l.b16 %v346
        %v506 = vunpack.c.h.b16 %v346
        %v507 = vunpack.c.l.b16 %v347
        %v508 = vunpack.c.h.b16 %v347
        %v509 = vunpack.c.l.b16 %v348
        %v510 = vunpack.c.h.b16 %v348
        %v511 = vunpack.c.l.b16 %v349
        %v512 = vunpack.c.h.b16 %v349
        %v513 = vunpack.c.l.b16 %v350
        %v514 = vunpack.c.h.b16 %v350
        %v515 = vunpack.c.l.b16 %v351
        %v516 = vunpack.c.h.b16 %v351
        %v517 = vunpack.c.l.b16 %v352
        %v518 = vunpack.c.h.b16 %v352
        %v519 = vunpack.c.l.b16 %v353
        %v520 = vunpack.c.h.b16 %v353
        %v521 = vunpack.c.l.b16 %v354
        %v522 = vunpack.c.h.b16 %v354
        %v523 = vunpack.c.l.b16 %v355
        %v524 = vunpack.c.h.b16 %v355
        %v525 = vunpack.c.l.b16 %v356
        %v526 = vunpack.c.h.b16 %v356
        %v527 = vunpack.c.l.b16 %v357
        %v528 = vunpack.c.h.b16 %v357
        %v529 = vunpack.c.l.b16 %v358
        %v530 = vunpack.c.h.b16 %v358
        %v531 = vunpack.c.l.b16 %v359
        %v532 = vunpack.c.h.b16 %v359
        %v533 = vunpack.c.l.b16 %v360
        %v534 = vunpack.c.h.b16 %v360
        %v535 = vpack.c.b16 %v431, %v423
        %v536 = vpack.c.b16 %v432, %v424
        %v537 = vpack.c.b16 %v433, %v425
        %v538 = vpack.c.b16 %v434, %v426
        %v539 = vpack.c.b16 %v435, %v427
        %v540 = vpack.c.b16 %v436, %v428
        %v541 = vpack.c.b16 %v437, %v429
        %v542 = vpack.c.b16 %v438, %v430
        %v543 = vpack.c.b16 %v447, %v439
        %v544 = vpack.c.b16 %v448, %v440
        %v545 = vpack.c.b16 %v449, %v441
        %v546 = vpack.c.b16 %v450, %v442
        %v547 = vpack.c.b16 %v451, %v443
        %v548 = vpack.c.b16 %v452, %v444
        %v549 = vpack.c.b16 %v453, %v445
        %v550 = vpack.c.b16 %v454, %v446
        %v551 = vpack.c.b16 %v463, %v455
        %v552 = vpack.c.b16 %v464, %v456
        %v553 = vpack.c.b16 %v465, %v457
        %v554 = vpack.c.b16 %v466, %v458
        %v555 = vpack.c.b16 %v467, %v459
        %v556 = vpack.c.b16 %v468, %v460
        %v557 = vpack.c.b16 %v469, %v461
        %v558 = vpack.c.b16 %v470, %v462
        %v559 = vpack.c.b16 %v479, %v471
        %v560 = vpack.c.b16 %v480, %v472
        %v561 = vpack.c.b16 %v481, %v473
        %v562 = vpack.c.b16 %v482, %v474
        %v563 = vpack.c.b16 %v483, %v475
        %v564 = vpack.c.b16 %v484, %v476
        %v565 = vpack.c.b16 %v485, %v477
        %v566 = vpack.c.b16 %v486, %v478
        %v567 = vpack.c.b16 %v495, %v487
        %v568 = vpack.c.b16 %v496, %v488
        %v569 = vpack.c.b16 %v497, %v489
        %v570 = vpack.c.b16 %v498, %v490
        %v571 = vpack.c.b16 %v499, %v491
        %v572 = vpack.c.b16 %v500, %v492
        %v573 = vpack.c.b16 %v501, %v493
        %v574 = vpack.c.b16 %v502, %v494
        %v575 = vpack.c.b16 %v511, %v503
        %v576 = vpack.c.b16 %v512, %v504
        %v577 = vpack.c.b16 %v513, %v505
        %v578 = vpack.c.b16 %v514, %v506
        %v579 = vpack.c.b16 %v515, %v507
        %v580 = vpack.c.b16 %v516, %v508
        %v581 = vpack.c.b16 %v517, %v509
        %v582 = vpack.c.b16 %v518, %v510
        %v583 = vpack.c.b16 %v527, %v519
        %v584 = vpack.c.b16 %v528, %v520
        %v585 = vpack.c.b16 %v529, %v521
        %v586 = vpack.c.b16 %v530, %v522
        %v587 = vpack.c.b16 %v531, %v523
        %v588 = vpack.c.b16 %v532, %v524
        %v589 = vpack.c.b16 %v533, %v525
        %v590 = vpack.c.b16 %v534, %v526
        %vm639 = vcmask 883712
        %v641 = vsel %vm639, %v304, 0
        %vm643 = vcmask 1045504
        %v645 = vsel %vm643, %v583, 0
        %v648 = vsel %vm643, %v584, 0
        %v651 = vsel %vm643, %v585, 0
        %v654 = vsel %vm643, %v586, 0
        %v657 = vsel %vm643, %v587, 0
        %v660 = vsel %vm643, %v588, 0
        %v663 = vsel %vm643, %v589, 0
        %v666 = vsel %vm643, %v590, 0
        %668 = vmatpush.bf16.msra.mxu0 0
        %669 = vmatpush.bf16.msra.mxu0 %v645
        %670 = vmatpush.bf16.msra.mxu0 %v575
        %671 = vmatpush.bf16.msra.mxu0 %v567
        %672 = vmatpush.bf16.msra.mxu0 %v559
        %673 = vmatpush.bf16.msra.mxu0 %v551
        %674 = vmatpush.bf16.msra.mxu0 %v543
        %675 = vmatpush.bf16.msra.mxu0 %v535
        %676 = vmatmul.bf16.gmra.mxu0 %v641
        %v677 = vpop.f32.mrf.mxu0
        %v678 = vadd.f32 %v365, %v677
        %v679 = vpop.f32.mrf.mxu0
        %680 = vdwg.mxu0
        %681 = vmatpush.bf16.msra.mxu0 0
        %682 = vmatpush.bf16.msra.mxu0 %v648
        %683 = vmatpush.bf16.msra.mxu0 %v576
        %684 = vmatpush.bf16.msra.mxu0 %v568
        %685 = vmatpush.bf16.msra.mxu0 %v560
        %686 = vmatpush.bf16.msra.mxu0 %v552
        %687 = vmatpush.bf16.msra.mxu0 %v544
        %688 = vmatpush.bf16.msra.mxu0 %v536
        %689 = vmatmul.bf16.gmra.mxu0 %v641
        %v690 = vpop.f32.mrf.mxu0
        %v691 = vadd.f32 %v365, %v690
        %v692 = vpop.f32.mrf.mxu0
        %693 = vdwg.mxu0
        %694 = vmatpush.bf16.msra.mxu0 0
        %695 = vmatpush.bf16.msra.mxu0 %v651
        %696 = vmatpush.bf16.msra.mxu0 %v577
        %697 = vmatpush.bf16.msra.mxu0 %v569
        %698 = vmatpush.bf16.msra.mxu0 %v561
        %699 = vmatpush.bf16.msra.mxu0 %v553
        %700 = vmatpush.bf16.msra.mxu0 %v545
        %701 = vmatpush.bf16.msra.mxu0 %v537
        %702 = vmatmul.bf16.gmra.mxu0 %v641
        %v703 = vpop.f32.mrf.mxu0
        %v704 = vadd.f32 %v365, %v703
        %v705 = vpop.f32.mrf.mxu0
        %706 = vdwg.mxu0
        %707 = vmatpush.bf16.msra.mxu0 0
        %708 = vmatpush.bf16.msra.mxu0 %v654
        %709 = vmatpush.bf16.msra.mxu0 %v578
        %710 = vmatpush.bf16.msra.mxu0 %v570
        %711 = vmatpush.bf16.msra.mxu0 %v562
        %712 = vmatpush.bf16.msra.mxu0 %v554
        %713 = vmatpush.bf16.msra.mxu0 %v546
        %714 = vmatpush.bf16.msra.mxu0 %v538
        %715 = vmatmul.bf16.gmra.mxu0 %v641
        %v716 = vpop.f32.mrf.mxu0
        %v717 = vadd.f32 %v365, %v716
        %v718 = vpop.f32.mrf.mxu0
        %719 = vdwg.mxu0
        %720 = vmatpush.bf16.msra.mxu0 0
        %721 = vmatpush.bf16.msra.mxu0 %v657
        %722 = vmatpush.bf16.msra.mxu0 %v579
        %723 = vmatpush.bf16.msra.mxu0 %v571
        %724 = vmatpush.bf16.msra.mxu0 %v563
        %725 = vmatpush.bf16.msra.mxu0 %v555
        %726 = vmatpush.bf16.msra.mxu0 %v547
        %727 = vmatpush.bf16.msra.mxu0 %v539
        %728 = vmatmul.bf16.gmra.mxu0 %v641
        %v729 = vpop.f32.mrf.mxu0
        %v730 = vadd.f32 %v365, %v729
        %v731 = vpop.f32.mrf.mxu0
        %732 = vdwg.mxu0
        %733 = vmatpush.bf16.msra.mxu0 0
        %734 = vmatpush.bf16.msra.mxu0 %v660
        %735 = vmatpush.bf16.msra.mxu0 %v580
        %736 = vmatpush.bf16.msra.mxu0 %v572
        %737 = vmatpush.bf16.msra.mxu0 %v564
        %738 = vmatpush.bf16.msra.mxu0 %v556
        %739 = vmatpush.bf16.msra.mxu0 %v548
        %740 = vmatpush.bf16.msra.mxu0 %v540
        %741 = vmatmul.bf16.gmra.mxu0 %v641
        %v742 = vpop.f32.mrf.mxu0
        %v743 = vadd.f32 %v365, %v742
        %v744 = vpop.f32.mrf.mxu0
        %745 = vdwg.mxu0
        %746 = vmatpush.bf16.msra.mxu0 0
        %747 = vmatpush.bf16.msra.mxu0 %v663
        %748 = vmatpush.bf16.msra.mxu0 %v581
        %749 = vmatpush.bf16.msra.mxu0 %v573
        %750 = vmatpush.bf16.msra.mxu0 %v565
        %751 = vmatpush.bf16.msra.mxu0 %v557
        %752 = vmatpush.bf16.msra.mxu0 %v549
        %753 = vmatpush.bf16.msra.mxu0 %v541
        %754 = vmatmul.bf16.gmra.mxu0 %v641
        %v755 = vpop.f32.mrf.mxu0
        %v756 = vadd.f32 %v365, %v755
        %v757 = vpop.f32.mrf.mxu0
        %758 = vdwg.mxu0
        %759 = vmatpush.bf16.msra.mxu0 0
        %760 = vmatpush.bf16.msra.mxu0 %v666
        %761 = vmatpush.bf16.msra.mxu0 %v582
        %762 = vmatpush.bf16.msra.mxu0 %v574
        %763 = vmatpush.bf16.msra.mxu0 %v566
        %764 = vmatpush.bf16.msra.mxu0 %v558
        %765 = vmatpush.bf16.msra.mxu0 %v550
        %766 = vmatpush.bf16.msra.mxu0 %v542
        %767 = vmatmul.bf16.gmra.mxu0 %v641
        %v768 = vpop.f32.mrf.mxu0
        %v769 = vadd.f32 %v365, %v768
        %v770 = vpop.f32.mrf.mxu0
        %771 = vdwg.mxu0
        %v772 = vmax.f32 %v678, 0.0
        %v773 = vmax.f32 %v691, 0.0
        %v774 = vmax.f32 %v704, 0.0
        %v775 = vmax.f32 %v717, 0.0
        %v776 = vmax.f32 %v730, 0.0
        %v777 = vmax.f32 %v743, 0.0
        %v778 = vmax.f32 %v756, 0.0
        %v779 = vmax.f32 %v769, 0.0
        %v780 = vpack.c.bf16 %v773, %v772
        %v781 = vpack.c.bf16 %v775, %v774
        %v782 = vpack.c.bf16 %v777, %v776
        %v783 = vpack.c.bf16 %v779, %v778
        %v788 = vrot.slane %v780, 2
        %v789 = vrot.slane %v781, 4
        %v790 = vrot.slane %v781, 6
        %v791 = vrot.slane %v782, 2
        %v792 = vrot.slane %v783, 4
        %v793 = vrot.slane %v783, 6
        %vm794 = vcmask 1041408
        %v797 = vsel %vm794, %v780, %v788
        %vm798 = vcmask 1045508
        %v801 = vsel %vm798, %v789, %v790
        %vm802 = vcmask 1043456
        %v803 = vsel %vm802, %v797, %v801
        %v806 = vsel %vm794, %v782, %v791
        %v809 = vsel %vm798, %v792, %v793
        %v810 = vsel %vm802, %v806, %v809
        %813 = vst [vmem:[%s301] sm:$0xff] %v803
        %814 = vst [vmem:[%s301 + $0x8] sm:$0xff] %v810
        %s815 = smul.u32 8, %s14
        %p816 = scmp.lt.s32.totalorder %s815, 15
        %s817 = scalar_select %p816, %s815, 15
        %s818 = smul.addr %s817, 2
        %s819 = scalar_lea.vmem %s3, %s818
        // Predicated region
        $region56: #{generator3_forward.19} parent=50 // pred_check
          %p820 = pneg %p100
        $region57: #{generator3_forward.19} parent=50 // pred_check_branch
          %822 = sbr.rel (%p820) target = $region59
        $region58: #{generator3_forward.19} parent=50 // pred_region
          %s823 = smul.u32 8, %s14
        $region59: #{generator3_forward.19} parent=50 // pred_fallthru
          _
      $region51: #{generator3_forward.19} parent=5 // pred_fallthru
        _
      %p824 = scmp.le.s32.totalorder 2, %s9
      // Predicated region
      $region60: #{generator3_forward.19} parent=5 // pred_check
        %p825 = pneg %p824
      $region61: #{generator3_forward.19} parent=5 // pred_check_branch
        %827 = sbr.rel (%p825) target = $region63
      $region62: #{generator3_forward.19} parent=5 // pred_region
        %s828 = ssub.s32 %s9, 2
        // Predicated region
        $region64: #{generator3_forward.19} parent=62 // pred_check
          %p829 = pneg %p106
        $region65: #{generator3_forward.19} parent=62 // pred_check_branch
          %831 = sbr.rel (%p829) target = $region67
        $region66: #{generator3_forward.19} parent=62 // pred_region
          %s832 = smul.u32 8, %s15
          %p833 = scmp.lt.s32.totalorder %s832, 15
          %s834 = scalar_select %p833, %s832, 15
          %s835 = smul.addr %s834, 2
          %s836 = scalar_lea.vmem %s3, %s835
        $region67: #{generator3_forward.19} parent=62 // pred_fallthru
          _
      $region63: #{generator3_forward.19} parent=5 // pred_fallthru
        _
    $region6: #{generator3_forward.19} parent=1 // loop_footer
      %s13 = sadd.s32 1, %s9
    $region7: #{generator3_forward.19} parent=1 // loop_footer_branch
      %8 = sbr.rel target = $region3
    $region8: #{generator3_forward.19} parent=1 // loop_exit
      _

// kernel: generator3_forward.32
$region0: #{generator3_forward.32}
  #allocation0 [shape = 'u32[]', space=smem, size = 0x4, offset = 0x4, fixed_abs, tag = 'smem constant byte address 0x4 - core index']
  #allocation1 [shape = 'u32[72,128]{1,0:T(1,128)}', space=vmem, size = 0x9000, scoped, tag = 'internal scratch']
  %s0 = inlined_call_operand.vmem [shape: bf16[4,16,128], index: 0, kind: input, shape index: {}]
  %s1 = inlined_call_operand.vmem [shape: bf16[16,128], index: 1, kind: output, shape index: {}]
  %s2 = sld [smem:[#allocation0]]
  $region14: #{generator3_forward.32} parent=0
    _
  %s4 = ssub.s32 1, %s2
  %s5 = scalar_select 0, %s4, %s2
  // Predicated region
  $region2: #{generator3_forward.32} parent=0 // pred_check
    _
  $region3: #{generator3_forward.32} parent=0 // pred_check_branch
    %7 = sbr.rel (0) target = $region5
  $region4: #{generator3_forward.32} parent=0 // pred_region
    _
  $region5: #{generator3_forward.32} parent=0 // pred_fallthru
    _
  %v8 = vld [vmem:[%s0] sm:$0xf]
  %v9 = vld [vmem:[%s0 + $0x4] sm:$0xf]
  %s10 = scalar_lea.vmem %s0, 8
  %v11 = vld [vmem:[%s10] sm:$0xf]
  %v12 = vld [vmem:[%s10 + $0x4] sm:$0xf]
  %v13 = vunpack.c.l.bf16 %v8
  %v14 = vunpack.c.l.bf16 %v9
  %v15 = vunpack.c.l.bf16 %v11
  %v16 = vunpack.c.l.bf16 %v12
  %v17 = vmax.f32 %v13, %v15
  %v18 = vmax.f32 %v14, %v16
  %v19 = vpack.c.bf16 %v17, %v17
  %v20 = vpack.c.bf16 %v18, %v18
  %s21 = scalar_lea.vmem %s0, 16
  %v22 = vld [vmem:[%s21] sm:$0xf]
  %v23 = vld [vmem:[%s21 + $0x4] sm:$0xf]
  %v24 = vunpack.c.l.bf16 %v19
  %v25 = vunpack.c.l.bf16 %v20
  %v26 = vunpack.c.l.bf16 %v22
  %v27 = vunpack.c.l.bf16 %v23
  %v28 = vmax.f32 %v24, %v26
  %v29 = vmax.f32 %v25, %v27
  %v30 = vpack.c.bf16 %v28, %v28
  %v31 = vpack.c.bf16 %v29, %v29
  %s32 = scalar_lea.vmem %s0, 24
  %v33 = vld [vmem:[%s32] sm:$0xf]
  %v34 = vld [vmem:[%s32 + $0x4] sm:$0xf]
  %v35 = vunpack.c.l.bf16 %v30
  %v36 = vunpack.c.l.bf16 %v31
  %v37 = vunpack.c.l.bf16 %v33
  %v38 = vunpack.c.l.bf16 %v34
  %v39 = vmax.f32 %v35, %v37
  %v40 = vmax.f32 %v36, %v38
  %v41 = vpack.c.bf16 %v39, %v39
  %v42 = vpack.c.bf16 %v40, %v40
  %43 = vst [vmem:[%s1] sm:$0xf] %v41
  %44 = vst [vmem:[%s1 + $0x4] sm:$0xf] %v42
  // Predicated region
  $region6: #{generator3_forward.32} parent=0 // pred_check
    _
  $region7: #{generator3_forward.32} parent=0 // pred_check_branch
    %46 = sbr.rel (0) target = $region9
  $region8: #{generator3_forward.32} parent=0 // pred_region
    _
  $region9: #{generator3_forward.32} parent=0 // pred_fallthru
    _
  // Predicated region
  $region10: #{generator3_forward.32} parent=0 // pred_check
    _
  $region11: #{generator3_forward.32} parent=0 // pred_check_branch
    %48 = sbr.rel (0) target = $region13
  $region12: #{generator3_forward.32} parent=0 // pred_region
    _
  $region13: #{generator3_forward.32} parent=0 // pred_fallthru
    _

// kernel: generator3_forward.20
$region0: #{generator3_forward.20}
  #allocation0 [shape = 'u32[]', space=smem, size = 0x4, offset = 0x4, fixed_abs, tag = 'smem constant byte address 0x4 - core index']
  #allocation1 [shape = 'u32[72,128]{1,0:T(1,128)}', space=vmem, size = 0x9000, scoped, tag = 'internal scratch']
  %s0 = inlined_call_operand.vmem [shape: bf16[8,108], index: 0, kind: input, shape index: {}]
  %s1 = inlined_call_operand.vmem [shape: bf16[108,512], index: 1, kind: input, shape index: {}]
  %s2 = inlined_call_operand.vmem [shape: f32[8,1], index: 2, kind: input, shape index: {}]
  %s3 = inlined_call_operand.vmem [shape: bf16[8,512], index: 3, kind: output, shape index: {}]
  %s4 = sld [smem:[#allocation0]]
  $region22: #{generator3_forward.20} parent=0
    _
  %s6 = ssub.s32 1, %s4
  %s7 = scalar_select 0, %s6, %s4
  // Predicated region
  $region2: #{generator3_forward.20} parent=0 // pred_check
    _
  $region3: #{generator3_forward.20} parent=0 // pred_check_branch
    %9 = sbr.rel (0) target = $region5
  $region4: #{generator3_forward.20} parent=0 // pred_region
    _
  $region5: #{generator3_forward.20} parent=0 // pred_fallthru
    _
  // Predicated region
  $region6: #{generator3_forward.20} parent=0 // pred_check
    _
  $region7: #{generator3_forward.20} parent=0 // pred_check_branch
    %11 = sbr.rel (0) target = $region9
  $region8: #{generator3_forward.20} parent=0 // pred_region
    _
  $region9: #{generator3_forward.20} parent=0 // pred_fallthru
    _
  // Predicated region
  $region10: #{generator3_forward.20} parent=0 // pred_check
    _
  $region11: #{generator3_forward.20} parent=0 // pred_check_branch
    %13 = sbr.rel (0) target = $region13
  $region12: #{generator3_forward.20} parent=0 // pred_region
    _
  $region13: #{generator3_forward.20} parent=0 // pred_fallthru
    _
  %v15 = vld [vmem:[%s0] sm:$0xf]
  %v16 = vld [vmem:[%s1] sm:$0xff]
  %v17 = vld [vmem:[%s1 + $0x8] sm:$0xff]
  %v18 = vld [vmem:[%s1 + $0x10] sm:$0xff]
  %v19 = vld [vmem:[%s1 + $0x18] sm:$0xff]
  %v20 = vld [vmem:[%s1 + $0x20] sm:$0xff]
  %v21 = vld [vmem:[%s1 + $0x28] sm:$0xff]
  %v22 = vld [vmem:[%s1 + $0x30] sm:$0xff]
  %v23 = vld [vmem:[%s1 + $0x38] sm:$0xff]
  %v24 = vld [vmem:[%s1 + $0x40] sm:$0xff]
  %v25 = vld [vmem:[%s1 + $0x48] sm:$0xff]
  %v26 = vld [vmem:[%s1 + $0x50] sm:$0xff]
  %v27 = vld [vmem:[%s1 + $0x58] sm:$0xff]
  %v28 = vld [vmem:[%s1 + $0x60] sm:$0xff]
  %v29 = vld [vmem:[%s1 + $0x68] sm:$0xff]
  %v30 = vld [vmem:[%s1 + $0x70] sm:$0xff]
  %v31 = vld [vmem:[%s1 + $0x78] sm:$0xff]
  %v32 = vld [vmem:[%s1 + $0x80] sm:$0xff]
  %v33 = vld [vmem:[%s1 + $0x88] sm:$0xff]
  %v34 = vld [vmem:[%s1 + $0x90] sm:$0xff]
  %v35 = vld [vmem:[%s1 + $0x98] sm:$0xff]
  %v36 = vld [vmem:[%s1 + $0xa0] sm:$0xff]
  %v37 = vld [vmem:[%s1 + $0xa8] sm:$0xff]
  %v38 = vld [vmem:[%s1 + $0xb0] sm:$0xff]
  %v39 = vld [vmem:[%s1 + $0xb8] sm:$0xff]
  %v40 = vld [vmem:[%s1 + $0xc0] sm:$0xff]
  %v41 = vld [vmem:[%s1 + $0xc8] sm:$0xff]
  %v42 = vld [vmem:[%s1 + $0xd0] sm:$0x33]
  %v43 = vld [vmem:[%s1 + $0xd8] sm:$0x33]
  %v44 = vld [vmem:[%s2] sm:$0xff]
  %46 = vset.pattern.permute.xlu0 0
  %47 = vperm.xlu0 %46, %v44
  %v48 = vpop.permute.xlu0 %47
  %v78 = vunpack.c.l.b16 %v16
  %v79 = vunpack.c.h.b16 %v16
  %v80 = vunpack.c.l.b16 %v17
  %v81 = vunpack.c.h.b16 %v17
  %v82 = vunpack.c.l.b16 %v18
  %v83 = vunpack.c.h.b16 %v18
  %v84 = vunpack.c.l.b16 %v19
  %v85 = vunpack.c.h.b16 %v19
  %v86 = vunpack.c.l.b16 %v20
  %v87 = vunpack.c.h.b16 %v20
  %v88 = vunpack.c.l.b16 %v21
  %v89 = vunpack.c.h.b16 %v21
  %v90 = vunpack.c.l.b16 %v22
  %v91 = vunpack.c.h.b16 %v22
  %v92 = vunpack.c.l.b16 %v23
  %v93 = vunpack.c.h.b16 %v23
  %v94 = vunpack.c.l.b16 %v24
  %v95 = vunpack.c.h.b16 %v24
  %v96 = vunpack.c.l.b16 %v25
  %v97 = vunpack.c.h.b16 %v25
  %v98 = vunpack.c.l.b16 %v26
  %v99 = vunpack.c.h.b16 %v26
  %v100 = vunpack.c.l.b16 %v27
  %v101 = vunpack.c.h.b16 %v27
  %v102 = vunpack.c.l.b16 %v28
  %v103 = vunpack.c.h.b16 %v28
  %v104 = vunpack.c.l.b16 %v29
  %v105 = vunpack.c.h.b16 %v29
  %v106 = vunpack.c.l.b16 %v30
  %v107 = vunpack.c.h.b16 %v30
  %v108 = vunpack.c.l.b16 %v31
  %v109 = vunpack.c.h.b16 %v31
  %v110 = vunpack.c.l.b16 %v32
  %v111 = vunpack.c.h.b16 %v32
  %v112 = vunpack.c.l.b16 %v33
  %v113 = vunpack.c.h.b16 %v33
  %v114 = vunpack.c.l.b16 %v34
  %v115 = vunpack.c.h.b16 %v34
  %v116 = vunpack.c.l.b16 %v35
  %v117 = vunpack.c.h.b16 %v35
  %v118 = vunpack.c.l.b16 %v36
  %v119 = vunpack.c.h.b16 %v36
  %v120 = vunpack.c.l.b16 %v37
  %v121 = vunpack.c.h.b16 %v37
  %v122 = vunpack.c.l.b16 %v38
  %v123 = vunpack.c.h.b16 %v38
  %v124 = vunpack.c.l.b16 %v39
  %v125 = vunpack.c.h.b16 %v39
  %v126 = vunpack.c.l.b16 %v40
  %v127 = vunpack.c.h.b16 %v40
  %v128 = vunpack.c.l.b16 %v41
  %v129 = vunpack.c.h.b16 %v41
  %v130 = vunpack.c.l.b16 %v42
  %v131 = vunpack.c.h.b16 %v42
  %v132 = vunpack.c.l.b16 %v43
  %v133 = vunpack.c.h.b16 %v43
  %v134 = vpack.c.b16 %v82, %v78
  %v135 = vpack.c.b16 %v83, %v79
  %v136 = vpack.c.b16 %v84, %v80
  %v137 = vpack.c.b16 %v85, %v81
  %v138 = vpack.c.b16 %v90, %v86
  %v139 = vpack.c.b16 %v91, %v87
  %v140 = vpack.c.b16 %v92, %v88
  %v141 = vpack.c.b16 %v93, %v89
  %v142 = vpack.c.b16 %v98, %v94
  %v143 = vpack.c.b16 %v99, %v95
  %v144 = vpack.c.b16 %v100, %v96
  %v145 = vpack.c.b16 %v101, %v97
  %v146 = vpack.c.b16 %v106, %v102
  %v147 = vpack.c.b16 %v107, %v103
  %v148 = vpack.c.b16 %v108, %v104
  %v149 = vpack.c.b16 %v109, %v105
  %v150 = vpack.c.b16 %v114, %v110
  %v151 = vpack.c.b16 %v115, %v111
  %v152 = vpack.c.b16 %v116, %v112
  %v153 = vpack.c.b16 %v117, %v113
  %v154 = vpack.c.b16 %v122, %v118
  %v155 = vpack.c.b16 %v123, %v119
  %v156 = vpack.c.b16 %v124, %v120
  %v157 = vpack.c.b16 %v125, %v121
  %v158 = vpack.c.b16 %v130, %v126
  %v159 = vpack.c.b16 %v131, %v127
  %v160 = vpack.c.b16 %v132, %v128
  %v161 = vpack.c.b16 %v133, %v129
  %vm186 = vcmask 883712
  %v188 = vsel %vm186, %v15, 0
  %vm190 = vcmask 1045504
  %v192 = vsel %vm190, %v158, 0
  %v195 = vsel %vm190, %v159, 0
  %v198 = vsel %vm190, %v160, 0
  %v201 = vsel %vm190, %v161, 0
  %203 = vmatpush.bf16.msra.mxu0 0
  %204 = vmatpush.bf16.msra.mxu0 %v192
  %205 = vmatpush.bf16.msra.mxu0 %v154
  %206 = vmatpush.bf16.msra.mxu0 %v150
  %207 = vmatpush.bf16.msra.mxu0 %v146
  %208 = vmatpush.bf16.msra.mxu0 %v142
  %209 = vmatpush.bf16.msra.mxu0 %v138
  %210 = vmatpush.bf16.msra.mxu0 %v134
  %211 = vmatmul.bf16.gmra.mxu0 %v188
  %v212 = vpop.f32.mrf.mxu0
  %v213 = vadd.f32 %v48, %v212
  %v214 = vpop.f32.mrf.mxu0
  %215 = vdwg.mxu0
  %216 = vmatpush.bf16.msra.mxu0 0
  %217 = vmatpush.bf16.msra.mxu0 %v195
  %218 = vmatpush.bf16.msra.mxu0 %v155
  %219 = vmatpush.bf16.msra.mxu0 %v151
  %220 = vmatpush.bf16.msra.mxu0 %v147
  %221 = vmatpush.bf16.msra.mxu0 %v143
  %222 = vmatpush.bf16.msra.mxu0 %v139
  %223 = vmatpush.bf16.msra.mxu0 %v135
  %224 = vmatmul.bf16.gmra.mxu0 %v188
  %v225 = vpop.f32.mrf.mxu0
  %v226 = vadd.f32 %v48, %v225
  %v227 = vpop.f32.mrf.mxu0
  %228 = vdwg.mxu0
  %229 = vmatpush.bf16.msra.mxu0 0
  %230 = vmatpush.bf16.msra.mxu0 %v198
  %231 = vmatpush.bf16.msra.mxu0 %v156
  %232 = vmatpush.bf16.msra.mxu0 %v152
  %233 = vmatpush.bf16.msra.mxu0 %v148
  %234 = vmatpush.bf16.msra.mxu0 %v144
  %235 = vmatpush.bf16.msra.mxu0 %v140
  %236 = vmatpush.bf16.msra.mxu0 %v136
  %237 = vmatmul.bf16.gmra.mxu0 %v188
  %v238 = vpop.f32.mrf.mxu0
  %v239 = vadd.f32 %v48, %v238
  %v240 = vpop.f32.mrf.mxu0
  %241 = vdwg.mxu0
  %242 = vmatpush.bf16.msra.mxu0 0
  %243 = vmatpush.bf16.msra.mxu0 %v201
  %244 = vmatpush.bf16.msra.mxu0 %v157
  %245 = vmatpush.bf16.msra.mxu0 %v153
  %246 = vmatpush.bf16.msra.mxu0 %v149
  %247 = vmatpush.bf16.msra.mxu0 %v145
  %248 = vmatpush.bf16.msra.mxu0 %v141
  %249 = vmatpush.bf16.msra.mxu0 %v137
  %250 = vmatmul.bf16.gmra.mxu0 %v188
  %v251 = vpop.f32.mrf.mxu0
  %v252 = vadd.f32 %v48, %v251
  %v253 = vpop.f32.mrf.mxu0
  %254 = vdwg.mxu0
  %v255 = vmax.f32 %v213, 0.0
  %v256 = vmax.f32 %v226, 0.0
  %v257 = vmax.f32 %v239, 0.0
  %v258 = vmax.f32 %v252, 0.0
  %v259 = vpack.c.bf16 %v256, %v255
  %v260 = vpack.c.bf16 %v258, %v257
  %261 = vst [vmem:[%s3] sm:$0xff] %v259
  %262 = vst [vmem:[%s3 + $0x8] sm:$0xff] %v260
  // Predicated region
  $region14: #{generator3_forward.20} parent=0 // pred_check
    _
  $region15: #{generator3_forward.20} parent=0 // pred_check_branch
    %264 = sbr.rel (0) target = $region17
  $region16: #{generator3_forward.20} parent=0 // pred_region
    _
  $region17: #{generator3_forward.20} parent=0 // pred_fallthru
    _
  // Predicated region
  $region18: #{generator3_forward.20} parent=0 // pred_check
    _
  $region19: #{generator3_forward.20} parent=0 // pred_check_branch
    %266 = sbr.rel (0) target = $region21
  $region20: #{generator3_forward.20} parent=0 // pred_region
    _
  $region21: #{generator3_forward.20} parent=0 // pred_fallthru
    _

// kernel: generator3_forward.21
$region0: #{generator3_forward.21}
  #allocation0 [shape = 'u32[]', space=smem, size = 0x4, offset = 0x4, fixed_abs, tag = 'smem constant byte address 0x4 - core index']
  #allocation1 [shape = 'u32[72,128]{1,0:T(1,128)}', space=vmem, size = 0x9000, scoped, tag = 'internal scratch']
  %s0 = inlined_call_operand.vmem [shape: bf16[8,216], index: 0, kind: input, shape index: {}]
  %s1 = inlined_call_operand.vmem [shape: bf16[216,512], index: 1, kind: input, shape index: {}]
  %s2 = inlined_call_operand.vmem [shape: f32[8,1], index: 2, kind: input, shape index: {}]
  %s3 = inlined_call_operand.vmem [shape: bf16[8,512], index: 3, kind: output, shape index: {}]
  %s4 = sld [smem:[#allocation0]]
  $region22: #{generator3_forward.21} parent=0
    _
  %s6 = ssub.s32 1, %s4
  %s7 = scalar_select 0, %s6, %s4
  // Predicated region
  $region2: #{generator3_forward.21} parent=0 // pred_check
    _
  $region3: #{generator3_forward.21} parent=0 // pred_check_branch
    %9 = sbr.rel (0) target = $region5
  $region4: #{generator3_forward.21} parent=0 // pred_region
    _
  $region5: #{generator3_forward.21} parent=0 // pred_fallthru
    _
  // Predicated region
  $region6: #{generator3_forward.21} parent=0 // pred_check
    _
  $region7: #{generator3_forward.21} parent=0 // pred_check_branch
    %11 = sbr.rel (0) target = $region9
  $region8: #{generator3_forward.21} parent=0 // pred_region
    _
  $region9: #{generator3_forward.21} parent=0 // pred_fallthru
    _
  // Predicated region
  $region10: #{generator3_forward.21} parent=0 // pred_check
    _
  $region11: #{generator3_forward.21} parent=0 // pred_check_branch
    %13 = sbr.rel (0) target = $region13
  $region12: #{generator3_forward.21} parent=0 // pred_region
    _
  $region13: #{generator3_forward.21} parent=0 // pred_fallthru
    _
  %v15 = vld [vmem:[%s0] sm:$0xff]
  %v16 = vld [vmem:[%s1] sm:$0xff]
  %v17 = vld [vmem:[%s1 + $0x8] sm:$0xff]
  %v18 = vld [vmem:[%s1 + $0x10] sm:$0xff]
  %v19 = vld [vmem:[%s1 + $0x18] sm:$0xff]
  %v20 = vld [vmem:[%s1 + $0x20] sm:$0xff]
  %v21 = vld [vmem:[%s1 + $0x28] sm:$0xff]
  %v22 = vld [vmem:[%s1 + $0x30] sm:$0xff]
  %v23 = vld [vmem:[%s1 + $0x38] sm:$0xff]
  %v24 = vld [vmem:[%s1 + $0x40] sm:$0xff]
  %v25 = vld [vmem:[%s1 + $0x48] sm:$0xff]
  %v26 = vld [vmem:[%s1 + $0x50] sm:$0xff]
  %v27 = vld [vmem:[%s1 + $0x58] sm:$0xff]
  %v28 = vld [vmem:[%s1 + $0x60] sm:$0xff]
  %v29 = vld [vmem:[%s1 + $0x68] sm:$0xff]
  %v30 = vld [vmem:[%s1 + $0x70] sm:$0xff]
  %v31 = vld [vmem:[%s1 + $0x78] sm:$0xff]
  %v32 = vld [vmem:[%s1 + $0x80] sm:$0xff]
  %v33 = vld [vmem:[%s1 + $0x88] sm:$0xff]
  %v34 = vld [vmem:[%s1 + $0x90] sm:$0xff]
  %v35 = vld [vmem:[%s1 + $0x98] sm:$0xff]
  %v36 = vld [vmem:[%s1 + $0xa0] sm:$0xff]
  %v37 = vld [vmem:[%s1 + $0xa8] sm:$0xff]
  %v38 = vld [vmem:[%s1 + $0xb0] sm:$0xff]
  %v39 = vld [vmem:[%s1 + $0xb8] sm:$0xff]
  %v40 = vld [vmem:[%s1 + $0xc0] sm:$0xff]
  %v41 = vld [vmem:[%s1 + $0xc8] sm:$0xff]
  %v42 = vld [vmem:[%s1 + $0xd0] sm:$0xff]
  %v43 = vld [vmem:[%s1 + $0xd8] sm:$0xff]
  %v44 = vld [vmem:[%s1 + $0xe0] sm:$0xff]
  %v45 = vld [vmem:[%s1 + $0xe8] sm:$0xff]
  %v46 = vld [vmem:[%s1 + $0xf0] sm:$0xff]
  %v47 = vld [vmem:[%s1 + $0xf8] sm:$0xff]
  %v48 = vld [vmem:[%s1 + $0x100] sm:$0xff]
  %v49 = vld [vmem:[%s1 + $0x108] sm:$0xff]
  %v50 = vld [vmem:[%s1 + $0x110] sm:$0xff]
  %v51 = vld [vmem:[%s1 + $0x118] sm:$0xff]
  %v52 = vld [vmem:[%s1 + $0x120] sm:$0xff]
  %v53 = vld [vmem:[%s1 + $0x128] sm:$0xff]
  %v54 = vld [vmem:[%s1 + $0x130] sm:$0xff]
  %v55 = vld [vmem:[%s1 + $0x138] sm:$0xff]
  %v56 = vld [vmem:[%s1 + $0x140] sm:$0xff]
  %v57 = vld [vmem:[%s1 + $0x148] sm:$0xff]
  %v58 = vld [vmem:[%s1 + $0x150] sm:$0xff]
  %v59 = vld [vmem:[%s1 + $0x158] sm:$0xff]
  %v60 = vld [vmem:[%s1 + $0x160] sm:$0xff]
  %v61 = vld [vmem:[%s1 + $0x168] sm:$0xff]
  %v62 = vld [vmem:[%s1 + $0x170] sm:$0xff]
  %v63 = vld [vmem:[%s1 + $0x178] sm:$0xff]
  %v64 = vld [vmem:[%s1 + $0x180] sm:$0xff]
  %v65 = vld [vmem:[%s1 + $0x188] sm:$0xff]
  %v66 = vld [vmem:[%s1 + $0x190] sm:$0xff]
  %v67 = vld [vmem:[%s1 + $0x198] sm:$0xff]
  %v68 = vld [vmem:[%s1 + $0x1a0] sm:$0xff]
  %v69 = vld [vmem:[%s1 + $0x1a8] sm:$0xff]
  %v70 = vld [vmem:[%s2] sm:$0xff]
  %72 = vset.pattern.permute.xlu0 0
  %73 = vperm.xlu0 %72, %v70
  %v74 = vpop.permute.xlu0 %73
  %v77 = vunpack.c.l.b16 %v15
  %v78 = vunpack.c.h.b16 %v15
  %v79 = vpack.c.b16 %v77, %v77
  %v80 = vpack.c.b16 %v78, %v78
  %v136 = vunpack.c.l.b16 %v16
  %v137 = vunpack.c.h.b16 %v16
  %v138 = vunpack.c.l.b16 %v17
  %v139 = vunpack.c.h.b16 %v17
  %v140 = vunpack.c.l.b16 %v18
  %v141 = vunpack.c.h.b16 %v18
  %v142 = vunpack.c.l.b16 %v19
  %v143 = vunpack.c.h.b16 %v19
  %v144 = vunpack.c.l.b16 %v20
  %v145 = vunpack.c.h.b16 %v20
  %v146 = vunpack.c.l.b16 %v21
  %v147 = vunpack.c.h.b16 %v21
  %v148 = vunpack.c.l.b16 %v22
  %v149 = vunpack.c.h.b16 %v22
  %v150 = vunpack.c.l.b16 %v23
  %v151 = vunpack.c.h.b16 %v23
  %v152 = vunpack.c.l.b16 %v24
  %v153 = vunpack.c.h.b16 %v24
  %v154 = vunpack.c.l.b16 %v25
  %v155 = vunpack.c.h.b16 %v25
  %v156 = vunpack.c.l.b16 %v26
  %v157 = vunpack.c.h.b16 %v26
  %v158 = vunpack.c.l.b16 %v27
  %v159 = vunpack.c.h.b16 %v27
  %v160 = vunpack.c.l.b16 %v28
  %v161 = vunpack.c.h.b16 %v28
  %v162 = vunpack.c.l.b16 %v29
  %v163 = vunpack.c.h.b16 %v29
  %v164 = vunpack.c.l.b16 %v30
  %v165 = vunpack.c.h.b16 %v30
  %v166 = vunpack.c.l.b16 %v31
  %v167 = vunpack.c.h.b16 %v31
  %v168 = vunpack.c.l.b16 %v32
  %v169 = vunpack.c.h.b16 %v32
  %v170 = vunpack.c.l.b16 %v33
  %v171 = vunpack.c.h.b16 %v33
  %v172 = vunpack.c.l.b16 %v34
  %v173 = vunpack.c.h.b16 %v34
  %v174 = vunpack.c.l.b16 %v35
  %v175 = vunpack.c.h.b16 %v35
  %v176 = vunpack.c.l.b16 %v36
  %v177 = vunpack.c.h.b16 %v36
  %v178 = vunpack.c.l.b16 %v37
  %v179 = vunpack.c.h.b16 %v37
  %v180 = vunpack.c.l.b16 %v38
  %v181 = vunpack.c.h.b16 %v38
  %v182 = vunpack.c.l.b16 %v39
  %v183 = vunpack.c.h.b16 %v39
  %v184 = vunpack.c.l.b16 %v40
  %v185 = vunpack.c.h.b16 %v40
  %v186 = vunpack.c.l.b16 %v41
  %v187 = vunpack.c.h.b16 %v41
  %v188 = vunpack.c.l.b16 %v42
  %v189 = vunpack.c.h.b16 %v42
  %v190 = vunpack.c.l.b16 %v43
  %v191 = vunpack.c.h.b16 %v43
  %v192 = vunpack.c.l.b16 %v44
  %v193 = vunpack.c.h.b16 %v44
  %v194 = vunpack.c.l.b16 %v45
  %v195 = vunpack.c.h.b16 %v45
  %v196 = vunpack.c.l.b16 %v46
  %v197 = vunpack.c.h.b16 %v46
  %v198 = vunpack.c.l.b16 %v47
  %v199 = vunpack.c.h.b16 %v47
  %v200 = vunpack.c.l.b16 %v48
  %v201 = vunpack.c.h.b16 %v48
  %v202 = vunpack.c.l.b16 %v49
  %v203 = vunpack.c.h.b16 %v49
  %v204 = vunpack.c.l.b16 %v50
  %v205 = vunpack.c.h.b16 %v50
  %v206 = vunpack.c.l.b16 %v51
  %v207 = vunpack.c.h.b16 %v51
  %v208 = vunpack.c.l.b16 %v52
  %v209 = vunpack.c.h.b16 %v52
  %v210 = vunpack.c.l.b16 %v53
  %v211 = vunpack.c.h.b16 %v53
  %v212 = vunpack.c.l.b16 %v54
  %v213 = vunpack.c.h.b16 %v54
  %v214 = vunpack.c.l.b16 %v55
  %v215 = vunpack.c.h.b16 %v55
  %v216 = vunpack.c.l.b16 %v56
  %v217 = vunpack.c.h.b16 %v56
  %v218 = vunpack.c.l.b16 %v57
  %v219 = vunpack.c.h.b16 %v57
  %v220 = vunpack.c.l.b16 %v58
  %v221 = vunpack.c.h.b16 %v58
  %v222 = vunpack.c.l.b16 %v59
  %v223 = vunpack.c.h.b16 %v59
  %v224 = vunpack.c.l.b16 %v60
  %v225 = vunpack.c.h.b16 %v60
  %v226 = vunpack.c.l.b16 %v61
  %v227 = vunpack.c.h.b16 %v61
  %v228 = vunpack.c.l.b16 %v62
  %v229 = vunpack.c.h.b16 %v62
  %v230 = vunpack.c.l.b16 %v63
  %v231 = vunpack.c.h.b16 %v63
  %v232 = vunpack.c.l.b16 %v64
  %v233 = vunpack.c.h.b16 %v64
  %v234 = vunpack.c.l.b16 %v65
  %v235 = vunpack.c.h.b16 %v65
  %v236 = vunpack.c.l.b16 %v66
  %v237 = vunpack.c.h.b16 %v66
  %v238 = vunpack.c.l.b16 %v67
  %v239 = vunpack.c.h.b16 %v67
  %v240 = vunpack.c.l.b16 %v68
  %v241 = vunpack.c.h.b16 %v68
  %v242 = vunpack.c.l.b16 %v69
  %v243 = vunpack.c.h.b16 %v69
  %v244 = vpack.c.b16 %v140, %v136
  %v245 = vpack.c.b16 %v141, %v137
  %v246 = vpack.c.b16 %v142, %v138
  %v247 = vpack.c.b16 %v143, %v139
  %v248 = vpack.c.b16 %v148, %v144
  %v249 = vpack.c.b16 %v149, %v145
  %v250 = vpack.c.b16 %v150, %v146
  %v251 = vpack.c.b16 %v151, %v147
  %v252 = vpack.c.b16 %v156, %v152
  %v253 = vpack.c.b16 %v157, %v153
  %v254 = vpack.c.b16 %v158, %v154
  %v255 = vpack.c.b16 %v159, %v155
  %v256 = vpack.c.b16 %v164, %v160
  %v257 = vpack.c.b16 %v165, %v161
  %v258 = vpack.c.b16 %v166, %v162
  %v259 = vpack.c.b16 %v167, %v163
  %v260 = vpack.c.b16 %v172, %v168
  %v261 = vpack.c.b16 %v173, %v169
  %v262 = vpack.c.b16 %v174, %v170
  %v263 = vpack.c.b16 %v175, %v171
  %v264 = vpack.c.b16 %v180, %v176
  %v265 = vpack.c.b16 %v181, %v177
  %v266 = vpack.c.b16 %v182, %v178
  %v267 = vpack.c.b16 %v183, %v179
  %v268 = vpack.c.b16 %v188, %v184
  %v269 = vpack.c.b16 %v189, %v185
  %v270 = vpack.c.b16 %v190, %v186
  %v271 = vpack.c.b16 %v191, %v187
  %v272 = vpack.c.b16 %v196, %v192
  %v273 = vpack.c.b16 %v197, %v193
  %v274 = vpack.c.b16 %v198, %v194
  %v275 = vpack.c.b16 %v199, %v195
  %v276 = vpack.c.b16 %v204, %v200
  %v277 = vpack.c.b16 %v205, %v201
  %v278 = vpack.c.b16 %v206, %v202
  %v279 = vpack.c.b16 %v207, %v203
  %v280 = vpack.c.b16 %v212, %v208
  %v281 = vpack.c.b16 %v213, %v209
  %v282 = vpack.c.b16 %v214, %v210
  %v283 = vpack.c.b16 %v215, %v211
  %v284 = vpack.c.b16 %v220, %v216
  %v285 = vpack.c.b16 %v221, %v217
  %v286 = vpack.c.b16 %v222, %v218
  %v287 = vpack.c.b16 %v223, %v219
  %v288 = vpack.c.b16 %v228, %v224
  %v289 = vpack.c.b16 %v229, %v225
  %v290 = vpack.c.b16 %v230, %v226
  %v291 = vpack.c.b16 %v231, %v227
  %v292 = vpack.c.b16 %v236, %v232
  %v293 = vpack.c.b16 %v237, %v233
  %v294 = vpack.c.b16 %v238, %v234
  %v295 = vpack.c.b16 %v239, %v235
  %v296 = vpack.c.b16 %v240, %v240
  %v297 = vpack.c.b16 %v241, %v241
  %v298 = vpack.c.b16 %v242, %v242
  %v299 = vpack.c.b16 %v243, %v243
  %vm352 = vcmask 719872
  %v354 = vsel %vm352, %v80, 0
  %vm356 = vcmask 1043456
  %v358 = vsel %vm356, %v296, 0
  %v361 = vsel %vm356, %v297, 0
  %v364 = vsel %vm356, %v298, 0
  %v367 = vsel %vm356, %v299, 0
  %369 = vmatpush.bf16.msra.mxu0 %v272
  %370 = vmatpush.bf16.msra.mxu0 %v268
  %371 = vmatpush.bf16.msra.mxu0 %v264
  %372 = vmatpush.bf16.msra.mxu0 %v260
  %373 = vmatpush.bf16.msra.mxu0 %v256
  %374 = vmatpush.bf16.msra.mxu0 %v252
  %375 = vmatpush.bf16.msra.mxu0 %v248
  %376 = vmatpush.bf16.msra.mxu0 %v244
  %377 = vmatmul.bf16.gmra.mxu0 %v79
  %v378 = vpop.f32.mrf.mxu0
  %v379 = vadd.f32 %v74, %v378
  %v380 = vpop.f32.mrf.mxu0
  %381 = vdwg.mxu0
  %382 = vmatpush.bf16.msra.mxu0 0
  %383 = vmatpush.bf16.msra.mxu0 0
  %384 = vmatpush.bf16.msra.mxu0 %v358
  %385 = vmatpush.bf16.msra.mxu0 %v292
  %386 = vmatpush.bf16.msra.mxu0 %v288
  %387 = vmatpush.bf16.msra.mxu0 %v284
  %388 = vmatpush.bf16.msra.mxu0 %v280
  %389 = vmatpush.bf16.msra.mxu0 %v276
  %390 = vmatmul.bf16.gmra.mxu0 %v354
  %v391 = vpop.f32.mrf.mxu0
  %v392 = vadd.f32 %v379, %v391
  %v393 = vpop.f32.mrf.mxu0
  %394 = vdwg.mxu0
  %395 = vmatpush.bf16.msra.mxu0 %v273
  %396 = vmatpush.bf16.msra.mxu0 %v269
  %397 = vmatpush.bf16.msra.mxu0 %v265
  %398 = vmatpush.bf16.msra.mxu0 %v261
  %399 = vmatpush.bf16.msra.mxu0 %v257
  %400 = vmatpush.bf16.msra.mxu0 %v253
  %401 = vmatpush.bf16.msra.mxu0 %v249
  %402 = vmatpush.bf16.msra.mxu0 %v245
  %403 = vmatmul.bf16.gmra.mxu0 %v79
  %v404 = vpop.f32.mrf.mxu0
  %v405 = vadd.f32 %v74, %v404
  %v406 = vpop.f32.mrf.mxu0
  %407 = vdwg.mxu0
  %408 = vmatpush.bf16.msra.mxu0 0
  %409 = vmatpush.bf16.msra.mxu0 0
  %410 = vmatpush.bf16.msra.mxu0 %v361
  %411 = vmatpush.bf16.msra.mxu0 %v293
  %412 = vmatpush.bf16.msra.mxu0 %v289
  %413 = vmatpush.bf16.msra.mxu0 %v285
  %414 = vmatpush.bf16.msra.mxu0 %v281
  %415 = vmatpush.bf16.msra.mxu0 %v277
  %416 = vmatmul.bf16.gmra.mxu0 %v354
  %v417 = vpop.f32.mrf.mxu0
  %v418 = vadd.f32 %v405, %v417
  %v419 = vpop.f32.mrf.mxu0
  %420 = vdwg.mxu0
  %421 = vmatpush.bf16.msra.mxu0 %v274
  %422 = vmatpush.bf16.msra.mxu0 %v270
  %423 = vmatpush.bf16.msra.mxu0 %v266
  %424 = vmatpush.bf16.msra.mxu0 %v262
  %425 = vmatpush.bf16.msra.mxu0 %v258
  %426 = vmatpush.bf16.msra.mxu0 %v254
  %427 = vmatpush.bf16.msra.mxu0 %v250
  %428 = vmatpush.bf16.msra.mxu0 %v246
  %429 = vmatmul.bf16.gmra.mxu0 %v79
  %v430 = vpop.f32.mrf.mxu0
  %v431 = vadd.f32 %v74, %v430
  %v432 = vpop.f32.mrf.mxu0
  %433 = vdwg.mxu0
  %434 = vmatpush.bf16.msra.mxu0 0
  %435 = vmatpush.bf16.msra.mxu0 0
  %436 = vmatpush.bf16.msra.mxu0 %v364
  %437 = vmatpush.bf16.msra.mxu0 %v294
  %438 = vmatpush.bf16.msra.mxu0 %v290
  %439 = vmatpush.bf16.msra.mxu0 %v286
  %440 = vmatpush.bf16.msra.mxu0 %v282
  %441 = vmatpush.bf16.msra.mxu0 %v278
  %442 = vmatmul.bf16.gmra.mxu0 %v354
  %v443 = vpop.f32.mrf.mxu0
  %v444 = vadd.f32 %v431, %v443
  %v445 = vpop.f32.mrf.mxu0
  %446 = vdwg.mxu0
  %447 = vmatpush.bf16.msra.mxu0 %v275
  %448 = vmatpush.bf16.msra.mxu0 %v271
  %449 = vmatpush.bf16.msra.mxu0 %v267
  %450 = vmatpush.bf16.msra.mxu0 %v263
  %451 = vmatpush.bf16.msra.mxu0 %v259
  %452 = vmatpush.bf16.msra.mxu0 %v255
  %453 = vmatpush.bf16.msra.mxu0 %v251
  %454 = vmatpush.bf16.msra.mxu0 %v247
  %455 = vmatmul.bf16.gmra.mxu0 %v79
  %v456 = vpop.f32.mrf.mxu0
  %v457 = vadd.f32 %v74, %v456
  %v458 = vpop.f32.mrf.mxu0
  %459 = vdwg.mxu0
  %460 = vmatpush.bf16.msra.mxu0 0
  %461 = vmatpush.bf16.msra.mxu0 0
  %462 = vmatpush.bf16.msra.mxu0 %v367
  %463 = vmatpush.bf16.msra.mxu0 %v295
  %464 = vmatpush.bf16.msra.mxu0 %v291
  %465 = vmatpush.bf16.msra.mxu0 %v287
  %466 = vmatpush.bf16.msra.mxu0 %v283
  %467 = vmatpush.bf16.msra.mxu0 %v279
  %468 = vmatmul.bf16.gmra.mxu0 %v354
  %v469 = vpop.f32.mrf.mxu0
  %v470 = vadd.f32 %v457, %v469
  %v471 = vpop.f32.mrf.mxu0
  %472 = vdwg.mxu0
  %v473 = vmax.f32 %v392, 0.0
  %v474 = vmax.f32 %v418, 0.0
  %v475 = vmax.f32 %v444, 0.0
  %v476 = vmax.f32 %v470, 0.0
  %v477 = vpack.c.bf16 %v474, %v473
  %v478 = vpack.c.bf16 %v476, %v475
  %479 = vst [vmem:[%s3] sm:$0xff] %v477
  %480 = vst [vmem:[%s3 + $0x8] sm:$0xff] %v478
  // Predicated region
  $region14: #{generator3_forward.21} parent=0 // pred_check
    _
  $region15: #{generator3_forward.21} parent=0 // pred_check_branch
    %482 = sbr.rel (0) target = $region17
  $region16: #{generator3_forward.21} parent=0 // pred_region
    _
  $region17: #{generator3_forward.21} parent=0 // pred_fallthru
    _
  // Predicated region
  $region18: #{generator3_forward.21} parent=0 // pred_check
    _
  $region19: #{generator3_forward.21} parent=0 // pred_check_branch
    %484 = sbr.rel (0) target = $region21
  $region20: #{generator3_forward.21} parent=0 // pred_region
    _
  $region21: #{generator3_forward.21} parent=0 // pred_fallthru
    _

// kernel: generator3_forward.28
$region0: #{generator3_forward.28}
  #allocation0 [shape = 'u32[]', space=smem, size = 0x4, offset = 0x4, fixed_abs, tag = 'smem constant byte address 0x4 - core index']
  #allocation1 [shape = 'u32[72,128]{1,0:T(1,128)}', space=vmem, size = 0x9000, scoped, tag = 'internal scratch']
  %s0 = inlined_call_operand.vmem [shape: bf16[4,8,128], index: 0, kind: input, shape index: {}]
  %s1 = inlined_call_operand.vmem [shape: bf16[8,128], index: 1, kind: output, shape index: {}]
  %s2 = sld [smem:[#allocation0]]
  $region14: #{generator3_forward.28} parent=0
    _
  %s4 = ssub.s32 1, %s2
  %s5 = scalar_select 0, %s4, %s2
  // Predicated region
  $region2: #{generator3_forward.28} parent=0 // pred_check
    _
  $region3: #{generator3_forward.28} parent=0 // pred_check_branch
    %7 = sbr.rel (0) target = $region5
  $region4: #{generator3_forward.28} parent=0 // pred_region
    _
  $region5: #{generator3_forward.28} parent=0 // pred_fallthru
    _
  %v8 = vld [vmem:[%s0] sm:$0xf]
  %s9 = scalar_lea.vmem %s0, 4
  %v10 = vld [vmem:[%s9] sm:$0xf]
  %v11 = vunpack.c.l.bf16 %v8
  %v12 = vunpack.c.l.bf16 %v10
  %v13 = vmax.f32 %v11, %v12
  %v14 = vpack.c.bf16 %v13, %v13
  %s15 = scalar_lea.vmem %s0, 8
  %v16 = vld [vmem:[%s15] sm:$0xf]
  %v17 = vunpack.c.l.bf16 %v14
  %v18 = vunpack.c.l.bf16 %v16
  %v19 = vmax.f32 %v17, %v18
  %v20 = vpack.c.bf16 %v19, %v19
  %s21 = scalar_lea.vmem %s0, 12
  %v22 = vld [vmem:[%s21] sm:$0xf]
  %v23 = vunpack.c.l.bf16 %v20
  %v24 = vunpack.c.l.bf16 %v22
  %v25 = vmax.f32 %v23, %v24
  %v26 = vpack.c.bf16 %v25, %v25
  %27 = vst [vmem:[%s1] sm:$0xf] %v26
  // Predicated region
  $region6: #{generator3_forward.28} parent=0 // pred_check
    _
  $region7: #{generator3_forward.28} parent=0 // pred_check_branch
    %29 = sbr.rel (0) target = $region9
  $region8: #{generator3_forward.28} parent=0 // pred_region
    _
  $region9: #{generator3_forward.28} parent=0 // pred_fallthru
    _
  // Predicated region
  $region10: #{generator3_forward.28} parent=0 // pred_check
    _
  $region11: #{generator3_forward.28} parent=0 // pred_check_branch
    %31 = sbr.rel (0) target = $region13
  $region12: #{generator3_forward.28} parent=0 // pred_region
    _
  $region13: #{generator3_forward.28} parent=0 // pred_fallthru
    _

// kernel: generator3_forward.22
$region0: #{generator3_forward.22}
  #allocation0 [shape = 'u32[]', space=smem, size = 0x4, offset = 0x4, fixed_abs, tag = 'smem constant byte address 0x4 - core index']
  #allocation1 [shape = 'u32[72,128]{1,0:T(1,128)}', space=vmem, size = 0x9000, scoped, tag = 'internal scratch']
  %s0 = inlined_call_operand.vmem [shape: bf16[16,216], index: 0, kind: input, shape index: {}]
  %s1 = inlined_call_operand.vmem [shape: bf16[216,128], index: 1, kind: input, shape index: {}]
  %s2 = inlined_call_operand.vmem [shape: f32[16,1], index: 2, kind: input, shape index: {}]
  %s3 = inlined_call_operand.vmem [shape: bf16[16,128], index: 3, kind: output, shape index: {}]
  %s4 = sld [smem:[#allocation0]]
  $region22: #{generator3_forward.22} parent=0
    _
  %s6 = ssub.s32 1, %s4
  %s7 = scalar_select 0, %s6, %s4
  // Predicated region
  $region2: #{generator3_forward.22} parent=0 // pred_check
    _
  $region3: #{generator3_forward.22} parent=0 // pred_check_branch
    %9 = sbr.rel (0) target = $region5
  $region4: #{generator3_forward.22} parent=0 // pred_region
    _
  $region5: #{generator3_forward.22} parent=0 // pred_fallthru
    _
  // Predicated region
  $region6: #{generator3_forward.22} parent=0 // pred_check
    _
  $region7: #{generator3_forward.22} parent=0 // pred_check_branch
    %11 = sbr.rel (0) target = $region9
  $region8: #{generator3_forward.22} parent=0 // pred_region
    _
  $region9: #{generator3_forward.22} parent=0 // pred_fallthru
    _
  // Predicated region
  $region10: #{generator3_forward.22} parent=0 // pred_check
    _
  $region11: #{generator3_forward.22} parent=0 // pred_check_branch
    %13 = sbr.rel (0) target = $region13
  $region12: #{generator3_forward.22} parent=0 // pred_region
    _
  $region13: #{generator3_forward.22} parent=0 // pred_fallthru
    _
  %v15 = vld [vmem:[%s0] sm:$0xff]
  %v16 = vld [vmem:[%s0 + $0x8] sm:$0xff]
  %v17 = vld [vmem:[%s1] sm:$0xf]
  %v18 = vld [vmem:[%s1 + $0x4] sm:$0xf]
  %v19 = vld [vmem:[%s1 + $0x8] sm:$0xf]
  %v20 = vld [vmem:[%s1 + $0xc] sm:$0xf]
  %v21 = vld [vmem:[%s1 + $0x10] sm:$0xf]
  %v22 = vld [vmem:[%s1 + $0x14] sm:$0xf]
  %v23 = vld [vmem:[%s1 + $0x18] sm:$0xf]
  %v24 = vld [vmem:[%s1 + $0x1c] sm:$0xf]
  %v25 = vld [vmem:[%s1 + $0x20] sm:$0xf]
  %v26 = vld [vmem:[%s1 + $0x24] sm:$0xf]
  %v27 = vld [vmem:[%s1 + $0x28] sm:$0xf]
  %v28 = vld [vmem:[%s1 + $0x2c] sm:$0xf]
  %v29 = vld [vmem:[%s1 + $0x30] sm:$0xf]
  %v30 = vld [vmem:[%s1 + $0x34] sm:$0xf]
  %v31 = vld [vmem:[%s1 + $0x38] sm:$0xf]
  %v32 = vld [vmem:[%s1 + $0x3c] sm:$0xf]
  %v33 = vld [vmem:[%s1 + $0x40] sm:$0xf]
  %v34 = vld [vmem:[%s1 + $0x44] sm:$0xf]
  %v35 = vld [vmem:[%s1 + $0x48] sm:$0xf]
  %v36 = vld [vmem:[%s1 + $0x4c] sm:$0xf]
  %v37 = vld [vmem:[%s1 + $0x50] sm:$0xf]
  %v38 = vld [vmem:[%s1 + $0x54] sm:$0xf]
  %v39 = vld [vmem:[%s1 + $0x58] sm:$0xf]
  %v40 = vld [vmem:[%s1 + $0x5c] sm:$0xf]
  %v41 = vld [vmem:[%s1 + $0x60] sm:$0xf]
  %v42 = vld [vmem:[%s1 + $0x64] sm:$0xf]
  %v43 = vld [vmem:[%s1 + $0x68] sm:$0xf]
  %v44 = vld [vmem:[%s2] sm:$0xff]
  %v45 = vld [vmem:[%s2 + $0x8] sm:$0xff]
  %47 = vset.pattern.permute.xlu0 0
  %48 = vperm.xlu0 %47, %v44
  %v49 = vpop.permute.xlu0 %48
  %52 = vset.pattern.permute.xlu0 0
  %53 = vperm.xlu0 %52, %v45
  %v54 = vpop.permute.xlu0 %53
  %v58 = vunpack.c.l.b16 %v15
  %v59 = vunpack.c.h.b16 %v15
  %v60 = vunpack.c.l.b16 %v16
  %v61 = vunpack.c.h.b16 %v16
  %v62 = vpack.c.b16 %v60, %v58
  %v63 = vpack.c.b16 %v61, %v59
  %v92 = vunpack.c.l.b16 %v17
  %v93 = vunpack.c.l.b16 %v18
  %v94 = vunpack.c.l.b16 %v19
  %v95 = vunpack.c.l.b16 %v20
  %v96 = vunpack.c.l.b16 %v21
  %v97 = vunpack.c.l.b16 %v22
  %v98 = vunpack.c.l.b16 %v23
  %v99 = vunpack.c.l.b16 %v24
  %v100 = vunpack.c.l.b16 %v25
  %v101 = vunpack.c.l.b16 %v26
  %v102 = vunpack.c.l.b16 %v27
  %v103 = vunpack.c.l.b16 %v28
  %v104 = vunpack.c.l.b16 %v29
  %v105 = vunpack.c.l.b16 %v30
  %v106 = vunpack.c.l.b16 %v31
  %v107 = vunpack.c.l.b16 %v32
  %v108 = vunpack.c.l.b16 %v33
  %v109 = vunpack.c.l.b16 %v34
  %v110 = vunpack.c.l.b16 %v35
  %v111 = vunpack.c.l.b16 %v36
  %v112 = vunpack.c.l.b16 %v37
  %v113 = vunpack.c.l.b16 %v38
  %v114 = vunpack.c.l.b16 %v39
  %v115 = vunpack.c.l.b16 %v40
  %v116 = vunpack.c.l.b16 %v41
  %v117 = vunpack.c.l.b16 %v42
  %v118 = vunpack.c.l.b16 %v43
  %v119 = vpack.c.b16 %v93, %v92
  %v120 = vpack.c.b16 %v95, %v94
  %v121 = vpack.c.b16 %v97, %v96
  %v122 = vpack.c.b16 %v99, %v98
  %v123 = vpack.c.b16 %v101, %v100
  %v124 = vpack.c.b16 %v103, %v102
  %v125 = vpack.c.b16 %v105, %v104
  %v126 = vpack.c.b16 %v107, %v106
  %v127 = vpack.c.b16 %v109, %v108
  %v128 = vpack.c.b16 %v111, %v110
  %v129 = vpack.c.b16 %v113, %v112
  %v130 = vpack.c.b16 %v115, %v114
  %v131 = vpack.c.b16 %v117, %v116
  %v132 = vpack.c.b16 %v118, %v118
  %vm146 = vcmask 719872
  %v148 = vsel %vm146, %v63, 0
  %vm150 = vcmask 1043456
  %v152 = vsel %vm150, %v132, 0
  %154 = vmatpush.bf16.msra.mxu0 %v126
  %155 = vmatpush.bf16.msra.mxu0 %v125
  %156 = vmatpush.bf16.msra.mxu0 %v124
  %157 = vmatpush.bf16.msra.mxu0 %v123
  %158 = vmatpush.bf16.msra.mxu0 %v122
  %159 = vmatpush.bf16.msra.mxu0 %v121
  %160 = vmatpush.bf16.msra.mxu0 %v120
  %161 = vmatpush.bf16.msra.mxu0 %v119
  %162 = vmatmul.bf16.gmra.mxu0 %v62
  %v163 = vpop.f32.mrf.mxu0
  %v164 = vadd.f32 %v49, %v163
  %v165 = vpop.f32.mrf.mxu0
  %v166 = vadd.f32 %v54, %v165
  %167 = vdwg.mxu0
  %168 = vmatpush.bf16.msra.mxu0 0
  %169 = vmatpush.bf16.msra.mxu0 0
  %170 = vmatpush.bf16.msra.mxu0 %v152
  %171 = vmatpush.bf16.msra.mxu0 %v131
  %172 = vmatpush.bf16.msra.mxu0 %v130
  %173 = vmatpush.bf16.msra.mxu0 %v129
  %174 = vmatpush.bf16.msra.mxu0 %v128
  %175 = vmatpush.bf16.msra.mxu0 %v127
  %176 = vmatmul.bf16.gmra.mxu0 %v148
  %v177 = vpop.f32.mrf.mxu0
  %v178 = vadd.f32 %v164, %v177
  %v179 = vpop.f32.mrf.mxu0
  %v180 = vadd.f32 %v166, %v179
  %181 = vdwg.mxu0
  %v182 = vmax.f32 %v178, 0.0
  %v183 = vmax.f32 %v180, 0.0
  %v184 = vpack.c.bf16 %v182, %v182
  %v185 = vpack.c.bf16 %v183, %v183
  %186 = vst [vmem:[%s3] sm:$0xf] %v184
  %187 = vst [vmem:[%s3 + $0x4] sm:$0xf] %v185
  // Predicated region
  $region14: #{generator3_forward.22} parent=0 // pred_check
    _
  $region15: #{generator3_forward.22} parent=0 // pred_check_branch
    %189 = sbr.rel (0) target = $region17
  $region16: #{generator3_forward.22} parent=0 // pred_region
    _
  $region17: #{generator3_forward.22} parent=0 // pred_fallthru
    _
  // Predicated region
  $region18: #{generator3_forward.22} parent=0 // pred_check
    _
  $region19: #{generator3_forward.22} parent=0 // pred_check_branch
    %191 = sbr.rel (0) target = $region21
  $region20: #{generator3_forward.22} parent=0 // pred_region
    _
  $region21: #{generator3_forward.22} parent=0 // pred_fallthru
    _

// kernel: generator3_forward.23
$region0: #{generator3_forward.23}
  #allocation0 [shape = 'u32[]', space=smem, size = 0x4, offset = 0x4, fixed_abs, tag = 'smem constant byte address 0x4 - core index']
  #allocation1 [shape = 'u32[72,128]{1,0:T(1,128)}', space=vmem, size = 0x9000, scoped, tag = 'internal scratch']
  %s0 = inlined_call_operand.vmem [shape: bf16[16,432], index: 0, kind: input, shape index: {}]
  %s1 = inlined_call_operand.vmem [shape: bf16[432,128], index: 1, kind: input, shape index: {}]
  %s2 = inlined_call_operand.vmem [shape: f32[16,1], index: 2, kind: input, shape index: {}]
  %s3 = inlined_call_operand.vmem [shape: bf16[16,128], index: 3, kind: output, shape index: {}]
  %s4 = sld [smem:[#allocation0]]
  $region22: #{generator3_forward.23} parent=0
    _
  %s6 = ssub.s32 1, %s4
  %s7 = scalar_select 0, %s6, %s4
  // Predicated region
  $region2: #{generator3_forward.23} parent=0 // pred_check
    _
  $region3: #{generator3_forward.23} parent=0 // pred_check_branch
    %9 = sbr.rel (0) target = $region5
  $region4: #{generator3_forward.23} parent=0 // pred_region
    _
  $region5: #{generator3_forward.23} parent=0 // pred_fallthru
    _
  // Predicated region
  $region6: #{generator3_forward.23} parent=0 // pred_check
    _
  $region7: #{generator3_forward.23} parent=0 // pred_check_branch
    %11 = sbr.rel (0) target = $region9
  $region8: #{generator3_forward.23} parent=0 // pred_region
    _
  $region9: #{generator3_forward.23} parent=0 // pred_fallthru
    _
  // Predicated region
  $region10: #{generator3_forward.23} parent=0 // pred_check
    _
  $region11: #{generator3_forward.23} parent=0 // pred_check_branch
    %13 = sbr.rel (0) target = $region13
  $region12: #{generator3_forward.23} parent=0 // pred_region
    _
  $region13: #{generator3_forward.23} parent=0 // pred_fallthru
    _
  %v15 = vld [vmem:[%s0] sm:$0xff]
  %v16 = vld [vmem:[%s0 + $0x8] sm:$0xff]
  %v17 = vld [vmem:[%s0 + $0x10] sm:$0xff]
  %v18 = vld [vmem:[%s0 + $0x18] sm:$0xff]
  %v19 = vld [vmem:[%s1] sm:$0xf]
  %v20 = vld [vmem:[%s1 + $0x4] sm:$0xf]
  %v21 = vld [vmem:[%s1 + $0x8] sm:$0xf]
  %v22 = vld [vmem:[%s1 + $0xc] sm:$0xf]
  %v23 = vld [vmem:[%s1 + $0x10] sm:$0xf]
  %v24 = vld [vmem:[%s1 + $0x14] sm:$0xf]
  %v25 = vld [vmem:[%s1 + $0x18] sm:$0xf]
  %v26 = vld [vmem:[%s1 + $0x1c] sm:$0xf]
  %v27 = vld [vmem:[%s1 + $0x20] sm:$0xf]
  %v28 = vld [vmem:[%s1 + $0x24] sm:$0xf]
  %v29 = vld [vmem:[%s1 + $0x28] sm:$0xf]
  %v30 = vld [vmem:[%s1 + $0x2c] sm:$0xf]
  %v31 = vld [vmem:[%s1 + $0x30] sm:$0xf]
  %v32 = vld [vmem:[%s1 + $0x34] sm:$0xf]
  %v33 = vld [vmem:[%s1 + $0x38] sm:$0xf]
  %v34 = vld [vmem:[%s1 + $0x3c] sm:$0xf]
  %v35 = vld [vmem:[%s1 + $0x40] sm:$0xf]
  %v36 = vld [vmem:[%s1 + $0x44] sm:$0xf]
  %v37 = vld [vmem:[%s1 + $0x48] sm:$0xf]
  %v38 = vld [vmem:[%s1 + $0x4c] sm:$0xf]
  %v39 = vld [vmem:[%s1 + $0x50] sm:$0xf]
  %v40 = vld [vmem:[%s1 + $0x54] sm:$0xf]
  %v41 = vld [vmem:[%s1 + $0x58] sm:$0xf]
  %v42 = vld [vmem:[%s1 + $0x5c] sm:$0xf]
  %v43 = vld [vmem:[%s1 + $0x60] sm:$0xf]
  %v44 = vld [vmem:[%s1 + $0x64] sm:$0xf]
  %v45 = vld [vmem:[%s1 + $0x68] sm:$0xf]
  %v46 = vld [vmem:[%s1 + $0x6c] sm:$0xf]
  %v47 = vld [vmem:[%s1 + $0x70] sm:$0xf]
  %v48 = vld [vmem:[%s1 + $0x74] sm:$0xf]
  %v49 = vld [vmem:[%s1 + $0x78] sm:$0xf]
  %v50 = vld [vmem:[%s1 + $0x7c] sm:$0xf]
  %v51 = vld [vmem:[%s1 + $0x80] sm:$0xf]
  %v52 = vld [vmem:[%s1 + $0x84] sm:$0xf]
  %v53 = vld [vmem:[%s1 + $0x88] sm:$0xf]
  %v54 = vld [vmem:[%s1 + $0x8c] sm:$0xf]
  %v55 = vld [vmem:[%s1 + $0x90] sm:$0xf]
  %v56 = vld [vmem:[%s1 + $0x94] sm:$0xf]
  %v57 = vld [vmem:[%s1 + $0x98] sm:$0xf]
  %v58 = vld [vmem:[%s1 + $0x9c] sm:$0xf]
  %v59 = vld [vmem:[%s1 + $0xa0] sm:$0xf]
  %v60 = vld [vmem:[%s1 + $0xa4] sm:$0xf]
  %v61 = vld [vmem:[%s1 + $0xa8] sm:$0xf]
  %v62 = vld [vmem:[%s1 + $0xac] sm:$0xf]
  %v63 = vld [vmem:[%s1 + $0xb0] sm:$0xf]
  %v64 = vld [vmem:[%s1 + $0xb4] sm:$0xf]
  %v65 = vld [vmem:[%s1 + $0xb8] sm:$0xf]
  %v66 = vld [vmem:[%s1 + $0xbc] sm:$0xf]
  %v67 = vld [vmem:[%s1 + $0xc0] sm:$0xf]
  %v68 = vld [vmem:[%s1 + $0xc4] sm:$0xf]
  %v69 = vld [vmem:[%s1 + $0xc8] sm:$0xf]
  %v70 = vld [vmem:[%s1 + $0xcc] sm:$0xf]
  %v71 = vld [vmem:[%s1 + $0xd0] sm:$0xf]
  %v72 = vld [vmem:[%s1 + $0xd4] sm:$0xf]
  %v73 = vld [vmem:[%s2] sm:$0xff]
  %v74 = vld [vmem:[%s2 + $0x8] sm:$0xff]
  %76 = vset.pattern.permute.xlu0 0
  %77 = vperm.xlu0 %76, %v73
  %v78 = vpop.permute.xlu0 %77
  %81 = vset.pattern.permute.xlu0 0
  %82 = vperm.xlu0 %81, %v74
  %v83 = vpop.permute.xlu0 %82
  %v89 = vunpack.c.l.b16 %v15
  %v90 = vunpack.c.h.b16 %v15
  %v91 = vunpack.c.l.b16 %v16
  %v92 = vunpack.c.h.b16 %v16
  %v93 = vunpack.c.l.b16 %v17
  %v94 = vunpack.c.h.b16 %v17
  %v95 = vunpack.c.l.b16 %v18
  %v96 = vunpack.c.h.b16 %v18
  %v97 = vpack.c.b16 %v93, %v89
  %v98 = vpack.c.b16 %v94, %v90
  %v99 = vpack.c.b16 %v95, %v91
  %v100 = vpack.c.b16 %v96, %v92
  %v158 = vunpack.c.l.b16 %v19
  %v159 = vunpack.c.l.b16 %v20
  %v160 = vunpack.c.l.b16 %v21
  %v161 = vunpack.c.l.b16 %v22
  %v162 = vunpack.c.l.b16 %v23
  %v163 = vunpack.c.l.b16 %v24
  %v164 = vunpack.c.l.b16 %v25
  %v165 = vunpack.c.l.b16 %v26
  %v166 = vunpack.c.l.b16 %v27
  %v167 = vunpack.c.l.b16 %v28
  %v168 = vunpack.c.l.b16 %v29
  %v169 = vunpack.c.l.b16 %v30
  %v170 = vunpack.c.l.b16 %v31
  %v171 = vunpack.c.l.b16 %v32
  %v172 = vunpack.c.l.b16 %v33
  %v173 = vunpack.c.l.b16 %v34
  %v174 = vunpack.c.l.b16 %v35
  %v175 = vunpack.c.l.b16 %v36
  %v176 = vunpack.c.l.b16 %v37
  %v177 = vunpack.c.l.b16 %v38
  %v178 = vunpack.c.l.b16 %v39
  %v179 = vunpack.c.l.b16 %v40
  %v180 = vunpack.c.l.b16 %v41
  %v181 = vunpack.c.l.b16 %v42
  %v182 = vunpack.c.l.b16 %v43
  %v183 = vunpack.c.l.b16 %v44
  %v184 = vunpack.c.l.b16 %v45
  %v185 = vunpack.c.l.b16 %v46
  %v186 = vunpack.c.l.b16 %v47
  %v187 = vunpack.c.l.b16 %v48
  %v188 = vunpack.c.l.b16 %v49
  %v189 = vunpack.c.l.b16 %v50
  %v190 = vunpack.c.l.b16 %v51
  %v191 = vunpack.c.l.b16 %v52
  %v192 = vunpack.c.l.b16 %v53
  %v193 = vunpack.c.l.b16 %v54
  %v194 = vunpack.c.l.b16 %v55
  %v195 = vunpack.c.l.b16 %v56
  %v196 = vunpack.c.l.b16 %v57
  %v197 = vunpack.c.l.b16 %v58
  %v198 = vunpack.c.l.b16 %v59
  %v199 = vunpack.c.l.b16 %v60
  %v200 = vunpack.c.l.b16 %v61
  %v201 = vunpack.c.l.b16 %v62
  %v202 = vunpack.c.l.b16 %v63
  %v203 = vunpack.c.l.b16 %v64
  %v204 = vunpack.c.l.b16 %v65
  %v205 = vunpack.c.l.b16 %v66
  %v206 = vunpack.c.l.b16 %v67
  %v207 = vunpack.c.l.b16 %v68
  %v208 = vunpack.c.l.b16 %v69
  %v209 = vunpack.c.l.b16 %v70
  %v210 = vunpack.c.l.b16 %v71
  %v211 = vunpack.c.l.b16 %v72
  %v212 = vpack.c.b16 %v159, %v158
  %v213 = vpack.c.b16 %v161, %v160
  %v214 = vpack.c.b16 %v163, %v162
  %v215 = vpack.c.b16 %v165, %v164
  %v216 = vpack.c.b16 %v167, %v166
  %v217 = vpack.c.b16 %v169, %v168
  %v218 = vpack.c.b16 %v171, %v170
  %v219 = vpack.c.b16 %v173, %v172
  %v220 = vpack.c.b16 %v175, %v174
  %v221 = vpack.c.b16 %v177, %v176
  %v222 = vpack.c.b16 %v179, %v178
  %v223 = vpack.c.b16 %v181, %v180
  %v224 = vpack.c.b16 %v183, %v182
  %v225 = vpack.c.b16 %v185, %v184
  %v226 = vpack.c.b16 %v187, %v186
  %v227 = vpack.c.b16 %v189, %v188
  %v228 = vpack.c.b16 %v191, %v190
  %v229 = vpack.c.b16 %v193, %v192
  %v230 = vpack.c.b16 %v195, %v194
  %v231 = vpack.c.b16 %v197, %v196
  %v232 = vpack.c.b16 %v199, %v198
  %v233 = vpack.c.b16 %v201, %v200
  %v234 = vpack.c.b16 %v203, %v202
  %v235 = vpack.c.b16 %v205, %v204
  %v236 = vpack.c.b16 %v207, %v206
  %v237 = vpack.c.b16 %v209, %v208
  %v238 = vpack.c.b16 %v211, %v210
  %vm266 = vcmask 392192
  %v268 = vsel %vm266, %v100, 0
  %270 = vmatpush.bf16.msra.mxu0 %v219
  %271 = vmatpush.bf16.msra.mxu0 %v218
  %272 = vmatpush.bf16.msra.mxu0 %v217
  %273 = vmatpush.bf16.msra.mxu0 %v216
  %274 = vmatpush.bf16.msra.mxu0 %v215
  %275 = vmatpush.bf16.msra.mxu0 %v214
  %276 = vmatpush.bf16.msra.mxu0 %v213
  %277 = vmatpush.bf16.msra.mxu0 %v212
  %278 = vmatmul.bf16.gmra.mxu0 %v97
  %v279 = vpop.f32.mrf.mxu0
  %v280 = vadd.f32 %v78, %v279
  %v281 = vpop.f32.mrf.mxu0
  %v282 = vadd.f32 %v83, %v281
  %283 = vdwg.mxu0
  %284 = vmatpush.bf16.msra.mxu0 %v227
  %285 = vmatpush.bf16.msra.mxu0 %v226
  %286 = vmatpush.bf16.msra.mxu0 %v225
  %287 = vmatpush.bf16.msra.mxu0 %v224
  %288 = vmatpush.bf16.msra.mxu0 %v223
  %289 = vmatpush.bf16.msra.mxu0 %v222
  %290 = vmatpush.bf16.msra.mxu0 %v221
  %291 = vmatpush.bf16.msra.mxu0 %v220
  %292 = vmatmul.bf16.gmra.mxu0 %v98
  %v293 = vpop.f32.mrf.mxu0
  %v294 = vadd.f32 %v280, %v293
  %v295 = vpop.f32.mrf.mxu0
  %v296 = vadd.f32 %v282, %v295
  %297 = vdwg.mxu0
  %298 = vmatpush.bf16.msra.mxu0 %v235
  %299 = vmatpush.bf16.msra.mxu0 %v234
  %300 = vmatpush.bf16.msra.mxu0 %v233
  %301 = vmatpush.bf16.msra.mxu0 %v232
  %302 = vmatpush.bf16.msra.mxu0 %v231
  %303 = vmatpush.bf16.msra.mxu0 %v230
  %304 = vmatpush.bf16.msra.mxu0 %v229
  %305 = vmatpush.bf16.msra.mxu0 %v228
  %306 = vmatmul.bf16.gmra.mxu0 %v99
  %v307 = vpop.f32.mrf.mxu0
  %v308 = vadd.f32 %v294, %v307
  %v309 = vpop.f32.mrf.mxu0
  %v310 = vadd.f32 %v296, %v309
  %311 = vdwg.mxu0
  %312 = vmatpush.bf16.msra.mxu0 0
  %313 = vmatpush.bf16.msra.mxu0 0
  %314 = vmatpush.bf16.msra.mxu0 0
  %315 = vmatpush.bf16.msra.mxu0 0
  %316 = vmatpush.bf16.msra.mxu0 0
  %317 = vmatpush.bf16.msra.mxu0 %v238
  %318 = vmatpush.bf16.msra.mxu0 %v237
  %319 = vmatpush.bf16.msra.mxu0 %v236
  %320 = vmatmul.bf16.gmra.mxu0 %v268
  %v321 = vpop.f32.mrf.mxu0
  %v322 = vadd.f32 %v308, %v321
  %v323 = vpop.f32.mrf.mxu0
  %v324 = vadd.f32 %v310, %v323
  %325 = vdwg.mxu0
  %v326 = vmax.f32 %v322, 0.0
  %v327 = vmax.f32 %v324, 0.0
  %v328 = vpack.c.bf16 %v326, %v326
  %v329 = vpack.c.bf16 %v327, %v327
  %330 = vst [vmem:[%s3] sm:$0xf] %v328
  %331 = vst [vmem:[%s3 + $0x4] sm:$0xf] %v329
  // Predicated region
  $region14: #{generator3_forward.23} parent=0 // pred_check
    _
  $region15: #{generator3_forward.23} parent=0 // pred_check_branch
    %333 = sbr.rel (0) target = $region17
  $region16: #{generator3_forward.23} parent=0 // pred_region
    _
  $region17: #{generator3_forward.23} parent=0 // pred_fallthru
    _
  // Predicated region
  $region18: #{generator3_forward.23} parent=0 // pred_check
    _
  $region19: #{generator3_forward.23} parent=0 // pred_check_branch
    %335 = sbr.rel (0) target = $region21
  $region20: #{generator3_forward.23} parent=0 // pred_region
    _
  $region21: #{generator3_forward.23} parent=0 // pred_fallthru
    _

// kernel: generator3_forward.24
$region0: #{generator3_forward.24}
  #allocation0 [shape = 'u32[]', space=smem, size = 0x4, offset = 0x4, fixed_abs, tag = 'smem constant byte address 0x4 - core index']
  #allocation1 [shape = 'u32[72,128]{1,0:T(1,128)}', space=vmem, size = 0x9000, scoped, tag = 'internal scratch']
  %s0 = inlined_call_operand.vmem [shape: bf16[4,4,128], index: 0, kind: input, shape index: {}]
  %s1 = inlined_call_operand.vmem [shape: bf16[4,128], index: 1, kind: output, shape index: {}]
  %s2 = sld [smem:[#allocation0]]
  $region14: #{generator3_forward.24} parent=0
    _
  %s4 = ssub.s32 1, %s2
  %s5 = scalar_select 0, %s4, %s2
  // Predicated region
  $region2: #{generator3_forward.24} parent=0 // pred_check
    _
  $region3: #{generator3_forward.24} parent=0 // pred_check_branch
    %7 = sbr.rel (0) target = $region5
  $region4: #{generator3_forward.24} parent=0 // pred_region
    _
  $region5: #{generator3_forward.24} parent=0 // pred_fallthru
    _
  %v8 = vld [vmem:[%s0] sm:$0x3]
  %s9 = scalar_lea.vmem %s0, 2
  %v10 = vld [vmem:[%s9] sm:$0x3]
  %v11 = vunpack.c.l.bf16 %v8
  %v12 = vunpack.c.l.bf16 %v10
  %v13 = vmax.f32 %v11, %v12
  %v14 = vpack.c.bf16 %v13, %v13
  %s15 = scalar_lea.vmem %s0, 4
  %v16 = vld [vmem:[%s15] sm:$0x3]
  %v17 = vunpack.c.l.bf16 %v14
  %v18 = vunpack.c.l.bf16 %v16
  %v19 = vmax.f32 %v17, %v18
  %v20 = vpack.c.bf16 %v19, %v19
  %s21 = scalar_lea.vmem %s0, 6
  %v22 = vld [vmem:[%s21] sm:$0x3]
  %v23 = vunpack.c.l.bf16 %v20
  %v24 = vunpack.c.l.bf16 %v22
  %v25 = vmax.f32 %v23, %v24
  %v26 = vpack.c.bf16 %v25, %v25
  %27 = vst [vmem:[%s1] sm:$0x3] %v26
  // Predicated region
  $region6: #{generator3_forward.24} parent=0 // pred_check
    _
  $region7: #{generator3_forward.24} parent=0 // pred_check_branch
    %29 = sbr.rel (0) target = $region9
  $region8: #{generator3_forward.24} parent=0 // pred_region
    _
  $region9: #{generator3_forward.24} parent=0 // pred_fallthru
    _
  // Predicated region
  $region10: #{generator3_forward.24} parent=0 // pred_check
    _
  $region11: #{generator3_forward.24} parent=0 // pred_check_branch
    %31 = sbr.rel (0) target = $region13
  $region12: #{generator3_forward.24} parent=0 // pred_region
    _
  $region13: #{generator3_forward.24} parent=0 // pred_fallthru
    _

// kernel: generator3_forward.25
$region0: #{generator3_forward.25}
  #allocation0 [shape = 'u32[]', space=smem, size = 0x4, offset = 0x4, fixed_abs, tag = 'smem constant byte address 0x4 - core index']
  #allocation1 [shape = 'u32[72,128]{1,0:T(1,128)}', space=vmem, size = 0x9000, scoped, tag = 'internal scratch']
  %s0 = inlined_call_operand.vmem [shape: bf16[32,144], index: 0, kind: input, shape index: {}]
  %s1 = inlined_call_operand.vmem [shape: bf16[144,32], index: 1, kind: input, shape index: {}]
  %s2 = inlined_call_operand.vmem [shape: f32[32,1], index: 2, kind: input, shape index: {}]
  %s3 = inlined_call_operand.vmem [shape: bf16[32,32], index: 3, kind: output, shape index: {}]
  %s4 = sld [smem:[#allocation0]]
  $region22: #{generator3_forward.25} parent=0
    _
  %s6 = ssub.s32 1, %s4
  %s7 = scalar_select 0, %s6, %s4
  // Predicated region
  $region2: #{generator3_forward.25} parent=0 // pred_check
    _
  $region3: #{generator3_forward.25} parent=0 // pred_check_branch
    %9 = sbr.rel (0) target = $region5
  $region4: #{generator3_forward.25} parent=0 // pred_region
    _
  $region5: #{generator3_forward.25} parent=0 // pred_fallthru
    _
  // Predicated region
  $region6: #{generator3_forward.25} parent=0 // pred_check
    _
  $region7: #{generator3_forward.25} parent=0 // pred_check_branch
    %11 = sbr.rel (0) target = $region9
  $region8: #{generator3_forward.25} parent=0 // pred_region
    _
  $region9: #{generator3_forward.25} parent=0 // pred_fallthru
    _
  // Predicated region
  $region10: #{generator3_forward.25} parent=0 // pred_check
    _
  $region11: #{generator3_forward.25} parent=0 // pred_check_branch
    %13 = sbr.rel (0) target = $region13
  $region12: #{generator3_forward.25} parent=0 // pred_region
    _
  $region13: #{generator3_forward.25} parent=0 // pred_fallthru
    _
  %v15 = vld [vmem:[%s0] sm:$0xff]
  %v16 = vld [vmem:[%s0 + $0x8] sm:$0xff]
  %v17 = vld [vmem:[%s0 + $0x10] sm:$0xff]
  %v18 = vld [vmem:[%s0 + $0x18] sm:$0xff]
  %v19 = vld [vmem:[%s1] sm:$0xf]
  %v20 = vld [vmem:[%s1 + $0x4] sm:$0xf]
  %v21 = vld [vmem:[%s1 + $0x8] sm:$0xf]
  %v22 = vld [vmem:[%s1 + $0xc] sm:$0xf]
  %v23 = vld [vmem:[%s1 + $0x10] sm:$0xf]
  %v24 = vld [vmem:[%s1 + $0x14] sm:$0xf]
  %v25 = vld [vmem:[%s1 + $0x18] sm:$0xf]
  %v26 = vld [vmem:[%s1 + $0x1c] sm:$0xf]
  %v27 = vld [vmem:[%s1 + $0x20] sm:$0xf]
  %v28 = vld [vmem:[%s1 + $0x24] sm:$0xf]
  %v29 = vld [vmem:[%s1 + $0x28] sm:$0xf]
  %v30 = vld [vmem:[%s1 + $0x2c] sm:$0xf]
  %v31 = vld [vmem:[%s1 + $0x30] sm:$0xf]
  %v32 = vld [vmem:[%s1 + $0x34] sm:$0xf]
  %v33 = vld [vmem:[%s1 + $0x38] sm:$0xf]
  %v34 = vld [vmem:[%s1 + $0x3c] sm:$0xf]
  %v35 = vld [vmem:[%s1 + $0x40] sm:$0xf]
  %v36 = vld [vmem:[%s1 + $0x44] sm:$0xf]
  %v37 = vld [vmem:[%s2] sm:$0xff]
  %v38 = vld [vmem:[%s2 + $0x8] sm:$0xff]
  %v39 = vld [vmem:[%s2 + $0x10] sm:$0xff]
  %v40 = vld [vmem:[%s2 + $0x18] sm:$0xff]
  %42 = vset.pattern.permute.xlu0 0
  %43 = vperm.xlu0 %42, %v37
  %v44 = vpop.permute.xlu0 %43
  %47 = vset.pattern.permute.xlu0 0
  %48 = vperm.xlu0 %47, %v38
  %v49 = vpop.permute.xlu0 %48
  %52 = vset.pattern.permute.xlu0 0
  %53 = vperm.xlu0 %52, %v39
  %v54 = vpop.permute.xlu0 %53
  %57 = vset.pattern.permute.xlu0 0
  %58 = vperm.xlu0 %57, %v40
  %v59 = vpop.permute.xlu0 %58
  %v65 = vunpack.c.l.b16 %v15
  %v66 = vunpack.c.h.b16 %v15
  %v67 = vunpack.c.l.b16 %v16
  %v68 = vunpack.c.h.b16 %v16
  %v69 = vunpack.c.l.b16 %v17
  %v70 = vunpack.c.h.b16 %v17
  %v71 = vunpack.c.l.b16 %v18
  %v72 = vunpack.c.h.b16 %v18
  %v73 = vpack.c.b16 %v67, %v65
  %v74 = vpack.c.b16 %v68, %v66
  %v75 = vpack.c.b16 %v71, %v69
  %v76 = vpack.c.b16 %v72, %v70
  %v97 = vunpack.c.l.b16 %v19
  %v98 = vunpack.c.l.b16 %v20
  %v99 = vunpack.c.l.b16 %v21
  %v100 = vunpack.c.l.b16 %v22
  %v101 = vunpack.c.l.b16 %v23
  %v102 = vunpack.c.l.b16 %v24
  %v103 = vunpack.c.l.b16 %v25
  %v104 = vunpack.c.l.b16 %v26
  %v105 = vunpack.c.l.b16 %v27
  %v106 = vunpack.c.l.b16 %v28
  %v107 = vunpack.c.l.b16 %v29
  %v108 = vunpack.c.l.b16 %v30
  %v109 = vunpack.c.l.b16 %v31
  %v110 = vunpack.c.l.b16 %v32
  %v111 = vunpack.c.l.b16 %v33
  %v112 = vunpack.c.l.b16 %v34
  %v113 = vunpack.c.l.b16 %v35
  %v114 = vunpack.c.l.b16 %v36
  %v115 = vpack.c.b16 %v98, %v97
  %v116 = vpack.c.b16 %v100, %v99
  %v117 = vpack.c.b16 %v102, %v101
  %v118 = vpack.c.b16 %v104, %v103
  %v119 = vpack.c.b16 %v106, %v105
  %v120 = vpack.c.b16 %v108, %v107
  %v121 = vpack.c.b16 %v110, %v109
  %v122 = vpack.c.b16 %v112, %v111
  %v123 = vpack.c.b16 %v114, %v113
  %vm133 = vcmask 130048
  %v135 = vsel %vm133, %v74, 0
  %v138 = vsel %vm133, %v76, 0
  %140 = vmatpush.bf16.msra.mxu0 %v122
  %141 = vmatpush.bf16.msra.mxu0 %v121
  %142 = vmatpush.bf16.msra.mxu0 %v120
  %143 = vmatpush.bf16.msra.mxu0 %v119
  %144 = vmatpush.bf16.msra.mxu0 %v118
  %145 = vmatpush.bf16.msra.mxu0 %v117
  %146 = vmatpush.bf16.msra.mxu0 %v116
  %147 = vmatpush.bf16.msra.mxu0 %v115
  %148 = vmatmul.bf16.gmra.mxu0 %v73
  %v149 = vpop.f32.mrf.mxu0
  %v150 = vadd.f32 %v44, %v149
  %v151 = vpop.f32.mrf.mxu0
  %v152 = vadd.f32 %v49, %v151
  %153 = vmatmul.bf16.gmra.mxu0 %v75
  %v154 = vpop.f32.mrf.mxu0
  %v155 = vadd.f32 %v54, %v154
  %v156 = vpop.f32.mrf.mxu0
  %v157 = vadd.f32 %v59, %v156
  %158 = vdwg.mxu0
  %159 = vmatpush.bf16.msra.mxu0 0
  %160 = vmatpush.bf16.msra.mxu0 0
  %161 = vmatpush.bf16.msra.mxu0 0
  %162 = vmatpush.bf16.msra.mxu0 0
  %163 = vmatpush.bf16.msra.mxu0 0
  %164 = vmatpush.bf16.msra.mxu0 0
  %165 = vmatpush.bf16.msra.mxu0 0
  %166 = vmatpush.bf16.msra.mxu0 %v123
  %167 = vmatmul.bf16.gmra.mxu0 %v135
  %v168 = vpop.f32.mrf.mxu0
  %v169 = vadd.f32 %v150, %v168
  %v170 = vpop.f32.mrf.mxu0
  %v171 = vadd.f32 %v152, %v170
  %172 = vmatmul.bf16.gmra.mxu0 %v138
  %v173 = vpop.f32.mrf.mxu0
  %v174 = vadd.f32 %v155, %v173
  %v175 = vpop.f32.mrf.mxu0
  %v176 = vadd.f32 %v157, %v175
  %177 = vdwg.mxu0
  %v178 = vmax.f32 %v169, 0.0
  %v179 = vmax.f32 %v171, 0.0
  %v180 = vmax.f32 %v174, 0.0
  %v181 = vmax.f32 %v176, 0.0
  %v182 = vpack.c.bf16 %v178, %v178
  %v183 = vpack.c.bf16 %v179, %v179
  %v184 = vpack.c.bf16 %v180, %v180
  %v185 = vpack.c.bf16 %v181, %v181
  %vm186 = vcmask 257024
  %187 = vst.msk [vmem:[%s3] sm:$0xf] %vm186, %v182
  %188 = vst.msk [vmem:[%s3 + $0x4] sm:$0xf] %vm186, %v183
  %189 = vst.msk [vmem:[%s3 + $0x8] sm:$0xf] %vm186, %v184
  %190 = vst.msk [vmem:[%s3 + $0xc] sm:$0xf] %vm186, %v185
  // Predicated region
  $region14: #{generator3_forward.25} parent=0 // pred_check
    _
  $region15: #{generator3_forward.25} parent=0 // pred_check_branch
    %192 = sbr.rel (0) target = $region17
  $region16: #{generator3_forward.25} parent=0 // pred_region
    _
  $region17: #{generator3_forward.25} parent=0 // pred_fallthru
    _
  // Predicated region
  $region18: #{generator3_forward.25} parent=0 // pred_check
    _
  $region19: #{generator3_forward.25} parent=0 // pred_check_branch
    %194 = sbr.rel (0) target = $region21
  $region20: #{generator3_forward.25} parent=0 // pred_region
    _
  $region21: #{generator3_forward.25} parent=0 // pred_fallthru
    _

// kernel: generator3_forward.27
$region0: #{generator3_forward.27}
  #allocation0 [shape = 'u32[]', space=smem, size = 0x4, offset = 0x4, fixed_abs, tag = 'smem constant byte address 0x4 - core index']
  #allocation1 [shape = 'u32[72,128]{1,0:T(1,128)}', space=vmem, size = 0x9000, scoped, tag = 'internal scratch']
  %s0 = inlined_call_operand.vmem [shape: bf16[64,32], index: 0, kind: input, shape index: {}]
  %s1 = inlined_call_operand.vmem [shape: bf16[32,32], index: 1, kind: input, shape index: {}]
  %s2 = inlined_call_operand.vmem [shape: f32[64,1], index: 2, kind: input, shape index: {}]
  %s3 = inlined_call_operand.vmem [shape: bf16[64,32], index: 3, kind: output, shape index: {}]
  %s4 = sld [smem:[#allocation0]]
  $region22: #{generator3_forward.27} parent=0
    _
  %s6 = ssub.s32 1, %s4
  %s7 = scalar_select 0, %s6, %s4
  // Predicated region
  $region2: #{generator3_forward.27} parent=0 // pred_check
    _
  $region3: #{generator3_forward.27} parent=0 // pred_check_branch
    %9 = sbr.rel (0) target = $region5
  $region4: #{generator3_forward.27} parent=0 // pred_region
    _
  $region5: #{generator3_forward.27} parent=0 // pred_fallthru
    _
  // Predicated region
  $region6: #{generator3_forward.27} parent=0 // pred_check
    _
  $region7: #{generator3_forward.27} parent=0 // pred_check_branch
    %11 = sbr.rel (0) target = $region9
  $region8: #{generator3_forward.27} parent=0 // pred_region
    _
  $region9: #{generator3_forward.27} parent=0 // pred_fallthru
    _
  // Predicated region
  $region10: #{generator3_forward.27} parent=0 // pred_check
    _
  $region11: #{generator3_forward.27} parent=0 // pred_check_branch
    %13 = sbr.rel (0) target = $region13
  $region12: #{generator3_forward.27} parent=0 // pred_region
    _
  $region13: #{generator3_forward.27} parent=0 // pred_fallthru
    _
  %v15 = vld [vmem:[%s0] sm:$0xf]
  %v16 = vld [vmem:[%s0 + $0x4] sm:$0xf]
  %v17 = vld [vmem:[%s0 + $0x8] sm:$0xf]
  %v18 = vld [vmem:[%s0 + $0xc] sm:$0xf]
  %v19 = vld [vmem:[%s0 + $0x10] sm:$0xf]
  %v20 = vld [vmem:[%s0 + $0x14] sm:$0xf]
  %v21 = vld [vmem:[%s0 + $0x18] sm:$0xf]
  %v22 = vld [vmem:[%s0 + $0x1c] sm:$0xf]
  %v23 = vld [vmem:[%s1] sm:$0xf]
  %v24 = vld [vmem:[%s1 + $0x4] sm:$0xf]
  %v25 = vld [vmem:[%s1 + $0x8] sm:$0xf]
  %v26 = vld [vmem:[%s1 + $0xc] sm:$0xf]
  %v27 = vld [vmem:[%s2] sm:$0xff]
  %v28 = vld [vmem:[%s2 + $0x8] sm:$0xff]
  %v29 = vld [vmem:[%s2 + $0x10] sm:$0xff]
  %v30 = vld [vmem:[%s2 + $0x18] sm:$0xff]
  %v31 = vld [vmem:[%s2 + $0x20] sm:$0xff]
  %v32 = vld [vmem:[%s2 + $0x28] sm:$0xff]
  %v33 = vld [vmem:[%s2 + $0x30] sm:$0xff]
  %v34 = vld [vmem:[%s2 + $0x38] sm:$0xff]
  %36 = vset.pattern.permute.xlu0 0
  %37 = vperm.xlu0 %36, %v27
  %v38 = vpop.permute.xlu0 %37
  %41 = vset.pattern.permute.xlu0 0
  %42 = vperm.xlu0 %41, %v28
  %v43 = vpop.permute.xlu0 %42
  %46 = vset.pattern.permute.xlu0 0
  %47 = vperm.xlu0 %46, %v29
  %v48 = vpop.permute.xlu0 %47
  %51 = vset.pattern.permute.xlu0 0
  %52 = vperm.xlu0 %51, %v30
  %v53 = vpop.permute.xlu0 %52
  %56 = vset.pattern.permute.xlu0 0
  %57 = vperm.xlu0 %56, %v31
  %v58 = vpop.permute.xlu0 %57
  %61 = vset.pattern.permute.xlu0 0
  %62 = vperm.xlu0 %61, %v32
  %v63 = vpop.permute.xlu0 %62
  %66 = vset.pattern.permute.xlu0 0
  %67 = vperm.xlu0 %66, %v33
  %v68 = vpop.permute.xlu0 %67
  %71 = vset.pattern.permute.xlu0 0
  %72 = vperm.xlu0 %71, %v34
  %v73 = vpop.permute.xlu0 %72
  %v83 = vunpack.c.l.b16 %v15
  %v84 = vunpack.c.l.b16 %v16
  %v85 = vunpack.c.l.b16 %v17
  %v86 = vunpack.c.l.b16 %v18
  %v87 = vunpack.c.l.b16 %v19
  %v88 = vunpack.c.l.b16 %v20
  %v89 = vunpack.c.l.b16 %v21
  %v90 = vunpack.c.l.b16 %v22
  %v91 = vpack.c.b16 %v84, %v83
  %v92 = vpack.c.b16 %v86, %v85
  %v93 = vpack.c.b16 %v88, %v87
  %v94 = vpack.c.b16 %v90, %v89
  %v99 = vunpack.c.l.b16 %v23
  %v100 = vunpack.c.l.b16 %v24
  %v101 = vunpack.c.l.b16 %v25
  %v102 = vunpack.c.l.b16 %v26
  %v103 = vpack.c.b16 %v100, %v99
  %v104 = vpack.c.b16 %v102, %v101
  %vm107 = vcmask 261120
  %v109 = vsel %vm107, %v91, 0
  %v112 = vsel %vm107, %v92, 0
  %v115 = vsel %vm107, %v93, 0
  %v118 = vsel %vm107, %v94, 0
  %120 = vmatpush.bf16.msra.mxu0 0
  %121 = vmatpush.bf16.msra.mxu0 0
  %122 = vmatpush.bf16.msra.mxu0 0
  %123 = vmatpush.bf16.msra.mxu0 0
  %124 = vmatpush.bf16.msra.mxu0 0
  %125 = vmatpush.bf16.msra.mxu0 0
  %126 = vmatpush.bf16.msra.mxu0 %v104
  %127 = vmatpush.bf16.msra.mxu0 %v103
  %128 = vmatmul.bf16.gmra.mxu0 %v109
  %v129 = vpop.f32.mrf.mxu0
  %v130 = vadd.f32 %v38, %v129
  %v131 = vpop.f32.mrf.mxu0
  %v132 = vadd.f32 %v43, %v131
  %133 = vmatmul.bf16.gmra.mxu0 %v112
  %v134 = vpop.f32.mrf.mxu0
  %v135 = vadd.f32 %v48, %v134
  %v136 = vpop.f32.mrf.mxu0
  %v137 = vadd.f32 %v53, %v136
  %138 = vmatmul.bf16.gmra.mxu0 %v115
  %v139 = vpop.f32.mrf.mxu0
  %v140 = vadd.f32 %v58, %v139
  %v141 = vpop.f32.mrf.mxu0
  %v142 = vadd.f32 %v63, %v141
  %143 = vmatmul.bf16.gmra.mxu0 %v118
  %v144 = vpop.f32.mrf.mxu0
  %v145 = vadd.f32 %v68, %v144
  %v146 = vpop.f32.mrf.mxu0
  %v147 = vadd.f32 %v73, %v146
  %148 = vdwg.mxu0
  %v149 = vpack.c.bf16 %v130, %v130
  %v150 = vpack.c.bf16 %v132, %v132
  %v151 = vpack.c.bf16 %v135, %v135
  %v152 = vpack.c.bf16 %v137, %v137
  %v153 = vpack.c.bf16 %v140, %v140
  %v154 = vpack.c.bf16 %v142, %v142
  %v155 = vpack.c.bf16 %v145, %v145
  %v156 = vpack.c.bf16 %v147, %v147
  %vm157 = vcmask 257024
  %158 = vst.msk [vmem:[%s3] sm:$0xf] %vm157, %v149
  %159 = vst.msk [vmem:[%s3 + $0x4] sm:$0xf] %vm157, %v150
  %160 = vst.msk [vmem:[%s3 + $0x8] sm:$0xf] %vm157, %v151
  %161 = vst.msk [vmem:[%s3 + $0xc] sm:$0xf] %vm157, %v152
  %162 = vst.msk [vmem:[%s3 + $0x10] sm:$0xf] %vm157, %v153
  %163 = vst.msk [vmem:[%s3 + $0x14] sm:$0xf] %vm157, %v154
  %164 = vst.msk [vmem:[%s3 + $0x18] sm:$0xf] %vm157, %v155
  %165 = vst.msk [vmem:[%s3 + $0x1c] sm:$0xf] %vm157, %v156
  // Predicated region
  $region14: #{generator3_forward.27} parent=0 // pred_check
    _
  $region15: #{generator3_forward.27} parent=0 // pred_check_branch
    %167 = sbr.rel (0) target = $region17
  $region16: #{generator3_forward.27} parent=0 // pred_region
    _
  $region17: #{generator3_forward.27} parent=0 // pred_fallthru
    _
  // Predicated region
  $region18: #{generator3_forward.27} parent=0 // pred_check
    _
  $region19: #{generator3_forward.27} parent=0 // pred_check_branch
    %169 = sbr.rel (0) target = $region21
  $region20: #{generator3_forward.27} parent=0 // pred_region
    _
  $region21: #{generator3_forward.27} parent=0 // pred_fallthru
    _

// kernel: generator3_forward.26
$region0: #{generator3_forward.26}
  #allocation0 [shape = 'u32[]', space=smem, size = 0x4, offset = 0x4, fixed_abs, tag = 'smem constant byte address 0x4 - core index']
  #allocation1 [shape = 'u32[72,128]{1,0:T(1,128)}', space=vmem, size = 0x9000, scoped, tag = 'internal scratch']
  %s0 = inlined_call_operand.vmem [shape: bf16[32,288], index: 0, kind: input, shape index: {}]
  %s1 = inlined_call_operand.vmem [shape: bf16[288,32], index: 1, kind: input, shape index: {}]
  %s2 = inlined_call_operand.vmem [shape: f32[32,1], index: 2, kind: input, shape index: {}]
  %s3 = inlined_call_operand.vmem [shape: bf16[32,32], index: 3, kind: output, shape index: {}]
  %s4 = sld [smem:[#allocation0]]
  $region22: #{generator3_forward.26} parent=0
    _
  %s6 = ssub.s32 1, %s4
  %s7 = scalar_select 0, %s6, %s4
  // Predicated region
  $region2: #{generator3_forward.26} parent=0 // pred_check
    _
  $region3: #{generator3_forward.26} parent=0 // pred_check_branch
    %9 = sbr.rel (0) target = $region5
  $region4: #{generator3_forward.26} parent=0 // pred_region
    _
  $region5: #{generator3_forward.26} parent=0 // pred_fallthru
    _
  // Predicated region
  $region6: #{generator3_forward.26} parent=0 // pred_check
    _
  $region7: #{generator3_forward.26} parent=0 // pred_check_branch
    %11 = sbr.rel (0) target = $region9
  $region8: #{generator3_forward.26} parent=0 // pred_region
    _
  $region9: #{generator3_forward.26} parent=0 // pred_fallthru
    _
  // Predicated region
  $region10: #{generator3_forward.26} parent=0 // pred_check
    _
  $region11: #{generator3_forward.26} parent=0 // pred_check_branch
    %13 = sbr.rel (0) target = $region13
  $region12: #{generator3_forward.26} parent=0 // pred_region
    _
  $region13: #{generator3_forward.26} parent=0 // pred_fallthru
    _
  %v15 = vld [vmem:[%s0] sm:$0xff]
  %v16 = vld [vmem:[%s0 + $0x8] sm:$0xf]
  %v17 = vld [vmem:[%s0 + $0xc] sm:$0xff]
  %v18 = vld [vmem:[%s0 + $0x14] sm:$0xf]
  %v19 = vld [vmem:[%s0 + $0x18] sm:$0xff]
  %v20 = vld [vmem:[%s0 + $0x20] sm:$0xf]
  %v21 = vld [vmem:[%s0 + $0x24] sm:$0xff]
  %v22 = vld [vmem:[%s0 + $0x2c] sm:$0xf]
  %v23 = vld [vmem:[%s1] sm:$0xf]
  %v24 = vld [vmem:[%s1 + $0x4] sm:$0xf]
  %v25 = vld [vmem:[%s1 + $0x8] sm:$0xf]
  %v26 = vld [vmem:[%s1 + $0xc] sm:$0xf]
  %v27 = vld [vmem:[%s1 + $0x10] sm:$0xf]
  %v28 = vld [vmem:[%s1 + $0x14] sm:$0xf]
  %v29 = vld [vmem:[%s1 + $0x18] sm:$0xf]
  %v30 = vld [vmem:[%s1 + $0x1c] sm:$0xf]
  %v31 = vld [vmem:[%s1 + $0x20] sm:$0xf]
  %v32 = vld [vmem:[%s1 + $0x24] sm:$0xf]
  %v33 = vld [vmem:[%s1 + $0x28] sm:$0xf]
  %v34 = vld [vmem:[%s1 + $0x2c] sm:$0xf]
  %v35 = vld [vmem:[%s1 + $0x30] sm:$0xf]
  %v36 = vld [vmem:[%s1 + $0x34] sm:$0xf]
  %v37 = vld [vmem:[%s1 + $0x38] sm:$0xf]
  %v38 = vld [vmem:[%s1 + $0x3c] sm:$0xf]
  %v39 = vld [vmem:[%s1 + $0x40] sm:$0xf]
  %v40 = vld [vmem:[%s1 + $0x44] sm:$0xf]
  %v41 = vld [vmem:[%s1 + $0x48] sm:$0xf]
  %v42 = vld [vmem:[%s1 + $0x4c] sm:$0xf]
  %v43 = vld [vmem:[%s1 + $0x50] sm:$0xf]
  %v44 = vld [vmem:[%s1 + $0x54] sm:$0xf]
  %v45 = vld [vmem:[%s1 + $0x58] sm:$0xf]
  %v46 = vld [vmem:[%s1 + $0x5c] sm:$0xf]
  %v47 = vld [vmem:[%s1 + $0x60] sm:$0xf]
  %v48 = vld [vmem:[%s1 + $0x64] sm:$0xf]
  %v49 = vld [vmem:[%s1 + $0x68] sm:$0xf]
  %v50 = vld [vmem:[%s1 + $0x6c] sm:$0xf]
  %v51 = vld [vmem:[%s1 + $0x70] sm:$0xf]
  %v52 = vld [vmem:[%s1 + $0x74] sm:$0xf]
  %v53 = vld [vmem:[%s1 + $0x78] sm:$0xf]
  %v54 = vld [vmem:[%s1 + $0x7c] sm:$0xf]
  %v55 = vld [vmem:[%s1 + $0x80] sm:$0xf]
  %v56 = vld [vmem:[%s1 + $0x84] sm:$0xf]
  %v57 = vld [vmem:[%s1 + $0x88] sm:$0xf]
  %v58 = vld [vmem:[%s1 + $0x8c] sm:$0xf]
  %v59 = vld [vmem:[%s2] sm:$0xff]
  %v60 = vld [vmem:[%s2 + $0x8] sm:$0xff]
  %v61 = vld [vmem:[%s2 + $0x10] sm:$0xff]
  %v62 = vld [vmem:[%s2 + $0x18] sm:$0xff]
  %64 = vset.pattern.permute.xlu0 0
  %65 = vperm.xlu0 %64, %v59
  %v66 = vpop.permute.xlu0 %65
  %69 = vset.pattern.permute.xlu0 0
  %70 = vperm.xlu0 %69, %v60
  %v71 = vpop.permute.xlu0 %70
  %74 = vset.pattern.permute.xlu0 0
  %75 = vperm.xlu0 %74, %v61
  %v76 = vpop.permute.xlu0 %75
  %79 = vset.pattern.permute.xlu0 0
  %80 = vperm.xlu0 %79, %v62
  %v81 = vpop.permute.xlu0 %80
  %v91 = vunpack.c.l.b16 %v15
  %v92 = vunpack.c.h.b16 %v15
  %v93 = vunpack.c.l.b16 %v16
  %v94 = vunpack.c.l.b16 %v17
  %v95 = vunpack.c.h.b16 %v17
  %v96 = vunpack.c.l.b16 %v18
  %v97 = vunpack.c.l.b16 %v19
  %v98 = vunpack.c.h.b16 %v19
  %v99 = vunpack.c.l.b16 %v20
  %v100 = vunpack.c.l.b16 %v21
  %v101 = vunpack.c.h.b16 %v21
  %v102 = vunpack.c.l.b16 %v22
  %v103 = vpack.c.b16 %v94, %v91
  %v104 = vpack.c.b16 %v95, %v92
  %v105 = vpack.c.b16 %v96, %v93
  %v106 = vpack.c.b16 %v100, %v97
  %v107 = vpack.c.b16 %v101, %v98
  %v108 = vpack.c.b16 %v102, %v99
  %v149 = vunpack.c.l.b16 %v23
  %v150 = vunpack.c.l.b16 %v24
  %v151 = vunpack.c.l.b16 %v25
  %v152 = vunpack.c.l.b16 %v26
  %v153 = vunpack.c.l.b16 %v27
  %v154 = vunpack.c.l.b16 %v28
  %v155 = vunpack.c.l.b16 %v29
  %v156 = vunpack.c.l.b16 %v30
  %v157 = vunpack.c.l.b16 %v31
  %v158 = vunpack.c.l.b16 %v32
  %v159 = vunpack.c.l.b16 %v33
  %v160 = vunpack.c.l.b16 %v34
  %v161 = vunpack.c.l.b16 %v35
  %v162 = vunpack.c.l.b16 %v36
  %v163 = vunpack.c.l.b16 %v37
  %v164 = vunpack.c.l.b16 %v38
  %v165 = vunpack.c.l.b16 %v39
  %v166 = vunpack.c.l.b16 %v40
  %v167 = vunpack.c.l.b16 %v41
  %v168 = vunpack.c.l.b16 %v42
  %v169 = vunpack.c.l.b16 %v43
  %v170 = vunpack.c.l.b16 %v44
  %v171 = vunpack.c.l.b16 %v45
  %v172 = vunpack.c.l.b16 %v46
  %v173 = vunpack.c.l.b16 %v47
  %v174 = vunpack.c.l.b16 %v48
  %v175 = vunpack.c.l.b16 %v49
  %v176 = vunpack.c.l.b16 %v50
  %v177 = vunpack.c.l.b16 %v51
  %v178 = vunpack.c.l.b16 %v52
  %v179 = vunpack.c.l.b16 %v53
  %v180 = vunpack.c.l.b16 %v54
  %v181 = vunpack.c.l.b16 %v55
  %v182 = vunpack.c.l.b16 %v56
  %v183 = vunpack.c.l.b16 %v57
  %v184 = vunpack.c.l.b16 %v58
  %v185 = vpack.c.b16 %v150, %v149
  %v186 = vpack.c.b16 %v152, %v151
  %v187 = vpack.c.b16 %v154, %v153
  %v188 = vpack.c.b16 %v156, %v155
  %v189 = vpack.c.b16 %v158, %v157
  %v190 = vpack.c.b16 %v160, %v159
  %v191 = vpack.c.b16 %v162, %v161
  %v192 = vpack.c.b16 %v164, %v163
  %v193 = vpack.c.b16 %v166, %v165
  %v194 = vpack.c.b16 %v168, %v167
  %v195 = vpack.c.b16 %v170, %v169
  %v196 = vpack.c.b16 %v172, %v171
  %v197 = vpack.c.b16 %v174, %v173
  %v198 = vpack.c.b16 %v176, %v175
  %v199 = vpack.c.b16 %v178, %v177
  %v200 = vpack.c.b16 %v180, %v179
  %v201 = vpack.c.b16 %v182, %v181
  %v202 = vpack.c.b16 %v184, %v183
  %vm221 = vcmask 261120
  %v223 = vsel %vm221, %v105, 0
  %v226 = vsel %vm221, %v108, 0
  %228 = vmatpush.bf16.msra.mxu0 %v192
  %229 = vmatpush.bf16.msra.mxu0 %v191
  %230 = vmatpush.bf16.msra.mxu0 %v190
  %231 = vmatpush.bf16.msra.mxu0 %v189
  %232 = vmatpush.bf16.msra.mxu0 %v188
  %233 = vmatpush.bf16.msra.mxu0 %v187
  %234 = vmatpush.bf16.msra.mxu0 %v186
  %235 = vmatpush.bf16.msra.mxu0 %v185
  %236 = vmatmul.bf16.gmra.mxu0 %v103
  %v237 = vpop.f32.mrf.mxu0
  %v238 = vadd.f32 %v66, %v237
  %v239 = vpop.f32.mrf.mxu0
  %v240 = vadd.f32 %v71, %v239
  %241 = vmatmul.bf16.gmra.mxu0 %v106
  %v242 = vpop.f32.mrf.mxu0
  %v243 = vadd.f32 %v76, %v242
  %v244 = vpop.f32.mrf.mxu0
  %v245 = vadd.f32 %v81, %v244
  %246 = vdwg.mxu0
  %247 = vmatpush.bf16.msra.mxu0 %v200
  %248 = vmatpush.bf16.msra.mxu0 %v199
  %249 = vmatpush.bf16.msra.mxu0 %v198
  %250 = vmatpush.bf16.msra.mxu0 %v197
  %251 = vmatpush.bf16.msra.mxu0 %v196
  %252 = vmatpush.bf16.msra.mxu0 %v195
  %253 = vmatpush.bf16.msra.mxu0 %v194
  %254 = vmatpush.bf16.msra.mxu0 %v193
  %255 = vmatmul.bf16.gmra.mxu0 %v104
  %v256 = vpop.f32.mrf.mxu0
  %v257 = vadd.f32 %v238, %v256
  %v258 = vpop.f32.mrf.mxu0
  %v259 = vadd.f32 %v240, %v258
  %260 = vmatmul.bf16.gmra.mxu0 %v107
  %v261 = vpop.f32.mrf.mxu0
  %v262 = vadd.f32 %v243, %v261
  %v263 = vpop.f32.mrf.mxu0
  %v264 = vadd.f32 %v245, %v263
  %265 = vdwg.mxu0
  %266 = vmatpush.bf16.msra.mxu0 0
  %267 = vmatpush.bf16.msra.mxu0 0
  %268 = vmatpush.bf16.msra.mxu0 0
  %269 = vmatpush.bf16.msra.mxu0 0
  %270 = vmatpush.bf16.msra.mxu0 0
  %271 = vmatpush.bf16.msra.mxu0 0
  %272 = vmatpush.bf16.msra.mxu0 %v202
  %273 = vmatpush.bf16.msra.mxu0 %v201
  %274 = vmatmul.bf16.gmra.mxu0 %v223
  %v275 = vpop.f32.mrf.mxu0
  %v276 = vadd.f32 %v257, %v275
  %v277 = vpop.f32.mrf.mxu0
  %v278 = vadd.f32 %v259, %v277
  %279 = vmatmul.bf16.gmra.mxu0 %v226
  %v280 = vpop.f32.mrf.mxu0
  %v281 = vadd.f32 %v262, %v280
  %v282 = vpop.f32.mrf.mxu0
  %v283 = vadd.f32 %v264, %v282
  %284 = vdwg.mxu0
  %v285 = vmax.f32 %v276, 0.0
  %v286 = vmax.f32 %v278, 0.0
  %v287 = vmax.f32 %v281, 0.0
  %v288 = vmax.f32 %v283, 0.0
  %v289 = vpack.c.bf16 %v285, %v285
  %v290 = vpack.c.bf16 %v286, %v286
  %v291 = vpack.c.bf16 %v287, %v287
  %v292 = vpack.c.bf16 %v288, %v288
  %vm293 = vcmask 257024
  %294 = vst.msk [vmem:[%s3] sm:$0xf] %vm293, %v289
  %295 = vst.msk [vmem:[%s3 + $0x4] sm:$0xf] %vm293, %v290
  %296 = vst.msk [vmem:[%s3 + $0x8] sm:$0xf] %vm293, %v291
  %297 = vst.msk [vmem:[%s3 + $0xc] sm:$0xf] %vm293, %v292
  // Predicated region
  $region14: #{generator3_forward.26} parent=0 // pred_check
    _
  $region15: #{generator3_forward.26} parent=0 // pred_check_branch
    %299 = sbr.rel (0) target = $region17
  $region16: #{generator3_forward.26} parent=0 // pred_region
    _
  $region17: #{generator3_forward.26} parent=0 // pred_fallthru
    _
  // Predicated region
  $region18: #{generator3_forward.26} parent=0 // pred_check
    _
  $region19: #{generator3_forward.26} parent=0 // pred_check_branch
    %301 = sbr.rel (0) target = $region21
  $region20: #{generator3_forward.26} parent=0 // pred_region
    _
  $region21: #{generator3_forward.26} parent=0 // pred_fallthru
    _

// kernel: generator3_forward.29
$region0: #{generator3_forward.29}
  #allocation0 [shape = 'u32[]', space=smem, size = 0x4, offset = 0x4, fixed_abs, tag = 'smem constant byte address 0x4 - core index']
  #allocation1 [shape = 'u32[72,128]{1,0:T(1,128)}', space=vmem, size = 0x9000, scoped, tag = 'internal scratch']
  %s0 = inlined_call_operand.vmem [shape: bf16[8,216], index: 0, kind: input, shape index: {}]
  %s1 = inlined_call_operand.vmem [shape: bf16[216,128], index: 1, kind: input, shape index: {}]
  %s2 = inlined_call_operand.vmem [shape: f32[8,1], index: 2, kind: input, shape index: {}]
  %s3 = inlined_call_operand.vmem [shape: bf16[8,128], index: 3, kind: output, shape index: {}]
  %s4 = sld [smem:[#allocation0]]
  $region22: #{generator3_forward.29} parent=0
    _
  %s6 = ssub.s32 1, %s4
  %s7 = scalar_select 0, %s6, %s4
  // Predicated region
  $region2: #{generator3_forward.29} parent=0 // pred_check
    _
  $region3: #{generator3_forward.29} parent=0 // pred_check_branch
    %9 = sbr.rel (0) target = $region5
  $region4: #{generator3_forward.29} parent=0 // pred_region
    _
  $region5: #{generator3_forward.29} parent=0 // pred_fallthru
    _
  // Predicated region
  $region6: #{generator3_forward.29} parent=0 // pred_check
    _
  $region7: #{generator3_forward.29} parent=0 // pred_check_branch
    %11 = sbr.rel (0) target = $region9
  $region8: #{generator3_forward.29} parent=0 // pred_region
    _
  $region9: #{generator3_forward.29} parent=0 // pred_fallthru
    _
  // Predicated region
  $region10: #{generator3_forward.29} parent=0 // pred_check
    _
  $region11: #{generator3_forward.29} parent=0 // pred_check_branch
    %13 = sbr.rel (0) target = $region13
  $region12: #{generator3_forward.29} parent=0 // pred_region
    _
  $region13: #{generator3_forward.29} parent=0 // pred_fallthru
    _
  %v15 = vld [vmem:[%s0] sm:$0xff]
  %v16 = vld [vmem:[%s1] sm:$0xf]
  %v17 = vld [vmem:[%s1 + $0x4] sm:$0xf]
  %v18 = vld [vmem:[%s1 + $0x8] sm:$0xf]
  %v19 = vld [vmem:[%s1 + $0xc] sm:$0xf]
  %v20 = vld [vmem:[%s1 + $0x10] sm:$0xf]
  %v21 = vld [vmem:[%s1 + $0x14] sm:$0xf]
  %v22 = vld [vmem:[%s1 + $0x18] sm:$0xf]
  %v23 = vld [vmem:[%s1 + $0x1c] sm:$0xf]
  %v24 = vld [vmem:[%s1 + $0x20] sm:$0xf]
  %v25 = vld [vmem:[%s1 + $0x24] sm:$0xf]
  %v26 = vld [vmem:[%s1 + $0x28] sm:$0xf]
  %v27 = vld [vmem:[%s1 + $0x2c] sm:$0xf]
  %v28 = vld [vmem:[%s1 + $0x30] sm:$0xf]
  %v29 = vld [vmem:[%s1 + $0x34] sm:$0xf]
  %v30 = vld [vmem:[%s1 + $0x38] sm:$0xf]
  %v31 = vld [vmem:[%s1 + $0x3c] sm:$0xf]
  %v32 = vld [vmem:[%s1 + $0x40] sm:$0xf]
  %v33 = vld [vmem:[%s1 + $0x44] sm:$0xf]
  %v34 = vld [vmem:[%s1 + $0x48] sm:$0xf]
  %v35 = vld [vmem:[%s1 + $0x4c] sm:$0xf]
  %v36 = vld [vmem:[%s1 + $0x50] sm:$0xf]
  %v37 = vld [vmem:[%s1 + $0x54] sm:$0xf]
  %v38 = vld [vmem:[%s1 + $0x58] sm:$0xf]
  %v39 = vld [vmem:[%s1 + $0x5c] sm:$0xf]
  %v40 = vld [vmem:[%s1 + $0x60] sm:$0xf]
  %v41 = vld [vmem:[%s1 + $0x64] sm:$0xf]
  %v42 = vld [vmem:[%s1 + $0x68] sm:$0xf]
  %v43 = vld [vmem:[%s2] sm:$0xff]
  %45 = vset.pattern.permute.xlu0 0
  %46 = vperm.xlu0 %45, %v43
  %v47 = vpop.permute.xlu0 %46
  %v50 = vunpack.c.l.b16 %v15
  %v51 = vunpack.c.h.b16 %v15
  %v52 = vpack.c.b16 %v50, %v50
  %v53 = vpack.c.b16 %v51, %v51
  %v82 = vunpack.c.l.b16 %v16
  %v83 = vunpack.c.l.b16 %v17
  %v84 = vunpack.c.l.b16 %v18
  %v85 = vunpack.c.l.b16 %v19
  %v86 = vunpack.c.l.b16 %v20
  %v87 = vunpack.c.l.b16 %v21
  %v88 = vunpack.c.l.b16 %v22
  %v89 = vunpack.c.l.b16 %v23
  %v90 = vunpack.c.l.b16 %v24
  %v91 = vunpack.c.l.b16 %v25
  %v92 = vunpack.c.l.b16 %v26
  %v93 = vunpack.c.l.b16 %v27
  %v94 = vunpack.c.l.b16 %v28
  %v95 = vunpack.c.l.b16 %v29
  %v96 = vunpack.c.l.b16 %v30
  %v97 = vunpack.c.l.b16 %v31
  %v98 = vunpack.c.l.b16 %v32
  %v99 = vunpack.c.l.b16 %v33
  %v100 = vunpack.c.l.b16 %v34
  %v101 = vunpack.c.l.b16 %v35
  %v102 = vunpack.c.l.b16 %v36
  %v103 = vunpack.c.l.b16 %v37
  %v104 = vunpack.c.l.b16 %v38
  %v105 = vunpack.c.l.b16 %v39
  %v106 = vunpack.c.l.b16 %v40
  %v107 = vunpack.c.l.b16 %v41
  %v108 = vunpack.c.l.b16 %v42
  %v109 = vpack.c.b16 %v83, %v82
  %v110 = vpack.c.b16 %v85, %v84
  %v111 = vpack.c.b16 %v87, %v86
  %v112 = vpack.c.b16 %v89, %v88
  %v113 = vpack.c.b16 %v91, %v90
  %v114 = vpack.c.b16 %v93, %v92
  %v115 = vpack.c.b16 %v95, %v94
  %v116 = vpack.c.b16 %v97, %v96
  %v117 = vpack.c.b16 %v99, %v98
  %v118 = vpack.c.b16 %v101, %v100
  %v119 = vpack.c.b16 %v103, %v102
  %v120 = vpack.c.b16 %v105, %v104
  %v121 = vpack.c.b16 %v107, %v106
  %v122 = vpack.c.b16 %v108, %v108
  %vm136 = vcmask 719872
  %v138 = vsel %vm136, %v53, 0
  %vm140 = vcmask 1043456
  %v142 = vsel %vm140, %v122, 0
  %144 = vmatpush.bf16.msra.mxu0 %v116
  %145 = vmatpush.bf16.msra.mxu0 %v115
  %146 = vmatpush.bf16.msra.mxu0 %v114
  %147 = vmatpush.bf16.msra.mxu0 %v113
  %148 = vmatpush.bf16.msra.mxu0 %v112
  %149 = vmatpush.bf16.msra.mxu0 %v111
  %150 = vmatpush.bf16.msra.mxu0 %v110
  %151 = vmatpush.bf16.msra.mxu0 %v109
  %152 = vmatmul.bf16.gmra.mxu0 %v52
  %v153 = vpop.f32.mrf.mxu0
  %v154 = vadd.f32 %v47, %v153
  %v155 = vpop.f32.mrf.mxu0
  %156 = vdwg.mxu0
  %157 = vmatpush.bf16.msra.mxu0 0
  %158 = vmatpush.bf16.msra.mxu0 0
  %159 = vmatpush.bf16.msra.mxu0 %v142
  %160 = vmatpush.bf16.msra.mxu0 %v121
  %161 = vmatpush.bf16.msra.mxu0 %v120
  %162 = vmatpush.bf16.msra.mxu0 %v119
  %163 = vmatpush.bf16.msra.mxu0 %v118
  %164 = vmatpush.bf16.msra.mxu0 %v117
  %165 = vmatmul.bf16.gmra.mxu0 %v138
  %v166 = vpop.f32.mrf.mxu0
  %v167 = vadd.f32 %v154, %v166
  %v168 = vpop.f32.mrf.mxu0
  %169 = vdwg.mxu0
  %v170 = vmax.f32 %v167, 0.0
  %v171 = vpack.c.bf16 %v170, %v170
  %172 = vst [vmem:[%s3] sm:$0xf] %v171
  // Predicated region
  $region14: #{generator3_forward.29} parent=0 // pred_check
    _
  $region15: #{generator3_forward.29} parent=0 // pred_check_branch
    %174 = sbr.rel (0) target = $region17
  $region16: #{generator3_forward.29} parent=0 // pred_region
    _
  $region17: #{generator3_forward.29} parent=0 // pred_fallthru
    _
  // Predicated region
  $region18: #{generator3_forward.29} parent=0 // pred_check
    _
  $region19: #{generator3_forward.29} parent=0 // pred_check_branch
    %176 = sbr.rel (0) target = $region21
  $region20: #{generator3_forward.29} parent=0 // pred_region
    _
  $region21: #{generator3_forward.29} parent=0 // pred_fallthru
    _

// kernel: generator3_forward.30
$region0: #{generator3_forward.30}
  #allocation0 [shape = 'u32[]', space=smem, size = 0x4, offset = 0x4, fixed_abs, tag = 'smem constant byte address 0x4 - core index']
  #allocation1 [shape = 'u32[72,128]{1,0:T(1,128)}', space=vmem, size = 0x9000, scoped, tag = 'internal scratch']
  %s0 = inlined_call_operand.vmem [shape: bf16[8,72], index: 0, kind: input, shape index: {}]
  %s1 = inlined_call_operand.vmem [shape: bf16[72,128], index: 1, kind: input, shape index: {}]
  %s2 = inlined_call_operand.vmem [shape: f32[8,1], index: 2, kind: input, shape index: {}]
  %s3 = inlined_call_operand.vmem [shape: bf16[8,128], index: 3, kind: output, shape index: {}]
  %s4 = sld [smem:[#allocation0]]
  $region22: #{generator3_forward.30} parent=0
    _
  %s6 = ssub.s32 1, %s4
  %s7 = scalar_select 0, %s6, %s4
  // Predicated region
  $region2: #{generator3_forward.30} parent=0 // pred_check
    _
  $region3: #{generator3_forward.30} parent=0 // pred_check_branch
    %9 = sbr.rel (0) target = $region5
  $region4: #{generator3_forward.30} parent=0 // pred_region
    _
  $region5: #{generator3_forward.30} parent=0 // pred_fallthru
    _
  // Predicated region
  $region6: #{generator3_forward.30} parent=0 // pred_check
    _
  $region7: #{generator3_forward.30} parent=0 // pred_check_branch
    %11 = sbr.rel (0) target = $region9
  $region8: #{generator3_forward.30} parent=0 // pred_region
    _
  $region9: #{generator3_forward.30} parent=0 // pred_fallthru
    _
  // Predicated region
  $region10: #{generator3_forward.30} parent=0 // pred_check
    _
  $region11: #{generator3_forward.30} parent=0 // pred_check_branch
    %13 = sbr.rel (0) target = $region13
  $region12: #{generator3_forward.30} parent=0 // pred_region
    _
  $region13: #{generator3_forward.30} parent=0 // pred_fallthru
    _
  %v15 = vld [vmem:[%s0] sm:$0xf]
  %v16 = vld [vmem:[%s1] sm:$0xf]
  %v17 = vld [vmem:[%s1 + $0x4] sm:$0xf]
  %v18 = vld [vmem:[%s1 + $0x8] sm:$0xf]
  %v19 = vld [vmem:[%s1 + $0xc] sm:$0xf]
  %v20 = vld [vmem:[%s1 + $0x10] sm:$0xf]
  %v21 = vld [vmem:[%s1 + $0x14] sm:$0xf]
  %v22 = vld [vmem:[%s1 + $0x18] sm:$0xf]
  %v23 = vld [vmem:[%s1 + $0x1c] sm:$0xf]
  %v24 = vld [vmem:[%s1 + $0x20] sm:$0xf]
  %v25 = vld [vmem:[%s2] sm:$0xff]
  %27 = vset.pattern.permute.xlu0 0
  %28 = vperm.xlu0 %27, %v25
  %v29 = vpop.permute.xlu0 %28
  %v40 = vunpack.c.l.b16 %v16
  %v41 = vunpack.c.l.b16 %v17
  %v42 = vunpack.c.l.b16 %v18
  %v43 = vunpack.c.l.b16 %v19
  %v44 = vunpack.c.l.b16 %v20
  %v45 = vunpack.c.l.b16 %v21
  %v46 = vunpack.c.l.b16 %v22
  %v47 = vunpack.c.l.b16 %v23
  %v48 = vunpack.c.l.b16 %v24
  %v49 = vpack.c.b16 %v41, %v40
  %v50 = vpack.c.b16 %v43, %v42
  %v51 = vpack.c.b16 %v45, %v44
  %v52 = vpack.c.b16 %v47, %v46
  %v53 = vpack.c.b16 %v48, %v48
  %vm58 = vcmask 588800
  %v60 = vsel %vm58, %v15, 0
  %vm62 = vcmask 1043456
  %v64 = vsel %vm62, %v53, 0
  %66 = vmatpush.bf16.msra.mxu0 0
  %67 = vmatpush.bf16.msra.mxu0 0
  %68 = vmatpush.bf16.msra.mxu0 0
  %69 = vmatpush.bf16.msra.mxu0 %v64
  %70 = vmatpush.bf16.msra.mxu0 %v52
  %71 = vmatpush.bf16.msra.mxu0 %v51
  %72 = vmatpush.bf16.msra.mxu0 %v50
  %73 = vmatpush.bf16.msra.mxu0 %v49
  %74 = vmatmul.bf16.gmra.mxu0 %v60
  %v75 = vpop.f32.mrf.mxu0
  %v76 = vadd.f32 %v29, %v75
  %v77 = vpop.f32.mrf.mxu0
  %78 = vdwg.mxu0
  %v79 = vmax.f32 %v76, 0.0
  %v80 = vpack.c.bf16 %v79, %v79
  %81 = vst [vmem:[%s3] sm:$0xf] %v80
  // Predicated region
  $region14: #{generator3_forward.30} parent=0 // pred_check
    _
  $region15: #{generator3_forward.30} parent=0 // pred_check_branch
    %83 = sbr.rel (0) target = $region17
  $region16: #{generator3_forward.30} parent=0 // pred_region
    _
  $region17: #{generator3_forward.30} parent=0 // pred_fallthru
    _
  // Predicated region
  $region18: #{generator3_forward.30} parent=0 // pred_check
    _
  $region19: #{generator3_forward.30} parent=0 // pred_check_branch
    %85 = sbr.rel (0) target = $region21
  $region20: #{generator3_forward.30} parent=0 // pred_region
    _
  $region21: #{generator3_forward.30} parent=0 // pred_fallthru
    _

// kernel: generator3_forward.31
$region0: #{generator3_forward.31}
  #allocation0 [shape = 'u32[]', space=smem, size = 0x4, offset = 0x4, fixed_abs, tag = 'smem constant byte address 0x4 - core index']
  #allocation1 [shape = 'u32[72,128]{1,0:T(1,128)}', space=vmem, size = 0x9000, scoped, tag = 'internal scratch']
  %s0 = inlined_call_operand.vmem [shape: bf16[16,8], index: 0, kind: input, shape index: {}]
  %s1 = inlined_call_operand.vmem [shape: bf16[8,128], index: 1, kind: input, shape index: {}]
  %s2 = inlined_call_operand.vmem [shape: f32[16,1], index: 2, kind: input, shape index: {}]
  %s3 = inlined_call_operand.vmem [shape: bf16[16,128], index: 3, kind: output, shape index: {}]
  %s4 = sld [smem:[#allocation0]]
  $region22: #{generator3_forward.31} parent=0
    _
  %s6 = ssub.s32 1, %s4
  %s7 = scalar_select 0, %s6, %s4
  // Predicated region
  $region2: #{generator3_forward.31} parent=0 // pred_check
    _
  $region3: #{generator3_forward.31} parent=0 // pred_check_branch
    %9 = sbr.rel (0) target = $region5
  $region4: #{generator3_forward.31} parent=0 // pred_region
    _
  $region5: #{generator3_forward.31} parent=0 // pred_fallthru
    _
  // Predicated region
  $region6: #{generator3_forward.31} parent=0 // pred_check
    _
  $region7: #{generator3_forward.31} parent=0 // pred_check_branch
    %11 = sbr.rel (0) target = $region9
  $region8: #{generator3_forward.31} parent=0 // pred_region
    _
  $region9: #{generator3_forward.31} parent=0 // pred_fallthru
    _
  // Predicated region
  $region10: #{generator3_forward.31} parent=0 // pred_check
    _
  $region11: #{generator3_forward.31} parent=0 // pred_check_branch
    %13 = sbr.rel (0) target = $region13
  $region12: #{generator3_forward.31} parent=0 // pred_region
    _
  $region13: #{generator3_forward.31} parent=0 // pred_fallthru
    _
  %v15 = vld [vmem:[%s0] sm:$0xf]
  %v16 = vld [vmem:[%s0 + $0x4] sm:$0xf]
  %v17 = vld [vmem:[%s1] sm:$0xf]
  %v18 = vld [vmem:[%s2] sm:$0xff]
  %v19 = vld [vmem:[%s2 + $0x8] sm:$0xff]
  %21 = vset.pattern.permute.xlu0 0
  %22 = vperm.xlu0 %21, %v18
  %v23 = vpop.permute.xlu0 %22
  %26 = vset.pattern.permute.xlu0 0
  %27 = vperm.xlu0 %26, %v19
  %v28 = vpop.permute.xlu0 %27
  %v32 = vunpack.c.l.b16 %v15
  %v33 = vunpack.c.l.b16 %v16
  %v34 = vpack.c.b16 %v33, %v32
  %vm35 = vcmask 64512
  %v37 = vsel %vm35, %v34, 0
  %vm39 = vcmask 1043456
  %v41 = vsel %vm39, %v17, 0
  %43 = vmatpush.bf16.msra.mxu0 0
  %44 = vmatpush.bf16.msra.mxu0 0
  %45 = vmatpush.bf16.msra.mxu0 0
  %46 = vmatpush.bf16.msra.mxu0 0
  %47 = vmatpush.bf16.msra.mxu0 0
  %48 = vmatpush.bf16.msra.mxu0 0
  %49 = vmatpush.bf16.msra.mxu0 0
  %50 = vmatpush.bf16.msra.mxu0 %v41
  %51 = vmatmul.bf16.gmra.mxu0 %v37
  %v52 = vpop.f32.mrf.mxu0
  %v53 = vadd.f32 %v23, %v52
  %v54 = vpop.f32.mrf.mxu0
  %v55 = vadd.f32 %v28, %v54
  %56 = vdwg.mxu0
  %v57 = vpack.c.bf16 %v53, %v53
  %v58 = vpack.c.bf16 %v55, %v55
  %59 = vst [vmem:[%s3] sm:$0xf] %v57
  %60 = vst [vmem:[%s3 + $0x4] sm:$0xf] %v58
  // Predicated region
  $region14: #{generator3_forward.31} parent=0 // pred_check
    _
  $region15: #{generator3_forward.31} parent=0 // pred_check_branch
    %62 = sbr.rel (0) target = $region17
  $region16: #{generator3_forward.31} parent=0 // pred_region
    _
  $region17: #{generator3_forward.31} parent=0 // pred_fallthru
    _
  // Predicated region
  $region18: #{generator3_forward.31} parent=0 // pred_check
    _
  $region19: #{generator3_forward.31} parent=0 // pred_check_branch
    %64 = sbr.rel (0) target = $region21
  $region20: #{generator3_forward.31} parent=0 // pred_region
    _
  $region21: #{generator3_forward.31} parent=0 // pred_fallthru
    _

// kernel: generator3_forward.33
$region0: #{generator3_forward.33}
  #allocation0 [shape = 'u32[]', space=smem, size = 0x4, offset = 0x4, fixed_abs, tag = 'smem constant byte address 0x4 - core index']
  #allocation1 [shape = 'u32[72,128]{1,0:T(1,128)}', space=vmem, size = 0x9000, scoped, tag = 'internal scratch']
  %s0 = inlined_call_operand.vmem [shape: bf16[4,72], index: 0, kind: input, shape index: {}]
  %s1 = inlined_call_operand.vmem [shape: bf16[72,512], index: 1, kind: input, shape index: {}]
  %s2 = inlined_call_operand.vmem [shape: f32[4,1], index: 2, kind: input, shape index: {}]
  %s3 = inlined_call_operand.vmem [shape: bf16[4,512], index: 3, kind: output, shape index: {}]
  %s4 = sld [smem:[#allocation0]]
  $region22: #{generator3_forward.33} parent=0
    _
  %s6 = ssub.s32 1, %s4
  %s7 = scalar_select 0, %s6, %s4
  // Predicated region
  $region2: #{generator3_forward.33} parent=0 // pred_check
    _
  $region3: #{generator3_forward.33} parent=0 // pred_check_branch
    %9 = sbr.rel (0) target = $region5
  $region4: #{generator3_forward.33} parent=0 // pred_region
    _
  $region5: #{generator3_forward.33} parent=0 // pred_fallthru
    _
  // Predicated region
  $region6: #{generator3_forward.33} parent=0 // pred_check
    _
  $region7: #{generator3_forward.33} parent=0 // pred_check_branch
    %11 = sbr.rel (0) target = $region9
  $region8: #{generator3_forward.33} parent=0 // pred_region
    _
  $region9: #{generator3_forward.33} parent=0 // pred_fallthru
    _
  // Predicated region
  $region10: #{generator3_forward.33} parent=0 // pred_check
    _
  $region11: #{generator3_forward.33} parent=0 // pred_check_branch
    %13 = sbr.rel (0) target = $region13
  $region12: #{generator3_forward.33} parent=0 // pred_region
    _
  $region13: #{generator3_forward.33} parent=0 // pred_fallthru
    _
  %v15 = vld [vmem:[%s0] sm:$0x3]
  %v16 = vld [vmem:[%s1] sm:$0xff]
  %v17 = vld [vmem:[%s1 + $0x8] sm:$0xff]
  %v18 = vld [vmem:[%s1 + $0x10] sm:$0xff]
  %v19 = vld [vmem:[%s1 + $0x18] sm:$0xff]
  %v20 = vld [vmem:[%s1 + $0x20] sm:$0xff]
  %v21 = vld [vmem:[%s1 + $0x28] sm:$0xff]
  %v22 = vld [vmem:[%s1 + $0x30] sm:$0xff]
  %v23 = vld [vmem:[%s1 + $0x38] sm:$0xff]
  %v24 = vld [vmem:[%s1 + $0x40] sm:$0xff]
  %v25 = vld [vmem:[%s1 + $0x48] sm:$0xff]
  %v26 = vld [vmem:[%s1 + $0x50] sm:$0xff]
  %v27 = vld [vmem:[%s1 + $0x58] sm:$0xff]
  %v28 = vld [vmem:[%s1 + $0x60] sm:$0xff]
  %v29 = vld [vmem:[%s1 + $0x68] sm:$0xff]
  %v30 = vld [vmem:[%s1 + $0x70] sm:$0xff]
  %v31 = vld [vmem:[%s1 + $0x78] sm:$0xff]
  %v32 = vld [vmem:[%s1 + $0x80] sm:$0xff]
  %v33 = vld [vmem:[%s1 + $0x88] sm:$0xff]
  %v34 = vld [vmem:[%s2] sm:$0xf]
  %36 = vset.pattern.permute.xlu0 0
  %37 = vperm.xlu0 %36, %v34
  %v38 = vpop.permute.xlu0 %37
  %v58 = vunpack.c.l.b16 %v16
  %v59 = vunpack.c.h.b16 %v16
  %v60 = vunpack.c.l.b16 %v17
  %v61 = vunpack.c.h.b16 %v17
  %v62 = vunpack.c.l.b16 %v18
  %v63 = vunpack.c.h.b16 %v18
  %v64 = vunpack.c.l.b16 %v19
  %v65 = vunpack.c.h.b16 %v19
  %v66 = vunpack.c.l.b16 %v20
  %v67 = vunpack.c.h.b16 %v20
  %v68 = vunpack.c.l.b16 %v21
  %v69 = vunpack.c.h.b16 %v21
  %v70 = vunpack.c.l.b16 %v22
  %v71 = vunpack.c.h.b16 %v22
  %v72 = vunpack.c.l.b16 %v23
  %v73 = vunpack.c.h.b16 %v23
  %v74 = vunpack.c.l.b16 %v24
  %v75 = vunpack.c.h.b16 %v24
  %v76 = vunpack.c.l.b16 %v25
  %v77 = vunpack.c.h.b16 %v25
  %v78 = vunpack.c.l.b16 %v26
  %v79 = vunpack.c.h.b16 %v26
  %v80 = vunpack.c.l.b16 %v27
  %v81 = vunpack.c.h.b16 %v27
  %v82 = vunpack.c.l.b16 %v28
  %v83 = vunpack.c.h.b16 %v28
  %v84 = vunpack.c.l.b16 %v29
  %v85 = vunpack.c.h.b16 %v29
  %v86 = vunpack.c.l.b16 %v30
  %v87 = vunpack.c.h.b16 %v30
  %v88 = vunpack.c.l.b16 %v31
  %v89 = vunpack.c.h.b16 %v31
  %v90 = vunpack.c.l.b16 %v32
  %v91 = vunpack.c.h.b16 %v32
  %v92 = vunpack.c.l.b16 %v33
  %v93 = vunpack.c.h.b16 %v33
  %v94 = vpack.c.b16 %v62, %v58
  %v95 = vpack.c.b16 %v63, %v59
  %v96 = vpack.c.b16 %v64, %v60
  %v97 = vpack.c.b16 %v65, %v61
  %v98 = vpack.c.b16 %v70, %v66
  %v99 = vpack.c.b16 %v71, %v67
  %v100 = vpack.c.b16 %v72, %v68
  %v101 = vpack.c.b16 %v73, %v69
  %v102 = vpack.c.b16 %v78, %v74
  %v103 = vpack.c.b16 %v79, %v75
  %v104 = vpack.c.b16 %v80, %v76
  %v105 = vpack.c.b16 %v81, %v77
  %v106 = vpack.c.b16 %v86, %v82
  %v107 = vpack.c.b16 %v87, %v83
  %v108 = vpack.c.b16 %v88, %v84
  %v109 = vpack.c.b16 %v89, %v85
  %v110 = vpack.c.b16 %v90, %v90
  %v111 = vpack.c.b16 %v91, %v91
  %v112 = vpack.c.b16 %v92, %v92
  %v113 = vpack.c.b16 %v93, %v93
  %vm130 = vcmask 588800
  %v132 = vsel %vm130, %v15, 0
  %vm134 = vcmask 1043456
  %v136 = vsel %vm134, %v110, 0
  %v139 = vsel %vm134, %v111, 0
  %v142 = vsel %vm134, %v112, 0
  %v145 = vsel %vm134, %v113, 0
  %147 = vmatpush.bf16.msra.mxu0 0
  %148 = vmatpush.bf16.msra.mxu0 0
  %149 = vmatpush.bf16.msra.mxu0 0
  %150 = vmatpush.bf16.msra.mxu0 %v136
  %151 = vmatpush.bf16.msra.mxu0 %v106
  %152 = vmatpush.bf16.msra.mxu0 %v102
  %153 = vmatpush.bf16.msra.mxu0 %v98
  %154 = vmatpush.bf16.msra.mxu0 %v94
  %155 = vmatmul.bf16.gmra.mxu0 %v132
  %v156 = vpop.f32.mrf.mxu0
  %v157 = vadd.f32 %v38, %v156
  %v158 = vpop.f32.mrf.mxu0
  %159 = vdwg.mxu0
  %160 = vmatpush.bf16.msra.mxu0 0
  %161 = vmatpush.bf16.msra.mxu0 0
  %162 = vmatpush.bf16.msra.mxu0 0
  %163 = vmatpush.bf16.msra.mxu0 %v139
  %164 = vmatpush.bf16.msra.mxu0 %v107
  %165 = vmatpush.bf16.msra.mxu0 %v103
  %166 = vmatpush.bf16.msra.mxu0 %v99
  %167 = vmatpush.bf16.msra.mxu0 %v95
  %168 = vmatmul.bf16.gmra.mxu0 %v132
  %v169 = vpop.f32.mrf.mxu0
  %v170 = vadd.f32 %v38, %v169
  %v171 = vpop.f32.mrf.mxu0
  %172 = vdwg.mxu0
  %173 = vmatpush.bf16.msra.mxu0 0
  %174 = vmatpush.bf16.msra.mxu0 0
  %175 = vmatpush.bf16.msra.mxu0 0
  %176 = vmatpush.bf16.msra.mxu0 %v142
  %177 = vmatpush.bf16.msra.mxu0 %v108
  %178 = vmatpush.bf16.msra.mxu0 %v104
  %179 = vmatpush.bf16.msra.mxu0 %v100
  %180 = vmatpush.bf16.msra.mxu0 %v96
  %181 = vmatmul.bf16.gmra.mxu0 %v132
  %v182 = vpop.f32.mrf.mxu0
  %v183 = vadd.f32 %v38, %v182
  %v184 = vpop.f32.mrf.mxu0
  %185 = vdwg.mxu0
  %186 = vmatpush.bf16.msra.mxu0 0
  %187 = vmatpush.bf16.msra.mxu0 0
  %188 = vmatpush.bf16.msra.mxu0 0
  %189 = vmatpush.bf16.msra.mxu0 %v145
  %190 = vmatpush.bf16.msra.mxu0 %v109
  %191 = vmatpush.bf16.msra.mxu0 %v105
  %192 = vmatpush.bf16.msra.mxu0 %v101
  %193 = vmatpush.bf16.msra.mxu0 %v97
  %194 = vmatmul.bf16.gmra.mxu0 %v132
  %v195 = vpop.f32.mrf.mxu0
  %v196 = vadd.f32 %v38, %v195
  %v197 = vpop.f32.mrf.mxu0
  %198 = vdwg.mxu0
  %v199 = vmax.f32 %v157, 0.0
  %v200 = vmax.f32 %v170, 0.0
  %v201 = vmax.f32 %v183, 0.0
  %v202 = vmax.f32 %v196, 0.0
  %v203 = vpack.c.bf16 %v200, %v199
  %v204 = vpack.c.bf16 %v202, %v201
  %v207 = vrot.slane %v203, 2
  %v208 = vrot.slane %v204, 4
  %v209 = vrot.slane %v204, 6
  %vm210 = vcmask 1041408
  %v213 = vsel %vm210, %v203, %v207
  %vm214 = vcmask 1045508
  %v217 = vsel %vm214, %v208, %v209
  %v218 = vsel %vm134, %v213, %v217
  %220 = vst [vmem:[%s3] sm:$0xff] %v218
  // Predicated region
  $region14: #{generator3_forward.33} parent=0 // pred_check
    _
  $region15: #{generator3_forward.33} parent=0 // pred_check_branch
    %222 = sbr.rel (0) target = $region17
  $region16: #{generator3_forward.33} parent=0 // pred_region
    _
  $region17: #{generator3_forward.33} parent=0 // pred_fallthru
    _
  // Predicated region
  $region18: #{generator3_forward.33} parent=0 // pred_check
    _
  $region19: #{generator3_forward.33} parent=0 // pred_check_branch
    %224 = sbr.rel (0) target = $region21
  $region20: #{generator3_forward.33} parent=0 // pred_region
    _
  $region21: #{generator3_forward.33} parent=0 // pred_fallthru
    _

// kernel: generator3_forward.35
$region0: #{generator3_forward.35}
  #allocation0 [shape = 'u32[]', space=smem, size = 0x4, offset = 0x4, fixed_abs, tag = 'smem constant byte address 0x4 - core index']
  #allocation1 [shape = 'u32[72,128]{1,0:T(1,128)}', space=vmem, size = 0x9000, scoped, tag = 'internal scratch']
  #allocation2 [shape = 'f32[1,1]{1,0:T(1,128)S(1)}', space=vmem, size = 0x200, scoped, tag = 'scoped memory for generator3_forward.35']
  %s0 = inlined_call_operand.vmem [shape: bf16[1,36], index: 0, kind: input, shape index: {}]
  %s1 = inlined_call_operand.vmem [shape: bf16[36,512], index: 1, kind: input, shape index: {}]
  %s2 = inlined_call_operand.<no memory space> [shape: f32[1,1], index: 2, kind: input, shape index: {}]
  %s3 = inlined_call_operand.vmem [shape: f32[1,512], index: 3, kind: output, shape index: {}]
  %s4 = sld [smem:[#allocation0]]
  $region22: #{generator3_forward.35} parent=0
    _
  %s6 = ssub.s32 1, %s4
  %s7 = scalar_select 0, %s6, %s4
  %v8 = vstv %s2
  %9 = vst [vmem:[#allocation2] sm:$0x1] %v8
  // Predicated region
  $region2: #{generator3_forward.35} parent=0 // pred_check
    _
  $region3: #{generator3_forward.35} parent=0 // pred_check_branch
    %11 = sbr.rel (0) target = $region5
  $region4: #{generator3_forward.35} parent=0 // pred_region
    _
  $region5: #{generator3_forward.35} parent=0 // pred_fallthru
    _
  // Predicated region
  $region6: #{generator3_forward.35} parent=0 // pred_check
    _
  $region7: #{generator3_forward.35} parent=0 // pred_check_branch
    %13 = sbr.rel (0) target = $region9
  $region8: #{generator3_forward.35} parent=0 // pred_region
    _
  $region9: #{generator3_forward.35} parent=0 // pred_fallthru
    _
  // Predicated region
  $region10: #{generator3_forward.35} parent=0 // pred_check
    _
  $region11: #{generator3_forward.35} parent=0 // pred_check_branch
    %15 = sbr.rel (0) target = $region13
  $region12: #{generator3_forward.35} parent=0 // pred_region
    _
  $region13: #{generator3_forward.35} parent=0 // pred_fallthru
    _
  %v17 = vld [vmem:[%s0] sm:$0x1]
  %v18 = vld [vmem:[%s1] sm:$0xff]
  %v19 = vld [vmem:[%s1 + $0x8] sm:$0xff]
  %v20 = vld [vmem:[%s1 + $0x10] sm:$0xff]
  %v21 = vld [vmem:[%s1 + $0x18] sm:$0xff]
  %v22 = vld [vmem:[%s1 + $0x20] sm:$0xff]
  %v23 = vld [vmem:[%s1 + $0x28] sm:$0xff]
  %v24 = vld [vmem:[%s1 + $0x30] sm:$0xff]
  %v25 = vld [vmem:[%s1 + $0x38] sm:$0xff]
  %v26 = vld [vmem:[%s1 + $0x40] sm:$0x33]
  %v27 = vld [vmem:[%s1 + $0x48] sm:$0x33]
  %v28 = vld [vmem:[#allocation2] sm:$0x1]
  %30 = vset.pattern.permute.xlu0 0
  %31 = vperm.xlu0 %30, %v28
  %v32 = vpop.permute.xlu0 %31
  %v34 = vperm.slane %v32, 0
  %v45 = vunpack.c.l.b16 %v18
  %v46 = vunpack.c.h.b16 %v18
  %v47 = vunpack.c.l.b16 %v19
  %v48 = vunpack.c.h.b16 %v19
  %v49 = vunpack.c.l.b16 %v20
  %v50 = vunpack.c.h.b16 %v20
  %v51 = vunpack.c.l.b16 %v21
  %v52 = vunpack.c.h.b16 %v21
  %v53 = vunpack.c.l.b16 %v22
  %v54 = vunpack.c.h.b16 %v22
  %v55 = vunpack.c.l.b16 %v23
  %v56 = vunpack.c.h.b16 %v23
  %v57 = vunpack.c.l.b16 %v24
  %v58 = vunpack.c.h.b16 %v24
  %v59 = vunpack.c.l.b16 %v25
  %v60 = vunpack.c.h.b16 %v25
  %v61 = vunpack.c.l.b16 %v26
  %v62 = vunpack.c.h.b16 %v26
  %v63 = vunpack.c.l.b16 %v27
  %v64 = vunpack.c.h.b16 %v27
  %v65 = vpack.c.b16 %v49, %v45
  %v66 = vpack.c.b16 %v50, %v46
  %v67 = vpack.c.b16 %v51, %v47
  %v68 = vpack.c.b16 %v52, %v48
  %v69 = vpack.c.b16 %v57, %v53
  %v70 = vpack.c.b16 %v58, %v54
  %v71 = vpack.c.b16 %v59, %v55
  %v72 = vpack.c.b16 %v60, %v56
  %v73 = vpack.c.b16 %v61, %v61
  %v74 = vpack.c.b16 %v62, %v62
  %v75 = vpack.c.b16 %v63, %v63
  %v76 = vpack.c.b16 %v64, %v64
  %vm85 = vcmask 293888
  %v87 = vsel %vm85, %v17, 0
  %vm89 = vcmask 1041408
  %v91 = vsel %vm89, %v73, 0
  %v94 = vsel %vm89, %v74, 0
  %v97 = vsel %vm89, %v75, 0
  %v100 = vsel %vm89, %v76, 0
  %102 = vmatpush.bf16.msra.mxu0 0
  %103 = vmatpush.bf16.msra.mxu0 0
  %104 = vmatpush.bf16.msra.mxu0 0
  %105 = vmatpush.bf16.msra.mxu0 0
  %106 = vmatpush.bf16.msra.mxu0 0
  %107 = vmatpush.bf16.msra.mxu0 %v91
  %108 = vmatpush.bf16.msra.mxu0 %v69
  %109 = vmatpush.bf16.msra.mxu0 %v65
  %110 = vmatmul.bf16.gmra.mxu0 %v87
  %v111 = vpop.f32.mrf.mxu0
  %v112 = vadd.f32 %v34, %v111
  %v113 = vpop.f32.mrf.mxu0
  %114 = vdwg.mxu0
  %115 = vmatpush.bf16.msra.mxu0 0
  %116 = vmatpush.bf16.msra.mxu0 0
  %117 = vmatpush.bf16.msra.mxu0 0
  %118 = vmatpush.bf16.msra.mxu0 0
  %119 = vmatpush.bf16.msra.mxu0 0
  %120 = vmatpush.bf16.msra.mxu0 %v94
  %121 = vmatpush.bf16.msra.mxu0 %v70
  %122 = vmatpush.bf16.msra.mxu0 %v66
  %123 = vmatmul.bf16.gmra.mxu0 %v87
  %v124 = vpop.f32.mrf.mxu0
  %v125 = vadd.f32 %v34, %v124
  %v126 = vpop.f32.mrf.mxu0
  %127 = vdwg.mxu0
  %128 = vmatpush.bf16.msra.mxu0 0
  %129 = vmatpush.bf16.msra.mxu0 0
  %130 = vmatpush.bf16.msra.mxu0 0
  %131 = vmatpush.bf16.msra.mxu0 0
  %132 = vmatpush.bf16.msra.mxu0 0
  %133 = vmatpush.bf16.msra.mxu0 %v97
  %134 = vmatpush.bf16.msra.mxu0 %v71
  %135 = vmatpush.bf16.msra.mxu0 %v67
  %136 = vmatmul.bf16.gmra.mxu0 %v87
  %v137 = vpop.f32.mrf.mxu0
  %v138 = vadd.f32 %v34, %v137
  %v139 = vpop.f32.mrf.mxu0
  %140 = vdwg.mxu0
  %141 = vmatpush.bf16.msra.mxu0 0
  %142 = vmatpush.bf16.msra.mxu0 0
  %143 = vmatpush.bf16.msra.mxu0 0
  %144 = vmatpush.bf16.msra.mxu0 0
  %145 = vmatpush.bf16.msra.mxu0 0
  %146 = vmatpush.bf16.msra.mxu0 %v100
  %147 = vmatpush.bf16.msra.mxu0 %v72
  %148 = vmatpush.bf16.msra.mxu0 %v68
  %149 = vmatmul.bf16.gmra.mxu0 %v87
  %v150 = vpop.f32.mrf.mxu0
  %v151 = vadd.f32 %v34, %v150
  %v152 = vpop.f32.mrf.mxu0
  %153 = vdwg.mxu0
  %v158 = vrot.slane %v125, 7
  %v159 = vrot.slane %v138, 6
  %v160 = vrot.slane %v151, 5
  %vm161 = vcmask 1040384
  %v162 = vsel %vm161, %v112, %v158
  %vm163 = vcmask 1042434
  %v164 = vsel %vm163, %v159, %v160
  %v165 = vsel %vm89, %v162, %v164
  %v167 = vlaneseq
  %vm168 = vcmp.ge.s32.totalorder %v167, 0
  %vm169 = vcmp.lt.s32.totalorder %v167, 512
  %vm170 = vmand %vm168, %vm169
  %171 = vst.msk [vmem:[%s3] sm:$0xf] %vm170, %v165
  // Predicated region
  $region14: #{generator3_forward.35} parent=0 // pred_check
    _
  $region15: #{generator3_forward.35} parent=0 // pred_check_branch
    %173 = sbr.rel (0) target = $region17
  $region16: #{generator3_forward.35} parent=0 // pred_region
    _
  $region17: #{generator3_forward.35} parent=0 // pred_fallthru
    _
  // Predicated region
  $region18: #{generator3_forward.35} parent=0 // pred_check
    _
  $region19: #{generator3_forward.35} parent=0 // pred_check_branch
    %175 = sbr.rel (0) target = $region21
  $region20: #{generator3_forward.35} parent=0 // pred_region
    _
  $region21: #{generator3_forward.35} parent=0 // pred_fallthru
    _

// kernel: generator3_forward.34
$region0: #{generator3_forward.34}
  #allocation0 [shape = 'u32[]', space=smem, size = 0x4, offset = 0x4, fixed_abs, tag = 'smem constant byte address 0x4 - core index']
  #allocation1 [shape = 'u32[72,128]{1,0:T(1,128)}', space=vmem, size = 0x9000, scoped, tag = 'internal scratch']
  %s0 = inlined_call_operand.vmem [shape: bf16[4,36], index: 0, kind: input, shape index: {}]
  %s1 = inlined_call_operand.vmem [shape: bf16[36,512], index: 1, kind: input, shape index: {}]
  %s2 = inlined_call_operand.vmem [shape: f32[4,1], index: 2, kind: input, shape index: {}]
  %s3 = inlined_call_operand.vmem [shape: bf16[4,512], index: 3, kind: output, shape index: {}]
  %s4 = sld [smem:[#allocation0]]
  $region22: #{generator3_forward.34} parent=0
    _
  %s6 = ssub.s32 1, %s4
  %s7 = scalar_select 0, %s6, %s4
  // Predicated region
  $region2: #{generator3_forward.34} parent=0 // pred_check
    _
  $region3: #{generator3_forward.34} parent=0 // pred_check_branch
    %9 = sbr.rel (0) target = $region5
  $region4: #{generator3_forward.34} parent=0 // pred_region
    _
  $region5: #{generator3_forward.34} parent=0 // pred_fallthru
    _
  // Predicated region
  $region6: #{generator3_forward.34} parent=0 // pred_check
    _
  $region7: #{generator3_forward.34} parent=0 // pred_check_branch
    %11 = sbr.rel (0) target = $region9
  $region8: #{generator3_forward.34} parent=0 // pred_region
    _
  $region9: #{generator3_forward.34} parent=0 // pred_fallthru
    _
  // Predicated region
  $region10: #{generator3_forward.34} parent=0 // pred_check
    _
  $region11: #{generator3_forward.34} parent=0 // pred_check_branch
    %13 = sbr.rel (0) target = $region13
  $region12: #{generator3_forward.34} parent=0 // pred_region
    _
  $region13: #{generator3_forward.34} parent=0 // pred_fallthru
    _
  %v15 = vld [vmem:[%s0] sm:$0x3]
  %v16 = vld [vmem:[%s1] sm:$0xff]
  %v17 = vld [vmem:[%s1 + $0x8] sm:$0xff]
  %v18 = vld [vmem:[%s1 + $0x10] sm:$0xff]
  %v19 = vld [vmem:[%s1 + $0x18] sm:$0xff]
  %v20 = vld [vmem:[%s1 + $0x20] sm:$0xff]
  %v21 = vld [vmem:[%s1 + $0x28] sm:$0xff]
  %v22 = vld [vmem:[%s1 + $0x30] sm:$0xff]
  %v23 = vld [vmem:[%s1 + $0x38] sm:$0xff]
  %v24 = vld [vmem:[%s1 + $0x40] sm:$0x33]
  %v25 = vld [vmem:[%s1 + $0x48] sm:$0x33]
  %v26 = vld [vmem:[%s2] sm:$0xf]
  %28 = vset.pattern.permute.xlu0 0
  %29 = vperm.xlu0 %28, %v26
  %v30 = vpop.permute.xlu0 %29
  %v42 = vunpack.c.l.b16 %v16
  %v43 = vunpack.c.h.b16 %v16
  %v44 = vunpack.c.l.b16 %v17
  %v45 = vunpack.c.h.b16 %v17
  %v46 = vunpack.c.l.b16 %v18
  %v47 = vunpack.c.h.b16 %v18
  %v48 = vunpack.c.l.b16 %v19
  %v49 = vunpack.c.h.b16 %v19
  %v50 = vunpack.c.l.b16 %v20
  %v51 = vunpack.c.h.b16 %v20
  %v52 = vunpack.c.l.b16 %v21
  %v53 = vunpack.c.h.b16 %v21
  %v54 = vunpack.c.l.b16 %v22
  %v55 = vunpack.c.h.b16 %v22
  %v56 = vunpack.c.l.b16 %v23
  %v57 = vunpack.c.h.b16 %v23
  %v58 = vunpack.c.l.b16 %v24
  %v59 = vunpack.c.h.b16 %v24
  %v60 = vunpack.c.l.b16 %v25
  %v61 = vunpack.c.h.b16 %v25
  %v62 = vpack.c.b16 %v46, %v42
  %v63 = vpack.c.b16 %v47, %v43
  %v64 = vpack.c.b16 %v48, %v44
  %v65 = vpack.c.b16 %v49, %v45
  %v66 = vpack.c.b16 %v54, %v50
  %v67 = vpack.c.b16 %v55, %v51
  %v68 = vpack.c.b16 %v56, %v52
  %v69 = vpack.c.b16 %v57, %v53
  %v70 = vpack.c.b16 %v58, %v58
  %v71 = vpack.c.b16 %v59, %v59
  %v72 = vpack.c.b16 %v60, %v60
  %v73 = vpack.c.b16 %v61, %v61
  %vm82 = vcmask 293888
  %v84 = vsel %vm82, %v15, 0
  %vm86 = vcmask 1041408
  %v88 = vsel %vm86, %v70, 0
  %v91 = vsel %vm86, %v71, 0
  %v94 = vsel %vm86, %v72, 0
  %v97 = vsel %vm86, %v73, 0
  %99 = vmatpush.bf16.msra.mxu0 0
  %100 = vmatpush.bf16.msra.mxu0 0
  %101 = vmatpush.bf16.msra.mxu0 0
  %102 = vmatpush.bf16.msra.mxu0 0
  %103 = vmatpush.bf16.msra.mxu0 0
  %104 = vmatpush.bf16.msra.mxu0 %v88
  %105 = vmatpush.bf16.msra.mxu0 %v66
  %106 = vmatpush.bf16.msra.mxu0 %v62
  %107 = vmatmul.bf16.gmra.mxu0 %v84
  %v108 = vpop.f32.mrf.mxu0
  %v109 = vadd.f32 %v30, %v108
  %v110 = vpop.f32.mrf.mxu0
  %111 = vdwg.mxu0
  %112 = vmatpush.bf16.msra.mxu0 0
  %113 = vmatpush.bf16.msra.mxu0 0
  %114 = vmatpush.bf16.msra.mxu0 0
  %115 = vmatpush.bf16.msra.mxu0 0
  %116 = vmatpush.bf16.msra.mxu0 0
  %117 = vmatpush.bf16.msra.mxu0 %v91
  %118 = vmatpush.bf16.msra.mxu0 %v67
  %119 = vmatpush.bf16.msra.mxu0 %v63
  %120 = vmatmul.bf16.gmra.mxu0 %v84
  %v121 = vpop.f32.mrf.mxu0
  %v122 = vadd.f32 %v30, %v121
  %v123 = vpop.f32.mrf.mxu0
  %124 = vdwg.mxu0
  %125 = vmatpush.bf16.msra.mxu0 0
  %126 = vmatpush.bf16.msra.mxu0 0
  %127 = vmatpush.bf16.msra.mxu0 0
  %128 = vmatpush.bf16.msra.mxu0 0
  %129 = vmatpush.bf16.msra.mxu0 0
  %130 = vmatpush.bf16.msra.mxu0 %v94
  %131 = vmatpush.bf16.msra.mxu0 %v68
  %132 = vmatpush.bf16.msra.mxu0 %v64
  %133 = vmatmul.bf16.gmra.mxu0 %v84
  %v134 = vpop.f32.mrf.mxu0
  %v135 = vadd.f32 %v30, %v134
  %v136 = vpop.f32.mrf.mxu0
  %137 = vdwg.mxu0
  %138 = vmatpush.bf16.msra.mxu0 0
  %139 = vmatpush.bf16.msra.mxu0 0
  %140 = vmatpush.bf16.msra.mxu0 0
  %141 = vmatpush.bf16.msra.mxu0 0
  %142 = vmatpush.bf16.msra.mxu0 0
  %143 = vmatpush.bf16.msra.mxu0 %v97
  %144 = vmatpush.bf16.msra.mxu0 %v69
  %145 = vmatpush.bf16.msra.mxu0 %v65
  %146 = vmatmul.bf16.gmra.mxu0 %v84
  %v147 = vpop.f32.mrf.mxu0
  %v148 = vadd.f32 %v30, %v147
  %v149 = vpop.f32.mrf.mxu0
  %150 = vdwg.mxu0
  %v151 = vmax.f32 %v109, 0.0
  %v152 = vmax.f32 %v122, 0.0
  %v153 = vmax.f32 %v135, 0.0
  %v154 = vmax.f32 %v148, 0.0
  %v155 = vpack.c.bf16 %v152, %v151
  %v156 = vpack.c.bf16 %v154, %v153
  %v159 = vrot.slane %v155, 2
  %v160 = vrot.slane %v156, 4
  %v161 = vrot.slane %v156, 6
  %v164 = vsel %vm86, %v155, %v159
  %vm165 = vcmask 1045508
  %v168 = vsel %vm165, %v160, %v161
  %vm169 = vcmask 1043456
  %v170 = vsel %vm169, %v164, %v168
  %172 = vst [vmem:[%s3] sm:$0xff] %v170
  // Predicated region
  $region14: #{generator3_forward.34} parent=0 // pred_check
    _
  $region15: #{generator3_forward.34} parent=0 // pred_check_branch
    %174 = sbr.rel (0) target = $region17
  $region16: #{generator3_forward.34} parent=0 // pred_region
    _
  $region17: #{generator3_forward.34} parent=0 // pred_fallthru
    _
  // Predicated region
  $region18: #{generator3_forward.34} parent=0 // pred_check
    _
  $region19: #{generator3_forward.34} parent=0 // pred_check_branch
    %176 = sbr.rel (0) target = $region21
  $region20: #{generator3_forward.34} parent=0 // pred_region
    _
  $region21: #{generator3_forward.34} parent=0 // pred_fallthru
    _

</llo_original>
